<compile_context>
chip_gen: v5e
topology: v5e:2x2
jax: 0.10.0
libtpu: 0.0.40
codegen_flags: <defaults>
</compile_context>

<pallas_src>
import jax
import jax.numpy as jnp
from jax.experimental import pallas as pl
from jax.experimental.pallas import tpu as pltpu

BN_EPS = 1e-5
LANE = 128        # pad channel (lane) dims to this
ROW_TILE = 1024   # max rows per grid step (multiple of 16)


def _round_up(v, m):
    return (v + m - 1) // m * m


def _choose_row_tile(rows):
    # Large tiles amortize the ~0.35us/step overhead and approach the HBM
    # roofline; cap at rows//2 so the "parallel" axis keeps at least two grid
    # steps for v7x megacore.  Multiple of 16 keeps bf16 blocks on the native
    # (16,128) packed sublane layout.
    rt = min(ROW_TILE, _round_up(max(rows // 2, 16), 16))
    return max(rt, 16)


def _vmem_limit(bytes_needed):
    # Explicit scoped-VMEM request: generous headroom, but never above v7x's
    # 64 MiB physical VMEM (v5e/v6e have 128 MiB, so this is always safe).
    return int(min(max(3 * bytes_needed + (4 << 20), 16 << 20), 64 << 20))


# ----------------------------------------------------------------------------
# Pallas kernel 1: conv matmul (single MXU dot per row tile, bf16 in, f32 acc,
# bf16 out) + BN partial statistics (per-block sum / sum-of-squares).
# ----------------------------------------------------------------------------
def _conv_stats_kernel(p_ref, w_ref, y_ref, stats_ref):
    # p_ref     : (Rt, Kp)  bf16  im2col patches for this row tile
    # w_ref     : (Kp, Cp)  bf16  flattened conv weights (zero-padded)
    # y_ref     : (Rt, Cp)  bf16  conv output tile (pre-BN)
    # stats_ref : (8, Cp)   f32   row 0 = per-block sum, row 1 = sum of squares
    acc = jnp.dot(p_ref[...], w_ref[...], preferred_element_type=jnp.float32)
    y_ref[...] = acc.astype(y_ref.dtype)
    # Direct row stores; rows 2..7 of the stats block are never read by the
    # wrapper (left unwritten on purpose).
    stats_ref[0:1, :] = jnp.sum(acc, axis=0, keepdims=True)
    stats_ref[1:2, :] = jnp.sum(acc * acc, axis=0, keepdims=True)


def _conv_with_stats(patches, w_flat, rt):
    rows_pad, kp = patches.shape
    cp = w_flat.shape[1]
    nt = rows_pad // rt
    # Double-buffered footprint: patches + weights + y (all bf16) + stats (f32)
    vmem = 2 * (rt * kp * 2 + kp * cp * 2 + rt * cp * 2 + 8 * cp * 4)
    y, stats = pl.pallas_call(
        _conv_stats_kernel,
        out_shape=(
            jax.ShapeDtypeStruct((rows_pad, cp), jnp.bfloat16),
            jax.ShapeDtypeStruct((nt * 8, cp), jnp.float32),
        ),
        grid=(nt,),
        in_specs=[
            pl.BlockSpec((rt, kp), lambda i: (i, 0)),
            pl.BlockSpec((kp, cp), lambda i: (0, 0)),
        ],
        out_specs=(
            pl.BlockSpec((rt, cp), lambda i: (i, 0)),
            pl.BlockSpec((8, cp), lambda i: (i, 0)),
        ),
        compiler_params=pltpu.CompilerParams(
            dimension_semantics=("parallel",),
            vmem_limit_bytes=_vmem_limit(vmem)),
    )(patches, w_flat)
    return y, stats


# ----------------------------------------------------------------------------
# Pallas kernel 2: fused affine BatchNorm (precomputed scale/shift) + ReLU,
# tiled over rows with lane-dense (Rt, 128) blocks; reads bf16 y, upcasts in
# the multiply.
# ----------------------------------------------------------------------------
def _bn_relu_kernel(y_ref, scale_ref, shift_ref, o_ref):
    y = y_ref[...] * scale_ref[...] + shift_ref[...]   # bf16 * f32 -> f32
    o_ref[...] = jnp.maximum(y, 0.0).astype(o_ref.dtype)


def _bn_relu(y, scale_p, shift_p, rt, out_dtype):
    rows_pad, cp = y.shape
    nt = rows_pad // rt
    out_bytes = jnp.dtype(out_dtype).itemsize
    vmem = 2 * (rt * cp * 2 + 2 * cp * 4 + rt * cp * out_bytes)
    return pl.pallas_call(
        _bn_relu_kernel,
        out_shape=jax.ShapeDtypeStruct((rows_pad, cp), out_dtype),
        grid=(nt,),
        in_specs=[
            pl.BlockSpec((rt, cp), lambda i: (i, 0)),
            pl.BlockSpec((1, cp), lambda i: (0, 0)),
            pl.BlockSpec((1, cp), lambda i: (0, 0)),
        ],
        out_specs=pl.BlockSpec((rt, cp), lambda i: (i, 0)),
        compiler_params=pltpu.CompilerParams(
            dimension_semantics=("parallel",),
            vmem_limit_bytes=_vmem_limit(vmem)),
    )(y, scale_p, shift_p)


# ----------------------------------------------------------------------------
# Wrapper glue (plain JAX): im2col (bf16), weight flattening, BN finalize.
# ----------------------------------------------------------------------------
def _im2col_3x3x3(x_ndhwc):
    n, d, h, w, c = x_ndhwc.shape
    xp = jnp.pad(x_ndhwc, ((0, 0), (1, 1), (1, 1), (1, 1), (0, 0)))
    taps = [xp[:, kd:kd + d, kh:kh + h, kw:kw + w, :]
            for kd in range(3) for kh in range(3) for kw in range(3)]
    patches = jnp.stack(taps, axis=-2)            # (N, D, H, W, 27, C)
    return patches.reshape(n * d * h * w, 27 * c)


def _conv_bn_relu_layer(a_ndhwc, w_dhwio, gamma, beta, out_dtype):
    n, d, h, w, cin = a_ndhwc.shape
    cout = w_dhwio.shape[-1]
    rows = n * d * h * w
    k = 27 * cin
    kp = _round_up(k, LANE)
    cp = _round_up(cout, LANE)
    rt = _choose_row_tile(rows)
    rows_pad = _round_up(rows, rt)

    # Cast to bf16 BEFORE im2col so the 27x-inflated patches tensor is stacked,
    # reshaped and padded at half width.  Zero-padded rows / K / channels
    # contribute nothing to the matmul or the statistics.
    # TODO(synk): for large volumes, move patch assembly into the conv kernel
    # (halo'd DMA + shifted slices) to avoid the 27x HBM inflation entirely.
    a_bf16 = a_ndhwc.astype(jnp.bfloat16)
    patches = _im2col_3x3x3(a_bf16)
    patches = jnp.pad(patches, ((0, rows_pad - rows), (0, kp - k)))

    w_flat = w_dhwio.reshape(k, cout)
    w_flat = jnp.pad(w_flat, ((0, kp - k), (0, cp - cout))).astype(jnp.bfloat16)

    y, stats = _conv_with_stats(patches, w_flat, rt)

    # Finalize training-mode BatchNorm stats from the in-kernel partials
    # (tiny per-channel math; biased variance, as torch uses for normalization;
    # E[x^2]-E[x]^2 in f32 is fine at these row counts).
    # TODO(synk): running_mean/running_var (momentum) buffer updates are not
    # modeled; they do not affect the training-mode forward() output.
    nt = rows_pad // rt
    stats = stats.reshape(nt, 8, cp)
    ch_sum = jnp.sum(stats[:, 0, :], axis=0)[:cout]
    ch_sumsq = jnp.sum(stats[:, 1, :], axis=0)[:cout]
    mean = ch_sum / rows
    var = jnp.maximum(ch_sumsq / rows - mean * mean, 0.0)
    scale = gamma * jax.lax.rsqrt(var + BN_EPS)
    shift = beta - mean * scale
    scale_p = jnp.pad(scale, (0, cp - cout)).reshape(1, cp).astype(jnp.float32)
    shift_p = jnp.pad(shift, (0, cp - cout)).reshape(1, cp).astype(jnp.float32)

    act = _bn_relu(y, scale_p, shift_p, rt, out_dtype)
    return act[:rows, :cout].reshape(n, d, h, w, cout)


def double_conv_up(x_ncdhw, params):
    w1, g1, b1, w2, g2, b2 = params
    x = jnp.transpose(x_ncdhw, (0, 2, 3, 4, 1))          # NCDHW -> NDHWC
    a1 = _conv_bn_relu_layer(x, w1, g1, b1, jnp.bfloat16)
    a2 = _conv_bn_relu_layer(a1, w2, g2, b2, jnp.float32)
    return jnp.transpose(a2, (0, 4, 1, 2, 3))            # NDHWC -> NCDHW


# ----------------------------------------------------------------------------
# Pure-JAX reference (f32, HIGHEST precision) and parameter init
# ----------------------------------------------------------------------------
def ref_forward(x_ncdhw, params):
    w1, g1, b1, w2, g2, b2 = params
    x = jnp.transpose(x_ncdhw, (0, 2, 3, 4, 1))

    def conv(a, w):
        return jax.lax.conv_general_dilated(
            a, w, window_strides=(1, 1, 1), padding="SAME",
            dimension_numbers=("NDHWC", "DHWIO", "NDHWC"),
            precision=jax.lax.Precision.HIGHEST)

    def bn_relu(a, g, b):
        m = jnp.mean(a, axis=(0, 1, 2, 3))
        v = jnp.var(a, axis=(0, 1, 2, 3))
        return jnp.maximum((a - m) / jnp.sqrt(v + BN_EPS) * g + b, 0.0)

    y = bn_relu(conv(x, w1), g1, b1)
    y = bn_relu(conv(y, w2), g2, b2)
    return jnp.transpose(y, (0, 4, 1, 2, 3))


def init_params(key, in_channels, out_channels):
    k1, k2 = jax.random.split(key)
    # torch Conv3d weight layout: (Cout, Cin, 3, 3, 3) -> DHWIO
    std1 = (2.0 / (in_channels * 27)) ** 0.5
    std2 = (2.0 / (out_channels * 27)) ** 0.5
    w1_t = jax.random.normal(k1, (out_channels, in_channels, 3, 3, 3),
                             jnp.float32) * std1
    w2_t = jax.random.normal(k2, (out_channels, out_channels, 3, 3, 3),
                             jnp.float32) * std2
    w1 = jnp.transpose(w1_t, (2, 3, 4, 1, 0))   # (3,3,3,Cin,Cout)
    w2 = jnp.transpose(w2_t, (2, 3, 4, 1, 0))
    g1 = jnp.ones((out_channels,), jnp.float32)   # BatchNorm default init
    b1 = jnp.zeros((out_channels,), jnp.float32)
    g2 = jnp.ones((out_channels,), jnp.float32)
    b2 = jnp.zeros((out_channels,), jnp.float32)
    return (w1, g1, b1, w2, g2, b2)


if __name__ == "__main__":
    N, Cin, Cout, D, H, W = 2, 4, 8, 8, 8, 8

    key = jax.random.PRNGKey(0)
    kx, kp = jax.random.split(key)
    x = jax.random.normal(kx, (N, Cin, D, H, W), jnp.float32)  # NCDHW
    params = init_params(kp, Cin, Cout)

    fwd = jax.jit(double_conv_up)
    out = jax.block_until_ready(fwd(x, params))

    ref = jax.block_until_ready(jax.jit(ref_forward)(x, params))
    assert out.shape == (N, Cout, D, H, W), out.shape
    # bf16 MXU inputs + bf16 conv intermediate (f32 accumulation/statistics)
    # vs an f32 HIGHEST-precision reference: tolerance relaxed accordingly for
    # the two-layer normalized output.
    max_err = float(jnp.max(jnp.abs(out - ref)))
    assert jnp.allclose(out, ref, rtol=5e-2, atol=5e-2), max_err

    print("KERNEL_OK")
</pallas_src>

<mosaic_0001>
module attributes {stable_mosaic.version = 11 : i64} {
  func.func @_conv_stats_kernel(%arg0: i32, %arg1: memref<512x128xbf16, #tpu.memory_space<vmem>>, %arg2: memref<128x128xbf16, #tpu.memory_space<vmem>>, %arg3: memref<512x128xbf16, #tpu.memory_space<vmem>>, %arg4: memref<8x128xf32, #tpu.memory_space<vmem>>) attributes {dimension_semantics = [#tpu.dimension_semantics<parallel>], iteration_bounds = array<i64: 2>, scalar_prefetch = 0 : i64, scratch_operands = 0 : i64, tpu.core_type = #tpu.core_type<tc>, window_params = [{transform_indices = @transform_0, window_bounds = array<i64: 512, 128>}, {pipeline_mode = #tpu.pipeline_mode<synchronous>, transform_indices = @transform_1, window_bounds = array<i64: 128, 128>}, {transform_indices = @transform_2, window_bounds = array<i64: 512, 128>}, {transform_indices = @transform_3, window_bounds = array<i64: 8, 128>}]} {
    %c0 = arith.constant 0 : index
    %c0_0 = arith.constant 0 : index
    %0 = vector.load %arg1[%c0, %c0_0] : memref<512x128xbf16, #tpu.memory_space<vmem>>, vector<512x128xbf16>
    %c0_1 = arith.constant 0 : index
    %c0_2 = arith.constant 0 : index
    %1 = vector.load %arg2[%c0_1, %c0_2] : memref<128x128xbf16, #tpu.memory_space<vmem>>, vector<128x128xbf16>
    %cst = arith.constant dense<0.000000e+00> : vector<512x128xf32>
    %2 = tpu.matmul %0, %1, %cst {dimension_numbers = #tpu.dot_dimension_numbers<[1], [0], [0], [1], [0, 0, 1, 1], [], []>} : vector<512x128xbf16>, vector<128x128xbf16>, vector<512x128xf32> -> vector<512x128xf32>
    %3 = arith.truncf %2 : vector<512x128xf32> to vector<512x128xbf16>
    %c0_3 = arith.constant 0 : index
    %c0_4 = arith.constant 0 : index
    %4 = vector.load %arg3[%c0_3, %c0_4] : memref<512x128xbf16, #tpu.memory_space<vmem>>, vector<512x128xbf16>
    tpu.vector_store %arg3[%c0_3, %c0_4], %3 {strides = array<i32>} : memref<512x128xbf16, #tpu.memory_space<vmem>>, vector<512x128xbf16>,
    %cst_5 = arith.constant dense<0.000000e+00> : vector<128xf32>
    %5 = vector.multi_reduction <add>, %2, %cst_5 [0] : vector<512x128xf32> to vector<128xf32>
    %6 = vector.shape_cast %5 : vector<128xf32> to vector<1x128xf32>
    %c0_6 = arith.constant 0 : index
    %c0_7 = arith.constant 0 : index
    %7 = vector.load %arg4[%c0_6, %c0_7] : memref<8x128xf32, #tpu.memory_space<vmem>>, vector<1x128xf32>
    tpu.vector_store %arg4[%c0_6, %c0_7], %6 {strides = array<i32>} : memref<8x128xf32, #tpu.memory_space<vmem>>, vector<1x128xf32>,
    %8 = arith.mulf %2, %2 : vector<512x128xf32>
    %cst_8 = arith.constant dense<0.000000e+00> : vector<128xf32>
    %9 = vector.multi_reduction <add>, %8, %cst_8 [0] : vector<512x128xf32> to vector<128xf32>
    %10 = vector.shape_cast %9 : vector<128xf32> to vector<1x128xf32>
    %c1 = arith.constant 1 : index
    %c0_9 = arith.constant 0 : index
    %11 = vector.load %arg4[%c1, %c0_9] : memref<8x128xf32, #tpu.memory_space<vmem>>, vector<1x128xf32>
    tpu.vector_store %arg4[%c1, %c0_9], %10 {strides = array<i32>} : memref<8x128xf32, #tpu.memory_space<vmem>>, vector<1x128xf32>,
    return
  }
  func.func @transform_0(%arg0: i32) -> (i32, i32) {
    %c0_i32 = arith.constant 0 : i32
    %c0_i32_0 = arith.constant 0 : i32
    return %arg0, %c0_i32 : i32, i32
  }
  func.func @transform_1(%arg0: i32) -> (i32, i32) {
    %c0_i32 = arith.constant 0 : i32
    %c0_i32_0 = arith.constant 0 : i32
    %c0_i32_1 = arith.constant 0 : i32
    return %c0_i32, %c0_i32_0 : i32, i32
  }
  func.func @transform_2(%arg0: i32) -> (i32, i32) {
    %c0_i32 = arith.constant 0 : i32
    %c0_i32_0 = arith.constant 0 : i32
    return %arg0, %c0_i32 : i32, i32
  }
  func.func @transform_3(%arg0: i32) -> (i32, i32) {
    %c0_i32 = arith.constant 0 : i32
    %c0_i32_0 = arith.constant 0 : i32
    return %arg0, %c0_i32 : i32, i32
  }
}

module attributes {stable_mosaic.version = 11 : i64} {
  func.func @_bn_relu_kernel(%arg0: i32, %arg1: memref<512x128xbf16, #tpu.memory_space<vmem>>, %arg2: memref<1x128xf32, #tpu.memory_space<vmem>>, %arg3: memref<1x128xf32, #tpu.memory_space<vmem>>, %arg4: memref<512x128xbf16, #tpu.memory_space<vmem>>) attributes {dimension_semantics = [#tpu.dimension_semantics<parallel>], iteration_bounds = array<i64: 2>, scalar_prefetch = 0 : i64, scratch_operands = 0 : i64, tpu.core_type = #tpu.core_type<tc>, window_params = [{transform_indices = @transform_0, window_bounds = array<i64: 512, 128>}, {pipeline_mode = #tpu.pipeline_mode<synchronous>, transform_indices = @transform_1, window_bounds = array<i64: 1, 128>}, {pipeline_mode = #tpu.pipeline_mode<synchronous>, transform_indices = @transform_2, window_bounds = array<i64: 1, 128>}, {transform_indices = @transform_3, window_bounds = array<i64: 512, 128>}]} {
    %c0 = arith.constant 0 : index
    %c0_0 = arith.constant 0 : index
    %0 = vector.load %arg1[%c0, %c0_0] : memref<512x128xbf16, #tpu.memory_space<vmem>>, vector<512x128xbf16>
    %c0_1 = arith.constant 0 : index
    %c0_2 = arith.constant 0 : index
    %1 = vector.load %arg2[%c0_1, %c0_2] : memref<1x128xf32, #tpu.memory_space<vmem>>, vector<1x128xf32>
    %2 = arith.extf %0 : vector<512x128xbf16> to vector<512x128xf32>
    %3 = vector.broadcast %1 : vector<1x128xf32> to vector<512x128xf32>
    %4 = arith.mulf %2, %3 : vector<512x128xf32>
    %c0_3 = arith.constant 0 : index
    %c0_4 = arith.constant 0 : index
    %5 = vector.load %arg3[%c0_3, %c0_4] : memref<1x128xf32, #tpu.memory_space<vmem>>, vector<1x128xf32>
    %6 = vector.broadcast %5 : vector<1x128xf32> to vector<512x128xf32>
    %7 = arith.addf %4, %6 : vector<512x128xf32>
    %cst = arith.constant 0.000000e+00 : f32
    %8 = vector.broadcast %cst : f32 to vector<512x128xf32>
    %9 = arith.maximumf %7, %8 : vector<512x128xf32>
    %10 = arith.truncf %9 : vector<512x128xf32> to vector<512x128xbf16>
    %c0_5 = arith.constant 0 : index
    %c0_6 = arith.constant 0 : index
    %11 = vector.load %arg4[%c0_5, %c0_6] : memref<512x128xbf16, #tpu.memory_space<vmem>>, vector<512x128xbf16>
    tpu.vector_store %arg4[%c0_5, %c0_6], %10 {strides = array<i32>} : memref<512x128xbf16, #tpu.memory_space<vmem>>, vector<512x128xbf16>,
    return
  }
  func.func @transform_0(%arg0: i32) -> (i32, i32) {
    %c0_i32 = arith.constant 0 : i32
    %c0_i32_0 = arith.constant 0 : i32
    return %arg0, %c0_i32 : i32, i32
  }
  func.func @transform_1(%arg0: i32) -> (i32, i32) {
    %c0_i32 = arith.constant 0 : i32
    %c0_i32_0 = arith.constant 0 : i32
    %c0_i32_1 = arith.constant 0 : i32
    return %c0_i32, %c0_i32_0 : i32, i32
  }
  func.func @transform_2(%arg0: i32) -> (i32, i32) {
    %c0_i32 = arith.constant 0 : i32
    %c0_i32_0 = arith.constant 0 : i32
    %c0_i32_1 = arith.constant 0 : i32
    return %c0_i32, %c0_i32_0 : i32, i32
  }
  func.func @transform_3(%arg0: i32) -> (i32, i32) {
    %c0_i32 = arith.constant 0 : i32
    %c0_i32_0 = arith.constant 0 : i32
    return %arg0, %c0_i32 : i32, i32
  }
}

module attributes {stable_mosaic.version = 11 : i64} {
  func.func @_conv_stats_kernel(%arg0: i32, %arg1: memref<512x256xbf16, #tpu.memory_space<vmem>>, %arg2: memref<256x128xbf16, #tpu.memory_space<vmem>>, %arg3: memref<512x128xbf16, #tpu.memory_space<vmem>>, %arg4: memref<8x128xf32, #tpu.memory_space<vmem>>) attributes {dimension_semantics = [#tpu.dimension_semantics<parallel>], iteration_bounds = array<i64: 2>, scalar_prefetch = 0 : i64, scratch_operands = 0 : i64, tpu.core_type = #tpu.core_type<tc>, window_params = [{transform_indices = @transform_0, window_bounds = array<i64: 512, 256>}, {pipeline_mode = #tpu.pipeline_mode<synchronous>, transform_indices = @transform_1, window_bounds = array<i64: 256, 128>}, {transform_indices = @transform_2, window_bounds = array<i64: 512, 128>}, {transform_indices = @transform_3, window_bounds = array<i64: 8, 128>}]} {
    %c0 = arith.constant 0 : index
    %c0_0 = arith.constant 0 : index
    %0 = vector.load %arg1[%c0, %c0_0] : memref<512x256xbf16, #tpu.memory_space<vmem>>, vector<512x256xbf16>
    %c0_1 = arith.constant 0 : index
    %c0_2 = arith.constant 0 : index
    %1 = vector.load %arg2[%c0_1, %c0_2] : memref<256x128xbf16, #tpu.memory_space<vmem>>, vector<256x128xbf16>
    %cst = arith.constant dense<0.000000e+00> : vector<512x128xf32>
    %2 = tpu.matmul %0, %1, %cst {dimension_numbers = #tpu.dot_dimension_numbers<[1], [0], [0], [1], [0, 0, 1, 1], [], []>} : vector<512x256xbf16>, vector<256x128xbf16>, vector<512x128xf32> -> vector<512x128xf32>
    %3 = arith.truncf %2 : vector<512x128xf32> to vector<512x128xbf16>
    %c0_3 = arith.constant 0 : index
    %c0_4 = arith.constant 0 : index
    %4 = vector.load %arg3[%c0_3, %c0_4] : memref<512x128xbf16, #tpu.memory_space<vmem>>, vector<512x128xbf16>
    tpu.vector_store %arg3[%c0_3, %c0_4], %3 {strides = array<i32>} : memref<512x128xbf16, #tpu.memory_space<vmem>>, vector<512x128xbf16>,
    %cst_5 = arith.constant dense<0.000000e+00> : vector<128xf32>
    %5 = vector.multi_reduction <add>, %2, %cst_5 [0] : vector<512x128xf32> to vector<128xf32>
    %6 = vector.shape_cast %5 : vector<128xf32> to vector<1x128xf32>
    %c0_6 = arith.constant 0 : index
    %c0_7 = arith.constant 0 : index
    %7 = vector.load %arg4[%c0_6, %c0_7] : memref<8x128xf32, #tpu.memory_space<vmem>>, vector<1x128xf32>
    tpu.vector_store %arg4[%c0_6, %c0_7], %6 {strides = array<i32>} : memref<8x128xf32, #tpu.memory_space<vmem>>, vector<1x128xf32>,
    %8 = arith.mulf %2, %2 : vector<512x128xf32>
    %cst_8 = arith.constant dense<0.000000e+00> : vector<128xf32>
    %9 = vector.multi_reduction <add>, %8, %cst_8 [0] : vector<512x128xf32> to vector<128xf32>
    %10 = vector.shape_cast %9 : vector<128xf32> to vector<1x128xf32>
    %c1 = arith.constant 1 : index
    %c0_9 = arith.constant 0 : index
    %11 = vector.load %arg4[%c1, %c0_9] : memref<8x128xf32, #tpu.memory_space<vmem>>, vector<1x128xf32>
    tpu.vector_store %arg4[%c1, %c0_9], %10 {strides = array<i32>} : memref<8x128xf32, #tpu.memory_space<vmem>>, vector<1x128xf32>,
    return
  }
  func.func @transform_0(%arg0: i32) -> (i32, i32) {
    %c0_i32 = arith.constant 0 : i32
    %c0_i32_0 = arith.constant 0 : i32
    return %arg0, %c0_i32 : i32, i32
  }
  func.func @transform_1(%arg0: i32) -> (i32, i32) {
    %c0_i32 = arith.constant 0 : i32
    %c0_i32_0 = arith.constant 0 : i32
    %c0_i32_1 = arith.constant 0 : i32
    return %c0_i32, %c0_i32_0 : i32, i32
  }
  func.func @transform_2(%arg0: i32) -> (i32, i32) {
    %c0_i32 = arith.constant 0 : i32
    %c0_i32_0 = arith.constant 0 : i32
    return %arg0, %c0_i32 : i32, i32
  }
  func.func @transform_3(%arg0: i32) -> (i32, i32) {
    %c0_i32 = arith.constant 0 : i32
    %c0_i32_0 = arith.constant 0 : i32
    return %arg0, %c0_i32 : i32, i32
  }
}

module attributes {stable_mosaic.version = 11 : i64} {
  func.func @_bn_relu_kernel(%arg0: i32, %arg1: memref<512x128xbf16, #tpu.memory_space<vmem>>, %arg2: memref<1x128xf32, #tpu.memory_space<vmem>>, %arg3: memref<1x128xf32, #tpu.memory_space<vmem>>, %arg4: memref<512x128xf32, #tpu.memory_space<vmem>>) attributes {dimension_semantics = [#tpu.dimension_semantics<parallel>], iteration_bounds = array<i64: 2>, scalar_prefetch = 0 : i64, scratch_operands = 0 : i64, tpu.core_type = #tpu.core_type<tc>, window_params = [{transform_indices = @transform_0, window_bounds = array<i64: 512, 128>}, {pipeline_mode = #tpu.pipeline_mode<synchronous>, transform_indices = @transform_1, window_bounds = array<i64: 1, 128>}, {pipeline_mode = #tpu.pipeline_mode<synchronous>, transform_indices = @transform_2, window_bounds = array<i64: 1, 128>}, {transform_indices = @transform_3, window_bounds = array<i64: 512, 128>}]} {
    %c0 = arith.constant 0 : index
    %c0_0 = arith.constant 0 : index
    %0 = vector.load %arg1[%c0, %c0_0] : memref<512x128xbf16, #tpu.memory_space<vmem>>, vector<512x128xbf16>
    %c0_1 = arith.constant 0 : index
    %c0_2 = arith.constant 0 : index
    %1 = vector.load %arg2[%c0_1, %c0_2] : memref<1x128xf32, #tpu.memory_space<vmem>>, vector<1x128xf32>
    %2 = arith.extf %0 : vector<512x128xbf16> to vector<512x128xf32>
    %3 = vector.broadcast %1 : vector<1x128xf32> to vector<512x128xf32>
    %4 = arith.mulf %2, %3 : vector<512x128xf32>
    %c0_3 = arith.constant 0 : index
    %c0_4 = arith.constant 0 : index
    %5 = vector.load %arg3[%c0_3, %c0_4] : memref<1x128xf32, #tpu.memory_space<vmem>>, vector<1x128xf32>
    %6 = vector.broadcast %5 : vector<1x128xf32> to vector<512x128xf32>
    %7 = arith.addf %4, %6 : vector<512x128xf32>
    %cst = arith.constant 0.000000e+00 : f32
    %8 = vector.broadcast %cst : f32 to vector<512x128xf32>
    %9 = arith.maximumf %7, %8 : vector<512x128xf32>
    %c0_5 = arith.constant 0 : index
    %c0_6 = arith.constant 0 : index
    %10 = vector.load %arg4[%c0_5, %c0_6] : memref<512x128xf32, #tpu.memory_space<vmem>>, vector<512x128xf32>
    tpu.vector_store %arg4[%c0_5, %c0_6], %9 {strides = array<i32>} : memref<512x128xf32, #tpu.memory_space<vmem>>, vector<512x128xf32>,
    return
  }
  func.func @transform_0(%arg0: i32) -> (i32, i32) {
    %c0_i32 = arith.constant 0 : i32
    %c0_i32_0 = arith.constant 0 : i32
    return %arg0, %c0_i32 : i32, i32
  }
  func.func @transform_1(%arg0: i32) -> (i32, i32) {
    %c0_i32 = arith.constant 0 : i32
    %c0_i32_0 = arith.constant 0 : i32
    %c0_i32_1 = arith.constant 0 : i32
    return %c0_i32, %c0_i32_0 : i32, i32
  }
  func.func @transform_2(%arg0: i32) -> (i32, i32) {
    %c0_i32 = arith.constant 0 : i32
    %c0_i32_0 = arith.constant 0 : i32
    %c0_i32_1 = arith.constant 0 : i32
    return %c0_i32, %c0_i32_0 : i32, i32
  }
  func.func @transform_3(%arg0: i32) -> (i32, i32) {
    %c0_i32 = arith.constant 0 : i32
    %c0_i32_0 = arith.constant 0 : i32
    return %arg0, %c0_i32 : i32, i32
  }
}

</mosaic_0001>

<llo_original>
// kernel: double_conv_up.4
$region0: #{double_conv_up.4}
  #allocation0 [shape = 'u32[]', space=smem, size = 0x4, offset = 0x4, fixed_abs, tag = 'smem constant byte address 0x4 - core index']
  #allocation1 [shape = 'u32[72,128]{1,0:T(1,128)}', space=vmem, size = 0x9000, scoped, tag = 'internal scratch']
  %s0 = inlined_call_operand.vmem [shape: bf16[1024,128], index: 0, kind: input, shape index: {}]
  %s1 = inlined_call_operand.vmem [shape: bf16[128,128], index: 1, kind: input, shape index: {}]
  %s2 = inlined_call_operand.vmem [shape: bf16[1024,128], index: 2, kind: output, shape index: {0}]
  %s3 = inlined_call_operand.vmem [shape: f32[16,128], index: 3, kind: output, shape index: {1}]
  %4 = xla_tuple %s2, %s3
  %s5 = sld [smem:[#allocation0]]
  $region49: #{double_conv_up.4} parent=0
    _
  %s7 = ssub.s32 1, %s5
  %s8 = scalar_select 0, %s7, %s5
  loop: start=0, step=1, limit=4
  $region2: #{double_conv_up.4} parent=0 // loop_pre_header
    _
  $region3: #{double_conv_up.4} parent=0 // loop_header
    %s10 = sphi 0, %s14
    %p11 = scmp.ge.s32.totalorder %s10, 4
    %s20 = sphi 0, %s22
    %s23 = sphi 0, %s20
    %s24 = sphi 0, %s23
    %s40 = sphi 0, %s24
    %s44 = sphi 0, %s44
    %s46 = sphi 0, %s44
    %s47 = sphi 0, %s46
    %s61 = sphi 0, %s47
    %s67 = sphi 0, %s69
    %s70 = sphi 0, %s67
    %s71 = sphi 0, %s70
    %s87 = sphi 0, %s71
    %s93 = sphi 0, %s95
    %s96 = sphi 0, %s93
    %s97 = sphi 0, %s96
    %s113 = sphi 0, %s97
  $region4: #{double_conv_up.4} parent=0 // loop_header_branch
    %13 = sbr.rel (%p11) target = $region8
  $region5: #{double_conv_up.4} parent=0 // loop_body
    %s15 = ssub.s32 %s10, 1
    %s16 = ssub.s32 %s10, 2
    %s17 = sadd.s32 %s10, 1
    %s18 = ssub.s32 %s10, %s17
    %p19 = scmp.eq.s32.totalorder %s18, 0
    %s21 = sadd.s32 %s20, 1
    %s22 = scalar_select %p19, %s20, %s21
    %p25 = pneg %p19
    %p26 = scmp.eq.s32.totalorder %s10, 1
    %p27 = por %p25, %p26
    %p28 = scmp.ne.s32.totalorder %s20, %s23
    %p29 = scmp.eq.s32.totalorder %s10, 0
    %p30 = por %p28, %p29
    %p31 = scmp.ne.s32.totalorder %s20, %s23
    %p32 = scmp.eq.s32.totalorder %s15, 1
    %p33 = por %p31, %p32
    %p34 = scmp.ne.s32.totalorder %s23, %s24
    %p35 = scmp.eq.s32.totalorder %s15, 0
    %p36 = por %p34, %p35
    %p37 = scmp.ne.s32.totalorder %s23, %s24
    %p38 = scmp.eq.s32.totalorder %s16, 1
    %p39 = por %p37, %p38
    %p41 = scmp.ne.s32.totalorder %s24, %s40
    %p42 = scmp.eq.s32.totalorder %s16, 0
    %p43 = por %p41, %p42
    %s45 = sadd.s32 %s44, 1
    %p48 = scmp.eq.s32.totalorder %s10, 1
    %p49 = scmp.ne.s32.totalorder %s44, %s46
    %p50 = scmp.eq.s32.totalorder %s10, 0
    %p51 = por %p49, %p50
    %p52 = scmp.ne.s32.totalorder %s44, %s46
    %p53 = scmp.eq.s32.totalorder %s15, 1
    %p54 = por %p52, %p53
    %p55 = scmp.ne.s32.totalorder %s46, %s47
    %p56 = scmp.eq.s32.totalorder %s15, 0
    %p57 = por %p55, %p56
    %p58 = scmp.ne.s32.totalorder %s46, %s47
    %p59 = scmp.eq.s32.totalorder %s16, 1
    %p60 = por %p58, %p59
    %p62 = scmp.ne.s32.totalorder %s47, %s61
    %p63 = scmp.eq.s32.totalorder %s16, 0
    %p64 = por %p62, %p63
    %s65 = ssub.s32 %s10, %s17
    %p66 = scmp.eq.s32.totalorder %s65, 0
    %s68 = sadd.s32 %s67, 1
    %s69 = scalar_select %p66, %s67, %s68
    %p72 = pneg %p66
    %p73 = scmp.eq.s32.totalorder %s10, 1
    %p74 = por %p72, %p73
    %p75 = scmp.ne.s32.totalorder %s67, %s70
    %p76 = scmp.eq.s32.totalorder %s10, 0
    %p77 = por %p75, %p76
    %p78 = scmp.ne.s32.totalorder %s67, %s70
    %p79 = scmp.eq.s32.totalorder %s15, 1
    %p80 = por %p78, %p79
    %p81 = scmp.ne.s32.totalorder %s70, %s71
    %p82 = scmp.eq.s32.totalorder %s15, 0
    %p83 = por %p81, %p82
    %p84 = scmp.ne.s32.totalorder %s70, %s71
    %p85 = scmp.eq.s32.totalorder %s16, 1
    %p86 = por %p84, %p85
    %p88 = scmp.ne.s32.totalorder %s71, %s87
    %p89 = scmp.eq.s32.totalorder %s16, 0
    %p90 = por %p88, %p89
    %s91 = ssub.s32 %s10, %s17
    %p92 = scmp.eq.s32.totalorder %s91, 0
    %s94 = sadd.s32 %s93, 1
    %s95 = scalar_select %p92, %s93, %s94
    %p98 = pneg %p92
    %p99 = scmp.eq.s32.totalorder %s10, 1
    %p100 = por %p98, %p99
    %p101 = scmp.ne.s32.totalorder %s93, %s96
    %p102 = scmp.eq.s32.totalorder %s10, 0
    %p103 = por %p101, %p102
    %p104 = scmp.ne.s32.totalorder %s93, %s96
    %p105 = scmp.eq.s32.totalorder %s15, 1
    %p106 = por %p104, %p105
    %p107 = scmp.ne.s32.totalorder %s96, %s97
    %p108 = scmp.eq.s32.totalorder %s15, 0
    %p109 = por %p107, %p108
    %p110 = scmp.ne.s32.totalorder %s96, %s97
    %p111 = scmp.eq.s32.totalorder %s16, 1
    %p112 = por %p110, %p111
    %p114 = scmp.ne.s32.totalorder %s97, %s113
    %p115 = scmp.eq.s32.totalorder %s16, 0
    %p116 = por %p114, %p115
    %p117 = scmp.le.s32.totalorder 1, %s10
    %p118 = scmp.lt.s32.totalorder %s10, 3
    %p119 = pnand %p117, %p118
    %p120 = pneg %p119
    // Predicated region
    $region9: #{double_conv_up.4} parent=5 // pred_check
      _
    $region10: #{double_conv_up.4} parent=5 // pred_check_branch
      %122 = sbr.rel (%p119) target = $region12
    $region11: #{double_conv_up.4} parent=5 // pred_region
      %s123 = ssub.s32 %s10, 1
      // Predicated region
      $region13: #{double_conv_up.4} parent=11 // pred_check
        %p124 = pneg %p57
      $region14: #{double_conv_up.4} parent=11 // pred_check_branch
        %126 = sbr.rel (%p124) target = $region16
      $region15: #{double_conv_up.4} parent=11 // pred_region
        _
      $region16: #{double_conv_up.4} parent=11 // pred_fallthru
        _
    $region12: #{double_conv_up.4} parent=5 // pred_fallthru
      _
    %p127 = scmp.lt.s32.totalorder %s10, 2
    // Predicated region
    $region17: #{double_conv_up.4} parent=5 // pred_check
      %p128 = pneg %p127
    $region18: #{double_conv_up.4} parent=5 // pred_check_branch
      %130 = sbr.rel (%p128) target = $region20
    $region19: #{double_conv_up.4} parent=5 // pred_region
      // Predicated region
      $region21: #{double_conv_up.4} parent=19 // pred_check
        %p131 = pneg %p30
      $region22: #{double_conv_up.4} parent=19 // pred_check_branch
        %133 = sbr.rel (%p131) target = $region24
      $region23: #{double_conv_up.4} parent=19 // pred_region
        %s134 = smul.u32 64, %s10
        %p135 = scmp.lt.s32.totalorder %s134, 127
        %s136 = scalar_select %p135, %s134, 127
        %s137 = smul.addr %s136, 4
        %s138 = scalar_lea.vmem %s0, %s137
        %s139 = smul.u32 64, %s10
      $region24: #{double_conv_up.4} parent=19 // pred_fallthru
        _
    $region20: #{double_conv_up.4} parent=5 // pred_fallthru
      _
    %p140 = scmp.le.s32.totalorder 1, %s10
    %p141 = scmp.lt.s32.totalorder %s10, 3
    %p142 = pnand %p140, %p141
    %p143 = pneg %p142
    // Predicated region
    $region25: #{double_conv_up.4} parent=5 // pred_check
      _
    $region26: #{double_conv_up.4} parent=5 // pred_check_branch
      %145 = sbr.rel (%p142) target = $region28
    $region27: #{double_conv_up.4} parent=5 // pred_region
      %s146 = ssub.s32 %s10, 1
      %s147 = smul.u32 64, %s15
      %p148 = scmp.lt.s32.totalorder %s147, 127
      %s149 = scalar_select %p148, %s147, 127
      %s150 = smul.addr %s149, 4
      %s151 = scalar_lea.vmem %s0, %s150
      %p152 = pneg %p36
      %p153 = pneg %p33
      %p154 = pneg %p57
      %p155 = pneg %p54
      %p156 = pneg %p83
      %p157 = pneg %p80
      %s158 = smul.u32 64, %s15
      %p159 = scmp.lt.s32.totalorder %s158, 127
      %s160 = scalar_select %p159, %s158, 127
      %s161 = smul.addr %s160, 4
      %s162 = scalar_lea.vmem %s2, %s161
      %p163 = pneg %p109
      %p164 = pneg %p106
      %p165 = scmp.lt.s32.totalorder %s15, 1
      %s166 = scalar_select %p165, %s15, 1
      %s167 = smul.addr %s166, 8
      %s168 = scalar_lea.vmem %s3, %s167
      %s169 = smul.u32 64, %s15
      %p170 = scmp.lt.s32.totalorder %s169, 127
      %s171 = scalar_select %p170, %s169, 127
      %s172 = smul.addr %s171, 4
      %s173 = scalar_lea.vmem %s0, %s172
      %s174 = smul.u32 64, %s15
      %s175 = smul.u32 64, %s15
      %p176 = scmp.lt.s32.totalorder %s175, 127
      %s177 = scalar_select %p176, %s175, 127
      %s178 = smul.addr %s177, 4
      %s179 = scalar_lea.vmem %s2, %s178
      %s180 = smul.u32 64, %s15
      %p181 = scmp.lt.s32.totalorder %s15, 1
      %s182 = scalar_select %p181, %s15, 1
      %s183 = smul.addr %s182, 8
      %s184 = scalar_lea.vmem %s3, %s183
      %v185 = vld [vmem:[%s173] sm:$0xf]
      %v186 = vld [vmem:[%s173 + $0x4] sm:$0xf]
      %v187 = vld [vmem:[%s173 + $0x8] sm:$0xf]
      %v188 = vld [vmem:[%s173 + $0xc] sm:$0xf]
      %v189 = vld [vmem:[%s173 + $0x10] sm:$0xf]
      %v190 = vld [vmem:[%s173 + $0x14] sm:$0xf]
      %v191 = vld [vmem:[%s173 + $0x18] sm:$0xf]
      %v192 = vld [vmem:[%s173 + $0x1c] sm:$0xf]
      %v193 = vld [vmem:[%s173 + $0x20] sm:$0xf]
      %v194 = vld [vmem:[%s173 + $0x24] sm:$0xf]
      %v195 = vld [vmem:[%s173 + $0x28] sm:$0xf]
      %v196 = vld [vmem:[%s173 + $0x2c] sm:$0xf]
      %v197 = vld [vmem:[%s173 + $0x30] sm:$0xf]
      %v198 = vld [vmem:[%s173 + $0x34] sm:$0xf]
      %v199 = vld [vmem:[%s173 + $0x38] sm:$0xf]
      %v200 = vld [vmem:[%s173 + $0x3c] sm:$0xf]
      %v201 = vld [vmem:[%s173 + $0x40] sm:$0xf]
      %v202 = vld [vmem:[%s173 + $0x44] sm:$0xf]
      %v203 = vld [vmem:[%s173 + $0x48] sm:$0xf]
      %v204 = vld [vmem:[%s173 + $0x4c] sm:$0xf]
      %v205 = vld [vmem:[%s173 + $0x50] sm:$0xf]
      %v206 = vld [vmem:[%s173 + $0x54] sm:$0xf]
      %v207 = vld [vmem:[%s173 + $0x58] sm:$0xf]
      %v208 = vld [vmem:[%s173 + $0x5c] sm:$0xf]
      %v209 = vld [vmem:[%s173 + $0x60] sm:$0xf]
      %v210 = vld [vmem:[%s173 + $0x64] sm:$0xf]
      %v211 = vld [vmem:[%s173 + $0x68] sm:$0xf]
      %v212 = vld [vmem:[%s173 + $0x6c] sm:$0xf]
      %v213 = vld [vmem:[%s173 + $0x70] sm:$0xf]
      %v214 = vld [vmem:[%s173 + $0x74] sm:$0xf]
      %v215 = vld [vmem:[%s173 + $0x78] sm:$0xf]
      %v216 = vld [vmem:[%s173 + $0x7c] sm:$0xf]
      %v217 = vld [vmem:[%s173 + $0x80] sm:$0xf]
      %v218 = vld [vmem:[%s173 + $0x84] sm:$0xf]
      %v219 = vld [vmem:[%s173 + $0x88] sm:$0xf]
      %v220 = vld [vmem:[%s173 + $0x8c] sm:$0xf]
      %v221 = vld [vmem:[%s173 + $0x90] sm:$0xf]
      %v222 = vld [vmem:[%s173 + $0x94] sm:$0xf]
      %v223 = vld [vmem:[%s173 + $0x98] sm:$0xf]
      %v224 = vld [vmem:[%s173 + $0x9c] sm:$0xf]
      %v225 = vld [vmem:[%s173 + $0xa0] sm:$0xf]
      %v226 = vld [vmem:[%s173 + $0xa4] sm:$0xf]
      %v227 = vld [vmem:[%s173 + $0xa8] sm:$0xf]
      %v228 = vld [vmem:[%s173 + $0xac] sm:$0xf]
      %v229 = vld [vmem:[%s173 + $0xb0] sm:$0xf]
      %v230 = vld [vmem:[%s173 + $0xb4] sm:$0xf]
      %v231 = vld [vmem:[%s173 + $0xb8] sm:$0xf]
      %v232 = vld [vmem:[%s173 + $0xbc] sm:$0xf]
      %v233 = vld [vmem:[%s173 + $0xc0] sm:$0xf]
      %v234 = vld [vmem:[%s173 + $0xc4] sm:$0xf]
      %v235 = vld [vmem:[%s173 + $0xc8] sm:$0xf]
      %v236 = vld [vmem:[%s173 + $0xcc] sm:$0xf]
      %v237 = vld [vmem:[%s173 + $0xd0] sm:$0xf]
      %v238 = vld [vmem:[%s173 + $0xd4] sm:$0xf]
      %v239 = vld [vmem:[%s173 + $0xd8] sm:$0xf]
      %v240 = vld [vmem:[%s173 + $0xdc] sm:$0xf]
      %v241 = vld [vmem:[%s173 + $0xe0] sm:$0xf]
      %v242 = vld [vmem:[%s173 + $0xe4] sm:$0xf]
      %v243 = vld [vmem:[%s173 + $0xe8] sm:$0xf]
      %v244 = vld [vmem:[%s173 + $0xec] sm:$0xf]
      %v245 = vld [vmem:[%s173 + $0xf0] sm:$0xf]
      %v246 = vld [vmem:[%s173 + $0xf4] sm:$0xf]
      %v247 = vld [vmem:[%s173 + $0xf8] sm:$0xf]
      %v248 = vld [vmem:[%s173 + $0xfc] sm:$0xf]
      %v249 = vld [vmem:[%s1] sm:$0xf]
      %v250 = vld [vmem:[%s1 + $0x4] sm:$0xf]
      %v251 = vld [vmem:[%s1 + $0x8] sm:$0xf]
      %v252 = vld [vmem:[%s1 + $0xc] sm:$0xf]
      %v253 = vld [vmem:[%s1 + $0x10] sm:$0xf]
      %v254 = vld [vmem:[%s1 + $0x14] sm:$0xf]
      %v255 = vld [vmem:[%s1 + $0x18] sm:$0xf]
      %v256 = vld [vmem:[%s1 + $0x1c] sm:$0xf]
      %v257 = vld [vmem:[%s1 + $0x20] sm:$0xf]
      %v258 = vld [vmem:[%s1 + $0x24] sm:$0xf]
      %v259 = vld [vmem:[%s1 + $0x28] sm:$0xf]
      %v260 = vld [vmem:[%s1 + $0x2c] sm:$0xf]
      %v261 = vld [vmem:[%s1 + $0x30] sm:$0xf]
      %v262 = vld [vmem:[%s1 + $0x34] sm:$0xf]
      %v263 = vld [vmem:[%s1 + $0x38] sm:$0xf]
      %v264 = vld [vmem:[%s1 + $0x3c] sm:$0xf]
      %v329 = vunpack.c.l.b16 %v185
      %v330 = vunpack.c.l.b16 %v186
      %v331 = vunpack.c.l.b16 %v187
      %v332 = vunpack.c.l.b16 %v188
      %v333 = vunpack.c.l.b16 %v189
      %v334 = vunpack.c.l.b16 %v190
      %v335 = vunpack.c.l.b16 %v191
      %v336 = vunpack.c.l.b16 %v192
      %v337 = vunpack.c.l.b16 %v193
      %v338 = vunpack.c.l.b16 %v194
      %v339 = vunpack.c.l.b16 %v195
      %v340 = vunpack.c.l.b16 %v196
      %v341 = vunpack.c.l.b16 %v197
      %v342 = vunpack.c.l.b16 %v198
      %v343 = vunpack.c.l.b16 %v199
      %v344 = vunpack.c.l.b16 %v200
      %v345 = vunpack.c.l.b16 %v201
      %v346 = vunpack.c.l.b16 %v202
      %v347 = vunpack.c.l.b16 %v203
      %v348 = vunpack.c.l.b16 %v204
      %v349 = vunpack.c.l.b16 %v205
      %v350 = vunpack.c.l.b16 %v206
      %v351 = vunpack.c.l.b16 %v207
      %v352 = vunpack.c.l.b16 %v208
      %v353 = vunpack.c.l.b16 %v209
      %v354 = vunpack.c.l.b16 %v210
      %v355 = vunpack.c.l.b16 %v211
      %v356 = vunpack.c.l.b16 %v212
      %v357 = vunpack.c.l.b16 %v213
      %v358 = vunpack.c.l.b16 %v214
      %v359 = vunpack.c.l.b16 %v215
      %v360 = vunpack.c.l.b16 %v216
      %v361 = vunpack.c.l.b16 %v217
      %v362 = vunpack.c.l.b16 %v218
      %v363 = vunpack.c.l.b16 %v219
      %v364 = vunpack.c.l.b16 %v220
      %v365 = vunpack.c.l.b16 %v221
      %v366 = vunpack.c.l.b16 %v222
      %v367 = vunpack.c.l.b16 %v223
      %v368 = vunpack.c.l.b16 %v224
      %v369 = vunpack.c.l.b16 %v225
      %v370 = vunpack.c.l.b16 %v226
      %v371 = vunpack.c.l.b16 %v227
      %v372 = vunpack.c.l.b16 %v228
      %v373 = vunpack.c.l.b16 %v229
      %v374 = vunpack.c.l.b16 %v230
      %v375 = vunpack.c.l.b16 %v231
      %v376 = vunpack.c.l.b16 %v232
      %v377 = vunpack.c.l.b16 %v233
      %v378 = vunpack.c.l.b16 %v234
      %v379 = vunpack.c.l.b16 %v235
      %v380 = vunpack.c.l.b16 %v236
      %v381 = vunpack.c.l.b16 %v237
      %v382 = vunpack.c.l.b16 %v238
      %v383 = vunpack.c.l.b16 %v239
      %v384 = vunpack.c.l.b16 %v240
      %v385 = vunpack.c.l.b16 %v241
      %v386 = vunpack.c.l.b16 %v242
      %v387 = vunpack.c.l.b16 %v243
      %v388 = vunpack.c.l.b16 %v244
      %v389 = vunpack.c.l.b16 %v245
      %v390 = vunpack.c.l.b16 %v246
      %v391 = vunpack.c.l.b16 %v247
      %v392 = vunpack.c.l.b16 %v248
      %v393 = vpack.c.b16 %v330, %v329
      %v394 = vpack.c.b16 %v332, %v331
      %v395 = vpack.c.b16 %v334, %v333
      %v396 = vpack.c.b16 %v336, %v335
      %v397 = vpack.c.b16 %v338, %v337
      %v398 = vpack.c.b16 %v340, %v339
      %v399 = vpack.c.b16 %v342, %v341
      %v400 = vpack.c.b16 %v344, %v343
      %v401 = vpack.c.b16 %v346, %v345
      %v402 = vpack.c.b16 %v348, %v347
      %v403 = vpack.c.b16 %v350, %v349
      %v404 = vpack.c.b16 %v352, %v351
      %v405 = vpack.c.b16 %v354, %v353
      %v406 = vpack.c.b16 %v356, %v355
      %v407 = vpack.c.b16 %v358, %v357
      %v408 = vpack.c.b16 %v360, %v359
      %v409 = vpack.c.b16 %v362, %v361
      %v410 = vpack.c.b16 %v364, %v363
      %v411 = vpack.c.b16 %v366, %v365
      %v412 = vpack.c.b16 %v368, %v367
      %v413 = vpack.c.b16 %v370, %v369
      %v414 = vpack.c.b16 %v372, %v371
      %v415 = vpack.c.b16 %v374, %v373
      %v416 = vpack.c.b16 %v376, %v375
      %v417 = vpack.c.b16 %v378, %v377
      %v418 = vpack.c.b16 %v380, %v379
      %v419 = vpack.c.b16 %v382, %v381
      %v420 = vpack.c.b16 %v384, %v383
      %v421 = vpack.c.b16 %v386, %v385
      %v422 = vpack.c.b16 %v388, %v387
      %v423 = vpack.c.b16 %v390, %v389
      %v424 = vpack.c.b16 %v392, %v391
      %v473 = vunpack.c.l.b16 %v249
      %v474 = vunpack.c.l.b16 %v250
      %v475 = vunpack.c.l.b16 %v251
      %v476 = vunpack.c.l.b16 %v252
      %v477 = vunpack.c.l.b16 %v253
      %v478 = vunpack.c.l.b16 %v254
      %v479 = vunpack.c.l.b16 %v255
      %v480 = vunpack.c.l.b16 %v256
      %v481 = vunpack.c.l.b16 %v257
      %v482 = vunpack.c.l.b16 %v258
      %v483 = vunpack.c.l.b16 %v259
      %v484 = vunpack.c.l.b16 %v260
      %v485 = vunpack.c.l.b16 %v261
      %v486 = vunpack.c.l.b16 %v262
      %v487 = vunpack.c.l.b16 %v263
      %v488 = vunpack.c.l.b16 %v264
      %v489 = vpack.c.b16 %v474, %v473
      %v490 = vpack.c.b16 %v476, %v475
      %v491 = vpack.c.b16 %v478, %v477
      %v492 = vpack.c.b16 %v480, %v479
      %v493 = vpack.c.b16 %v482, %v481
      %v494 = vpack.c.b16 %v484, %v483
      %v495 = vpack.c.b16 %v486, %v485
      %v496 = vpack.c.b16 %v488, %v487
      %505 = vmatpush.bf16.msra.mxu0 %v496
      %506 = vmatpush.bf16.msra.mxu0 %v495
      %507 = vmatpush.bf16.msra.mxu0 %v494
      %508 = vmatpush.bf16.msra.mxu0 %v493
      %509 = vmatpush.bf16.msra.mxu0 %v492
      %510 = vmatpush.bf16.msra.mxu0 %v491
      %511 = vmatpush.bf16.msra.mxu0 %v490
      %512 = vmatpush.bf16.msra.mxu0 %v489
      %513 = vmatmul.bf16.gmra.mxu0 %v393
      %v514 = vpop.f32.mrf.mxu0
      %v515 = vadd.f32 0.0, %v514
      %v516 = vpop.f32.mrf.mxu0
      %v517 = vadd.f32 0.0, %v516
      %518 = vmatmul.bf16.gmra.mxu0 %v394
      %v519 = vpop.f32.mrf.mxu0
      %v520 = vadd.f32 0.0, %v519
      %v521 = vpop.f32.mrf.mxu0
      %v522 = vadd.f32 0.0, %v521
      %523 = vmatmul.bf16.gmra.mxu0 %v395
      %v524 = vpop.f32.mrf.mxu0
      %v525 = vadd.f32 0.0, %v524
      %v526 = vpop.f32.mrf.mxu0
      %v527 = vadd.f32 0.0, %v526
      %528 = vmatmul.bf16.gmra.mxu0 %v396
      %v529 = vpop.f32.mrf.mxu0
      %v530 = vadd.f32 0.0, %v529
      %v531 = vpop.f32.mrf.mxu0
      %v532 = vadd.f32 0.0, %v531
      %533 = vmatmul.bf16.gmra.mxu0 %v397
      %v534 = vpop.f32.mrf.mxu0
      %v535 = vadd.f32 0.0, %v534
      %v536 = vpop.f32.mrf.mxu0
      %v537 = vadd.f32 0.0, %v536
      %538 = vmatmul.bf16.gmra.mxu0 %v398
      %v539 = vpop.f32.mrf.mxu0
      %v540 = vadd.f32 0.0, %v539
      %v541 = vpop.f32.mrf.mxu0
      %v542 = vadd.f32 0.0, %v541
      %543 = vmatmul.bf16.gmra.mxu0 %v399
      %v544 = vpop.f32.mrf.mxu0
      %v545 = vadd.f32 0.0, %v544
      %v546 = vpop.f32.mrf.mxu0
      %v547 = vadd.f32 0.0, %v546
      %548 = vmatmul.bf16.gmra.mxu0 %v400
      %v549 = vpop.f32.mrf.mxu0
      %v550 = vadd.f32 0.0, %v549
      %v551 = vpop.f32.mrf.mxu0
      %v552 = vadd.f32 0.0, %v551
      %553 = vmatmul.bf16.gmra.mxu0 %v401
      %v554 = vpop.f32.mrf.mxu0
      %v555 = vadd.f32 0.0, %v554
      %v556 = vpop.f32.mrf.mxu0
      %v557 = vadd.f32 0.0, %v556
      %558 = vmatmul.bf16.gmra.mxu0 %v402
      %v559 = vpop.f32.mrf.mxu0
      %v560 = vadd.f32 0.0, %v559
      %v561 = vpop.f32.mrf.mxu0
      %v562 = vadd.f32 0.0, %v561
      %563 = vmatmul.bf16.gmra.mxu0 %v403
      %v564 = vpop.f32.mrf.mxu0
      %v565 = vadd.f32 0.0, %v564
      %v566 = vpop.f32.mrf.mxu0
      %v567 = vadd.f32 0.0, %v566
      %568 = vmatmul.bf16.gmra.mxu0 %v404
      %v569 = vpop.f32.mrf.mxu0
      %v570 = vadd.f32 0.0, %v569
      %v571 = vpop.f32.mrf.mxu0
      %v572 = vadd.f32 0.0, %v571
      %573 = vmatmul.bf16.gmra.mxu0 %v405
      %v574 = vpop.f32.mrf.mxu0
      %v575 = vadd.f32 0.0, %v574
      %v576 = vpop.f32.mrf.mxu0
      %v577 = vadd.f32 0.0, %v576
      %578 = vmatmul.bf16.gmra.mxu0 %v406
      %v579 = vpop.f32.mrf.mxu0
      %v580 = vadd.f32 0.0, %v579
      %v581 = vpop.f32.mrf.mxu0
      %v582 = vadd.f32 0.0, %v581
      %583 = vmatmul.bf16.gmra.mxu0 %v407
      %v584 = vpop.f32.mrf.mxu0
      %v585 = vadd.f32 0.0, %v584
      %v586 = vpop.f32.mrf.mxu0
      %v587 = vadd.f32 0.0, %v586
      %588 = vmatmul.bf16.gmra.mxu0 %v408
      %v589 = vpop.f32.mrf.mxu0
      %v590 = vadd.f32 0.0, %v589
      %v591 = vpop.f32.mrf.mxu0
      %v592 = vadd.f32 0.0, %v591
      %593 = vmatmul.bf16.gmra.mxu0 %v409
      %v594 = vpop.f32.mrf.mxu0
      %v595 = vadd.f32 0.0, %v594
      %v596 = vpop.f32.mrf.mxu0
      %v597 = vadd.f32 0.0, %v596
      %598 = vmatmul.bf16.gmra.mxu0 %v410
      %v599 = vpop.f32.mrf.mxu0
      %v600 = vadd.f32 0.0, %v599
      %v601 = vpop.f32.mrf.mxu0
      %v602 = vadd.f32 0.0, %v601
      %603 = vmatmul.bf16.gmra.mxu0 %v411
      %v604 = vpop.f32.mrf.mxu0
      %v605 = vadd.f32 0.0, %v604
      %v606 = vpop.f32.mrf.mxu0
      %v607 = vadd.f32 0.0, %v606
      %608 = vmatmul.bf16.gmra.mxu0 %v412
      %v609 = vpop.f32.mrf.mxu0
      %v610 = vadd.f32 0.0, %v609
      %v611 = vpop.f32.mrf.mxu0
      %v612 = vadd.f32 0.0, %v611
      %613 = vmatmul.bf16.gmra.mxu0 %v413
      %v614 = vpop.f32.mrf.mxu0
      %v615 = vadd.f32 0.0, %v614
      %v616 = vpop.f32.mrf.mxu0
      %v617 = vadd.f32 0.0, %v616
      %618 = vmatmul.bf16.gmra.mxu0 %v414
      %v619 = vpop.f32.mrf.mxu0
      %v620 = vadd.f32 0.0, %v619
      %v621 = vpop.f32.mrf.mxu0
      %v622 = vadd.f32 0.0, %v621
      %623 = vmatmul.bf16.gmra.mxu0 %v415
      %v624 = vpop.f32.mrf.mxu0
      %v625 = vadd.f32 0.0, %v624
      %v626 = vpop.f32.mrf.mxu0
      %v627 = vadd.f32 0.0, %v626
      %628 = vmatmul.bf16.gmra.mxu0 %v416
      %v629 = vpop.f32.mrf.mxu0
      %v630 = vadd.f32 0.0, %v629
      %v631 = vpop.f32.mrf.mxu0
      %v632 = vadd.f32 0.0, %v631
      %633 = vmatmul.bf16.gmra.mxu0 %v417
      %v634 = vpop.f32.mrf.mxu0
      %v635 = vadd.f32 0.0, %v634
      %v636 = vpop.f32.mrf.mxu0
      %v637 = vadd.f32 0.0, %v636
      %638 = vmatmul.bf16.gmra.mxu0 %v418
      %v639 = vpop.f32.mrf.mxu0
      %v640 = vadd.f32 0.0, %v639
      %v641 = vpop.f32.mrf.mxu0
      %v642 = vadd.f32 0.0, %v641
      %643 = vmatmul.bf16.gmra.mxu0 %v419
      %v644 = vpop.f32.mrf.mxu0
      %v645 = vadd.f32 0.0, %v644
      %v646 = vpop.f32.mrf.mxu0
      %v647 = vadd.f32 0.0, %v646
      %648 = vmatmul.bf16.gmra.mxu0 %v420
      %v649 = vpop.f32.mrf.mxu0
      %v650 = vadd.f32 0.0, %v649
      %v651 = vpop.f32.mrf.mxu0
      %v652 = vadd.f32 0.0, %v651
      %653 = vmatmul.bf16.gmra.mxu0 %v421
      %v654 = vpop.f32.mrf.mxu0
      %v655 = vadd.f32 0.0, %v654
      %v656 = vpop.f32.mrf.mxu0
      %v657 = vadd.f32 0.0, %v656
      %658 = vmatmul.bf16.gmra.mxu0 %v422
      %v659 = vpop.f32.mrf.mxu0
      %v660 = vadd.f32 0.0, %v659
      %v661 = vpop.f32.mrf.mxu0
      %v662 = vadd.f32 0.0, %v661
      %663 = vmatmul.bf16.gmra.mxu0 %v423
      %v664 = vpop.f32.mrf.mxu0
      %v665 = vadd.f32 0.0, %v664
      %v666 = vpop.f32.mrf.mxu0
      %v667 = vadd.f32 0.0, %v666
      %668 = vmatmul.bf16.gmra.mxu0 %v424
      %v669 = vpop.f32.mrf.mxu0
      %v670 = vadd.f32 0.0, %v669
      %v671 = vpop.f32.mrf.mxu0
      %v672 = vadd.f32 0.0, %v671
      %673 = vdwg.mxu0
      %v674 = vpack.c.bf16 %v515, %v515
      %v675 = vpack.c.bf16 %v517, %v517
      %v676 = vpack.c.bf16 %v520, %v520
      %v677 = vpack.c.bf16 %v522, %v522
      %v678 = vpack.c.bf16 %v525, %v525
      %v679 = vpack.c.bf16 %v527, %v527
      %v680 = vpack.c.bf16 %v530, %v530
      %v681 = vpack.c.bf16 %v532, %v532
      %v682 = vpack.c.bf16 %v535, %v535
      %v683 = vpack.c.bf16 %v537, %v537
      %v684 = vpack.c.bf16 %v540, %v540
      %v685 = vpack.c.bf16 %v542, %v542
      %v686 = vpack.c.bf16 %v545, %v545
      %v687 = vpack.c.bf16 %v547, %v547
      %v688 = vpack.c.bf16 %v550, %v550
      %v689 = vpack.c.bf16 %v552, %v552
      %v690 = vpack.c.bf16 %v555, %v555
      %v691 = vpack.c.bf16 %v557, %v557
      %v692 = vpack.c.bf16 %v560, %v560
      %v693 = vpack.c.bf16 %v562, %v562
      %v694 = vpack.c.bf16 %v565, %v565
      %v695 = vpack.c.bf16 %v567, %v567
      %v696 = vpack.c.bf16 %v570, %v570
      %v697 = vpack.c.bf16 %v572, %v572
      %v698 = vpack.c.bf16 %v575, %v575
      %v699 = vpack.c.bf16 %v577, %v577
      %v700 = vpack.c.bf16 %v580, %v580
      %v701 = vpack.c.bf16 %v582, %v582
      %v702 = vpack.c.bf16 %v585, %v585
      %v703 = vpack.c.bf16 %v587, %v587
      %v704 = vpack.c.bf16 %v590, %v590
      %v705 = vpack.c.bf16 %v592, %v592
      %v706 = vpack.c.bf16 %v595, %v595
      %v707 = vpack.c.bf16 %v597, %v597
      %v708 = vpack.c.bf16 %v600, %v600
      %v709 = vpack.c.bf16 %v602, %v602
      %v710 = vpack.c.bf16 %v605, %v605
      %v711 = vpack.c.bf16 %v607, %v607
      %v712 = vpack.c.bf16 %v610, %v610
      %v713 = vpack.c.bf16 %v612, %v612
      %v714 = vpack.c.bf16 %v615, %v615
      %v715 = vpack.c.bf16 %v617, %v617
      %v716 = vpack.c.bf16 %v620, %v620
      %v717 = vpack.c.bf16 %v622, %v622
      %v718 = vpack.c.bf16 %v625, %v625
      %v719 = vpack.c.bf16 %v627, %v627
      %v720 = vpack.c.bf16 %v630, %v630
      %v721 = vpack.c.bf16 %v632, %v632
      %v722 = vpack.c.bf16 %v635, %v635
      %v723 = vpack.c.bf16 %v637, %v637
      %v724 = vpack.c.bf16 %v640, %v640
      %v725 = vpack.c.bf16 %v642, %v642
      %v726 = vpack.c.bf16 %v645, %v645
      %v727 = vpack.c.bf16 %v647, %v647
      %v728 = vpack.c.bf16 %v650, %v650
      %v729 = vpack.c.bf16 %v652, %v652
      %v730 = vpack.c.bf16 %v655, %v655
      %v731 = vpack.c.bf16 %v657, %v657
      %v732 = vpack.c.bf16 %v660, %v660
      %v733 = vpack.c.bf16 %v662, %v662
      %v734 = vpack.c.bf16 %v665, %v665
      %v735 = vpack.c.bf16 %v667, %v667
      %v736 = vpack.c.bf16 %v670, %v670
      %v737 = vpack.c.bf16 %v672, %v672
      %738 = vst [vmem:[%s179] sm:$0xf] %v674
      %739 = vst [vmem:[%s179 + $0x4] sm:$0xf] %v675
      %740 = vst [vmem:[%s179 + $0x8] sm:$0xf] %v676
      %741 = vst [vmem:[%s179 + $0xc] sm:$0xf] %v677
      %742 = vst [vmem:[%s179 + $0x10] sm:$0xf] %v678
      %743 = vst [vmem:[%s179 + $0x14] sm:$0xf] %v679
      %744 = vst [vmem:[%s179 + $0x18] sm:$0xf] %v680
      %745 = vst [vmem:[%s179 + $0x1c] sm:$0xf] %v681
      %746 = vst [vmem:[%s179 + $0x20] sm:$0xf] %v682
      %747 = vst [vmem:[%s179 + $0x24] sm:$0xf] %v683
      %748 = vst [vmem:[%s179 + $0x28] sm:$0xf] %v684
      %749 = vst [vmem:[%s179 + $0x2c] sm:$0xf] %v685
      %750 = vst [vmem:[%s179 + $0x30] sm:$0xf] %v686
      %751 = vst [vmem:[%s179 + $0x34] sm:$0xf] %v687
      %752 = vst [vmem:[%s179 + $0x38] sm:$0xf] %v688
      %753 = vst [vmem:[%s179 + $0x3c] sm:$0xf] %v689
      %754 = vst [vmem:[%s179 + $0x40] sm:$0xf] %v690
      %755 = vst [vmem:[%s179 + $0x44] sm:$0xf] %v691
      %756 = vst [vmem:[%s179 + $0x48] sm:$0xf] %v692
      %757 = vst [vmem:[%s179 + $0x4c] sm:$0xf] %v693
      %758 = vst [vmem:[%s179 + $0x50] sm:$0xf] %v694
      %759 = vst [vmem:[%s179 + $0x54] sm:$0xf] %v695
      %760 = vst [vmem:[%s179 + $0x58] sm:$0xf] %v696
      %761 = vst [vmem:[%s179 + $0x5c] sm:$0xf] %v697
      %762 = vst [vmem:[%s179 + $0x60] sm:$0xf] %v698
      %763 = vst [vmem:[%s179 + $0x64] sm:$0xf] %v699
      %764 = vst [vmem:[%s179 + $0x68] sm:$0xf] %v700
      %765 = vst [vmem:[%s179 + $0x6c] sm:$0xf] %v701
      %766 = vst [vmem:[%s179 + $0x70] sm:$0xf] %v702
      %767 = vst [vmem:[%s179 + $0x74] sm:$0xf] %v703
      %768 = vst [vmem:[%s179 + $0x78] sm:$0xf] %v704
      %769 = vst [vmem:[%s179 + $0x7c] sm:$0xf] %v705
      %770 = vst [vmem:[%s179 + $0x80] sm:$0xf] %v706
      %771 = vst [vmem:[%s179 + $0x84] sm:$0xf] %v707
      %772 = vst [vmem:[%s179 + $0x88] sm:$0xf] %v708
      %773 = vst [vmem:[%s179 + $0x8c] sm:$0xf] %v709
      %774 = vst [vmem:[%s179 + $0x90] sm:$0xf] %v710
      %775 = vst [vmem:[%s179 + $0x94] sm:$0xf] %v711
      %776 = vst [vmem:[%s179 + $0x98] sm:$0xf] %v712
      %777 = vst [vmem:[%s179 + $0x9c] sm:$0xf] %v713
      %778 = vst [vmem:[%s179 + $0xa0] sm:$0xf] %v714
      %779 = vst [vmem:[%s179 + $0xa4] sm:$0xf] %v715
      %780 = vst [vmem:[%s179 + $0xa8] sm:$0xf] %v716
      %781 = vst [vmem:[%s179 + $0xac] sm:$0xf] %v717
      %782 = vst [vmem:[%s179 + $0xb0] sm:$0xf] %v718
      %783 = vst [vmem:[%s179 + $0xb4] sm:$0xf] %v719
      %784 = vst [vmem:[%s179 + $0xb8] sm:$0xf] %v720
      %785 = vst [vmem:[%s179 + $0xbc] sm:$0xf] %v721
      %786 = vst [vmem:[%s179 + $0xc0] sm:$0xf] %v722
      %787 = vst [vmem:[%s179 + $0xc4] sm:$0xf] %v723
      %788 = vst [vmem:[%s179 + $0xc8] sm:$0xf] %v724
      %789 = vst [vmem:[%s179 + $0xcc] sm:$0xf] %v725
      %790 = vst [vmem:[%s179 + $0xd0] sm:$0xf] %v726
      %791 = vst [vmem:[%s179 + $0xd4] sm:$0xf] %v727
      %792 = vst [vmem:[%s179 + $0xd8] sm:$0xf] %v728
      %793 = vst [vmem:[%s179 + $0xdc] sm:$0xf] %v729
      %794 = vst [vmem:[%s179 + $0xe0] sm:$0xf] %v730
      %795 = vst [vmem:[%s179 + $0xe4] sm:$0xf] %v731
      %796 = vst [vmem:[%s179 + $0xe8] sm:$0xf] %v732
      %797 = vst [vmem:[%s179 + $0xec] sm:$0xf] %v733
      %798 = vst [vmem:[%s179 + $0xf0] sm:$0xf] %v734
      %799 = vst [vmem:[%s179 + $0xf4] sm:$0xf] %v735
      %800 = vst [vmem:[%s179 + $0xf8] sm:$0xf] %v736
      %801 = vst [vmem:[%s179 + $0xfc] sm:$0xf] %v737
      %v802 = vadd.f32 %v515, %v517
      %v803 = vadd.f32 %v802, %v520
      %v804 = vadd.f32 %v803, %v522
      %v805 = vadd.f32 %v804, %v525
      %v806 = vadd.f32 %v805, %v527
      %v807 = vadd.f32 %v806, %v530
      %v808 = vadd.f32 %v807, %v532
      %v809 = vadd.f32 %v808, %v535
      %v810 = vadd.f32 %v809, %v537
      %v811 = vadd.f32 %v810, %v540
      %v812 = vadd.f32 %v811, %v542
      %v813 = vadd.f32 %v812, %v545
      %v814 = vadd.f32 %v813, %v547
      %v815 = vadd.f32 %v814, %v550
      %v816 = vadd.f32 %v815, %v552
      %v817 = vadd.f32 %v816, %v555
      %v818 = vadd.f32 %v817, %v557
      %v819 = vadd.f32 %v818, %v560
      %v820 = vadd.f32 %v819, %v562
      %v821 = vadd.f32 %v820, %v565
      %v822 = vadd.f32 %v821, %v567
      %v823 = vadd.f32 %v822, %v570
      %v824 = vadd.f32 %v823, %v572
      %v825 = vadd.f32 %v824, %v575
      %v826 = vadd.f32 %v825, %v577
      %v827 = vadd.f32 %v826, %v580
      %v828 = vadd.f32 %v827, %v582
      %v829 = vadd.f32 %v828, %v585
      %v830 = vadd.f32 %v829, %v587
      %v831 = vadd.f32 %v830, %v590
      %v832 = vadd.f32 %v831, %v592
      %v833 = vadd.f32 %v832, %v595
      %v834 = vadd.f32 %v833, %v597
      %v835 = vadd.f32 %v834, %v600
      %v836 = vadd.f32 %v835, %v602
      %v837 = vadd.f32 %v836, %v605
      %v838 = vadd.f32 %v837, %v607
      %v839 = vadd.f32 %v838, %v610
      %v840 = vadd.f32 %v839, %v612
      %v841 = vadd.f32 %v840, %v615
      %v842 = vadd.f32 %v841, %v617
      %v843 = vadd.f32 %v842, %v620
      %v844 = vadd.f32 %v843, %v622
      %v845 = vadd.f32 %v844, %v625
      %v846 = vadd.f32 %v845, %v627
      %v847 = vadd.f32 %v846, %v630
      %v848 = vadd.f32 %v847, %v632
      %v849 = vadd.f32 %v848, %v635
      %v850 = vadd.f32 %v849, %v637
      %v851 = vadd.f32 %v850, %v640
      %v852 = vadd.f32 %v851, %v642
      %v853 = vadd.f32 %v852, %v645
      %v854 = vadd.f32 %v853, %v647
      %v855 = vadd.f32 %v854, %v650
      %v856 = vadd.f32 %v855, %v652
      %v857 = vadd.f32 %v856, %v655
      %v858 = vadd.f32 %v857, %v657
      %v859 = vadd.f32 %v858, %v660
      %v860 = vadd.f32 %v859, %v662
      %v861 = vadd.f32 %v860, %v665
      %v862 = vadd.f32 %v861, %v667
      %v863 = vadd.f32 %v862, %v670
      %v864 = vadd.f32 %v863, %v672
      %v865 = vrot.slane %v864, 4
      %v866 = vadd.f32 %v864, %v865
      %v867 = vrot.slane %v866, 2
      %v868 = vadd.f32 %v866, %v867
      %v869 = vrot.slane %v868, 1
      %v870 = vadd.f32 %v868, %v869
      %871 = vst [vmem:[%s184] sm:$0x1] %v870
      %v872 = vmul.f32 %v515, %v515
      %v873 = vmul.f32 %v517, %v517
      %v874 = vmul.f32 %v520, %v520
      %v875 = vmul.f32 %v522, %v522
      %v876 = vmul.f32 %v525, %v525
      %v877 = vmul.f32 %v527, %v527
      %v878 = vmul.f32 %v530, %v530
      %v879 = vmul.f32 %v532, %v532
      %v880 = vmul.f32 %v535, %v535
      %v881 = vmul.f32 %v537, %v537
      %v882 = vmul.f32 %v540, %v540
      %v883 = vmul.f32 %v542, %v542
      %v884 = vmul.f32 %v545, %v545
      %v885 = vmul.f32 %v547, %v547
      %v886 = vmul.f32 %v550, %v550
      %v887 = vmul.f32 %v552, %v552
      %v888 = vmul.f32 %v555, %v555
      %v889 = vmul.f32 %v557, %v557
      %v890 = vmul.f32 %v560, %v560
      %v891 = vmul.f32 %v562, %v562
      %v892 = vmul.f32 %v565, %v565
      %v893 = vmul.f32 %v567, %v567
      %v894 = vmul.f32 %v570, %v570
      %v895 = vmul.f32 %v572, %v572
      %v896 = vmul.f32 %v575, %v575
      %v897 = vmul.f32 %v577, %v577
      %v898 = vmul.f32 %v580, %v580
      %v899 = vmul.f32 %v582, %v582
      %v900 = vmul.f32 %v585, %v585
      %v901 = vmul.f32 %v587, %v587
      %v902 = vmul.f32 %v590, %v590
      %v903 = vmul.f32 %v592, %v592
      %v904 = vmul.f32 %v595, %v595
      %v905 = vmul.f32 %v597, %v597
      %v906 = vmul.f32 %v600, %v600
      %v907 = vmul.f32 %v602, %v602
      %v908 = vmul.f32 %v605, %v605
      %v909 = vmul.f32 %v607, %v607
      %v910 = vmul.f32 %v610, %v610
      %v911 = vmul.f32 %v612, %v612
      %v912 = vmul.f32 %v615, %v615
      %v913 = vmul.f32 %v617, %v617
      %v914 = vmul.f32 %v620, %v620
      %v915 = vmul.f32 %v622, %v622
      %v916 = vmul.f32 %v625, %v625
      %v917 = vmul.f32 %v627, %v627
      %v918 = vmul.f32 %v630, %v630
      %v919 = vmul.f32 %v632, %v632
      %v920 = vmul.f32 %v635, %v635
      %v921 = vmul.f32 %v637, %v637
      %v922 = vmul.f32 %v640, %v640
      %v923 = vmul.f32 %v642, %v642
      %v924 = vmul.f32 %v645, %v645
      %v925 = vmul.f32 %v647, %v647
      %v926 = vmul.f32 %v650, %v650
      %v927 = vmul.f32 %v652, %v652
      %v928 = vmul.f32 %v655, %v655
      %v929 = vmul.f32 %v657, %v657
      %v930 = vmul.f32 %v660, %v660
      %v931 = vmul.f32 %v662, %v662
      %v932 = vmul.f32 %v665, %v665
      %v933 = vmul.f32 %v667, %v667
      %v934 = vmul.f32 %v670, %v670
      %v935 = vmul.f32 %v672, %v672
      %v936 = vadd.f32 %v872, %v873
      %v937 = vadd.f32 %v936, %v874
      %v938 = vadd.f32 %v937, %v875
      %v939 = vadd.f32 %v938, %v876
      %v940 = vadd.f32 %v939, %v877
      %v941 = vadd.f32 %v940, %v878
      %v942 = vadd.f32 %v941, %v879
      %v943 = vadd.f32 %v942, %v880
      %v944 = vadd.f32 %v943, %v881
      %v945 = vadd.f32 %v944, %v882
      %v946 = vadd.f32 %v945, %v883
      %v947 = vadd.f32 %v946, %v884
      %v948 = vadd.f32 %v947, %v885
      %v949 = vadd.f32 %v948, %v886
      %v950 = vadd.f32 %v949, %v887
      %v951 = vadd.f32 %v950, %v888
      %v952 = vadd.f32 %v951, %v889
      %v953 = vadd.f32 %v952, %v890
      %v954 = vadd.f32 %v953, %v891
      %v955 = vadd.f32 %v954, %v892
      %v956 = vadd.f32 %v955, %v893
      %v957 = vadd.f32 %v956, %v894
      %v958 = vadd.f32 %v957, %v895
      %v959 = vadd.f32 %v958, %v896
      %v960 = vadd.f32 %v959, %v897
      %v961 = vadd.f32 %v960, %v898
      %v962 = vadd.f32 %v961, %v899
      %v963 = vadd.f32 %v962, %v900
      %v964 = vadd.f32 %v963, %v901
      %v965 = vadd.f32 %v964, %v902
      %v966 = vadd.f32 %v965, %v903
      %v967 = vadd.f32 %v966, %v904
      %v968 = vadd.f32 %v967, %v905
      %v969 = vadd.f32 %v968, %v906
      %v970 = vadd.f32 %v969, %v907
      %v971 = vadd.f32 %v970, %v908
      %v972 = vadd.f32 %v971, %v909
      %v973 = vadd.f32 %v972, %v910
      %v974 = vadd.f32 %v973, %v911
      %v975 = vadd.f32 %v974, %v912
      %v976 = vadd.f32 %v975, %v913
      %v977 = vadd.f32 %v976, %v914
      %v978 = vadd.f32 %v977, %v915
      %v979 = vadd.f32 %v978, %v916
      %v980 = vadd.f32 %v979, %v917
      %v981 = vadd.f32 %v980, %v918
      %v982 = vadd.f32 %v981, %v919
      %v983 = vadd.f32 %v982, %v920
      %v984 = vadd.f32 %v983, %v921
      %v985 = vadd.f32 %v984, %v922
      %v986 = vadd.f32 %v985, %v923
      %v987 = vadd.f32 %v986, %v924
      %v988 = vadd.f32 %v987, %v925
      %v989 = vadd.f32 %v988, %v926
      %v990 = vadd.f32 %v989, %v927
      %v991 = vadd.f32 %v990, %v928
      %v992 = vadd.f32 %v991, %v929
      %v993 = vadd.f32 %v992, %v930
      %v994 = vadd.f32 %v993, %v931
      %v995 = vadd.f32 %v994, %v932
      %v996 = vadd.f32 %v995, %v933
      %v997 = vadd.f32 %v996, %v934
      %v998 = vadd.f32 %v997, %v935
      %v999 = vrot.slane %v998, 4
      %v1000 = vadd.f32 %v998, %v999
      %v1001 = vrot.slane %v1000, 2
      %v1002 = vadd.f32 %v1000, %v1001
      %v1003 = vrot.slane %v1002, 1
      %v1004 = vadd.f32 %v1002, %v1003
      %1005 = vst [vmem:[%s184 + $0x1] sm:$0x1] %v1004
      %s1006 = smul.u32 64, %s15
      %p1007 = scmp.lt.s32.totalorder %s1006, 127
      %s1008 = scalar_select %p1007, %s1006, 127
      %s1009 = smul.addr %s1008, 4
      %s1010 = scalar_lea.vmem %s2, %s1009
      %p1011 = scmp.lt.s32.totalorder %s15, 1
      %s1012 = scalar_select %p1011, %s15, 1
      %s1013 = smul.addr %s1012, 8
      %s1014 = scalar_lea.vmem %s3, %s1013
      // Predicated region
      $region29: #{double_conv_up.4} parent=27 // pred_check
        %p1015 = pneg %p80
      $region30: #{double_conv_up.4} parent=27 // pred_check_branch
        %1017 = sbr.rel (%p1015) target = $region32
      $region31: #{double_conv_up.4} parent=27 // pred_region
        %s1018 = smul.u32 64, %s15
      $region32: #{double_conv_up.4} parent=27 // pred_fallthru
        _
      // Predicated region
      $region33: #{double_conv_up.4} parent=27 // pred_check
        %p1019 = pneg %p106
      $region34: #{double_conv_up.4} parent=27 // pred_check_branch
        %1021 = sbr.rel (%p1019) target = $region36
      $region35: #{double_conv_up.4} parent=27 // pred_region
        _
      $region36: #{double_conv_up.4} parent=27 // pred_fallthru
        _
    $region28: #{double_conv_up.4} parent=5 // pred_fallthru
      _
    %p1022 = scmp.le.s32.totalorder 2, %s10
    // Predicated region
    $region37: #{double_conv_up.4} parent=5 // pred_check
      %p1023 = pneg %p1022
    $region38: #{double_conv_up.4} parent=5 // pred_check_branch
      %1025 = sbr.rel (%p1023) target = $region40
    $region39: #{double_conv_up.4} parent=5 // pred_region
      %s1026 = ssub.s32 %s10, 2
      // Predicated region
      $region41: #{double_conv_up.4} parent=39 // pred_check
        %p1027 = pneg %p86
      $region42: #{double_conv_up.4} parent=39 // pred_check_branch
        %1029 = sbr.rel (%p1027) target = $region44
      $region43: #{double_conv_up.4} parent=39 // pred_region
        %s1030 = smul.u32 64, %s16
        %p1031 = scmp.lt.s32.totalorder %s1030, 127
        %s1032 = scalar_select %p1031, %s1030, 127
        %s1033 = smul.addr %s1032, 4
        %s1034 = scalar_lea.vmem %s2, %s1033
      $region44: #{double_conv_up.4} parent=39 // pred_fallthru
        _
      // Predicated region
      $region45: #{double_conv_up.4} parent=39 // pred_check
        %p1035 = pneg %p112
      $region46: #{double_conv_up.4} parent=39 // pred_check_branch
        %1037 = sbr.rel (%p1035) target = $region48
      $region47: #{double_conv_up.4} parent=39 // pred_region
        %p1038 = scmp.lt.s32.totalorder %s16, 1
        %s1039 = scalar_select %p1038, %s16, 1
        %s1040 = smul.addr %s1039, 8
        %s1041 = scalar_lea.vmem %s3, %s1040
      $region48: #{double_conv_up.4} parent=39 // pred_fallthru
        _
    $region40: #{double_conv_up.4} parent=5 // pred_fallthru
      _
  $region6: #{double_conv_up.4} parent=0 // loop_footer
    %s14 = sadd.s32 1, %s10
  $region7: #{double_conv_up.4} parent=0 // loop_footer_branch
    %9 = sbr.rel target = $region3
  $region8: #{double_conv_up.4} parent=0 // loop_exit
    _

// kernel: double_conv_up.5
$region0: #{double_conv_up.5}
  #allocation0 [shape = 'u32[]', space=smem, size = 0x4, offset = 0x4, fixed_abs, tag = 'smem constant byte address 0x4 - core index']
  #allocation1 [shape = 'u32[72,128]{1,0:T(1,128)}', space=vmem, size = 0x9000, scoped, tag = 'internal scratch']
  %s0 = inlined_call_operand.vmem [shape: bf16[1024,128], index: 0, kind: input, shape index: {}]
  %s1 = inlined_call_operand.vmem [shape: f32[1,128], index: 1, kind: input, shape index: {}]
  %s2 = inlined_call_operand.vmem [shape: f32[1,128], index: 2, kind: input, shape index: {}]
  %s3 = inlined_call_operand.vmem [shape: bf16[1024,128], index: 3, kind: output, shape index: {}]
  %s4 = sld [smem:[#allocation0]]
  $region45: #{double_conv_up.5} parent=0
    _
  %s6 = ssub.s32 1, %s4
  %s7 = scalar_select 0, %s6, %s4
  loop: start=0, step=1, limit=4
  $region2: #{double_conv_up.5} parent=0 // loop_pre_header
    _
  $region3: #{double_conv_up.5} parent=0 // loop_header
    %s9 = sphi 0, %s13
    %p10 = scmp.ge.s32.totalorder %s9, 4
    %s19 = sphi 0, %s21
    %s22 = sphi 0, %s19
    %s23 = sphi 0, %s22
    %s39 = sphi 0, %s23
    %s43 = sphi 0, %s43
    %s45 = sphi 0, %s43
    %s46 = sphi 0, %s45
    %s60 = sphi 0, %s46
    %s64 = sphi 0, %s64
    %s66 = sphi 0, %s64
    %s67 = sphi 0, %s66
    %s81 = sphi 0, %s67
    %s87 = sphi 0, %s89
    %s90 = sphi 0, %s87
    %s91 = sphi 0, %s90
    %s107 = sphi 0, %s91
  $region4: #{double_conv_up.5} parent=0 // loop_header_branch
    %12 = sbr.rel (%p10) target = $region8
  $region5: #{double_conv_up.5} parent=0 // loop_body
    %s14 = ssub.s32 %s9, 1
    %s15 = ssub.s32 %s9, 2
    %s16 = sadd.s32 %s9, 1
    %s17 = ssub.s32 %s9, %s16
    %p18 = scmp.eq.s32.totalorder %s17, 0
    %s20 = sadd.s32 %s19, 1
    %s21 = scalar_select %p18, %s19, %s20
    %p24 = pneg %p18
    %p25 = scmp.eq.s32.totalorder %s9, 1
    %p26 = por %p24, %p25
    %p27 = scmp.ne.s32.totalorder %s19, %s22
    %p28 = scmp.eq.s32.totalorder %s9, 0
    %p29 = por %p27, %p28
    %p30 = scmp.ne.s32.totalorder %s19, %s22
    %p31 = scmp.eq.s32.totalorder %s14, 1
    %p32 = por %p30, %p31
    %p33 = scmp.ne.s32.totalorder %s22, %s23
    %p34 = scmp.eq.s32.totalorder %s14, 0
    %p35 = por %p33, %p34
    %p36 = scmp.ne.s32.totalorder %s22, %s23
    %p37 = scmp.eq.s32.totalorder %s15, 1
    %p38 = por %p36, %p37
    %p40 = scmp.ne.s32.totalorder %s23, %s39
    %p41 = scmp.eq.s32.totalorder %s15, 0
    %p42 = por %p40, %p41
    %s44 = sadd.s32 %s43, 1
    %p47 = scmp.eq.s32.totalorder %s9, 1
    %p48 = scmp.ne.s32.totalorder %s43, %s45
    %p49 = scmp.eq.s32.totalorder %s9, 0
    %p50 = por %p48, %p49
    %p51 = scmp.ne.s32.totalorder %s43, %s45
    %p52 = scmp.eq.s32.totalorder %s14, 1
    %p53 = por %p51, %p52
    %p54 = scmp.ne.s32.totalorder %s45, %s46
    %p55 = scmp.eq.s32.totalorder %s14, 0
    %p56 = por %p54, %p55
    %p57 = scmp.ne.s32.totalorder %s45, %s46
    %p58 = scmp.eq.s32.totalorder %s15, 1
    %p59 = por %p57, %p58
    %p61 = scmp.ne.s32.totalorder %s46, %s60
    %p62 = scmp.eq.s32.totalorder %s15, 0
    %p63 = por %p61, %p62
    %s65 = sadd.s32 %s64, 1
    %p68 = scmp.eq.s32.totalorder %s9, 1
    %p69 = scmp.ne.s32.totalorder %s64, %s66
    %p70 = scmp.eq.s32.totalorder %s9, 0
    %p71 = por %p69, %p70
    %p72 = scmp.ne.s32.totalorder %s64, %s66
    %p73 = scmp.eq.s32.totalorder %s14, 1
    %p74 = por %p72, %p73
    %p75 = scmp.ne.s32.totalorder %s66, %s67
    %p76 = scmp.eq.s32.totalorder %s14, 0
    %p77 = por %p75, %p76
    %p78 = scmp.ne.s32.totalorder %s66, %s67
    %p79 = scmp.eq.s32.totalorder %s15, 1
    %p80 = por %p78, %p79
    %p82 = scmp.ne.s32.totalorder %s67, %s81
    %p83 = scmp.eq.s32.totalorder %s15, 0
    %p84 = por %p82, %p83
    %s85 = ssub.s32 %s9, %s16
    %p86 = scmp.eq.s32.totalorder %s85, 0
    %s88 = sadd.s32 %s87, 1
    %s89 = scalar_select %p86, %s87, %s88
    %p92 = pneg %p86
    %p93 = scmp.eq.s32.totalorder %s9, 1
    %p94 = por %p92, %p93
    %p95 = scmp.ne.s32.totalorder %s87, %s90
    %p96 = scmp.eq.s32.totalorder %s9, 0
    %p97 = por %p95, %p96
    %p98 = scmp.ne.s32.totalorder %s87, %s90
    %p99 = scmp.eq.s32.totalorder %s14, 1
    %p100 = por %p98, %p99
    %p101 = scmp.ne.s32.totalorder %s90, %s91
    %p102 = scmp.eq.s32.totalorder %s14, 0
    %p103 = por %p101, %p102
    %p104 = scmp.ne.s32.totalorder %s90, %s91
    %p105 = scmp.eq.s32.totalorder %s15, 1
    %p106 = por %p104, %p105
    %p108 = scmp.ne.s32.totalorder %s91, %s107
    %p109 = scmp.eq.s32.totalorder %s15, 0
    %p110 = por %p108, %p109
    %p111 = scmp.le.s32.totalorder 1, %s9
    %p112 = scmp.lt.s32.totalorder %s9, 3
    %p113 = pnand %p111, %p112
    %p114 = pneg %p113
    // Predicated region
    $region9: #{double_conv_up.5} parent=5 // pred_check
      _
    $region10: #{double_conv_up.5} parent=5 // pred_check_branch
      %116 = sbr.rel (%p113) target = $region12
    $region11: #{double_conv_up.5} parent=5 // pred_region
      %s117 = ssub.s32 %s9, 1
      // Predicated region
      $region13: #{double_conv_up.5} parent=11 // pred_check
        %p118 = pneg %p56
      $region14: #{double_conv_up.5} parent=11 // pred_check_branch
        %120 = sbr.rel (%p118) target = $region16
      $region15: #{double_conv_up.5} parent=11 // pred_region
        _
      $region16: #{double_conv_up.5} parent=11 // pred_fallthru
        _
      // Predicated region
      $region17: #{double_conv_up.5} parent=11 // pred_check
        %p121 = pneg %p77
      $region18: #{double_conv_up.5} parent=11 // pred_check_branch
        %123 = sbr.rel (%p121) target = $region20
      $region19: #{double_conv_up.5} parent=11 // pred_region
        _
      $region20: #{double_conv_up.5} parent=11 // pred_fallthru
        _
    $region12: #{double_conv_up.5} parent=5 // pred_fallthru
      _
    %p124 = scmp.lt.s32.totalorder %s9, 2
    // Predicated region
    $region21: #{double_conv_up.5} parent=5 // pred_check
      %p125 = pneg %p124
    $region22: #{double_conv_up.5} parent=5 // pred_check_branch
      %127 = sbr.rel (%p125) target = $region24
    $region23: #{double_conv_up.5} parent=5 // pred_region
      // Predicated region
      $region25: #{double_conv_up.5} parent=23 // pred_check
        %p128 = pneg %p29
      $region26: #{double_conv_up.5} parent=23 // pred_check_branch
        %130 = sbr.rel (%p128) target = $region28
      $region27: #{double_conv_up.5} parent=23 // pred_region
        %s131 = smul.u32 64, %s9
        %p132 = scmp.lt.s32.totalorder %s131, 127
        %s133 = scalar_select %p132, %s131, 127
        %s134 = smul.addr %s133, 4
        %s135 = scalar_lea.vmem %s0, %s134
        %s136 = smul.u32 64, %s9
      $region28: #{double_conv_up.5} parent=23 // pred_fallthru
        _
    $region24: #{double_conv_up.5} parent=5 // pred_fallthru
      _
    %p137 = scmp.le.s32.totalorder 1, %s9
    %p138 = scmp.lt.s32.totalorder %s9, 3
    %p139 = pnand %p137, %p138
    %p140 = pneg %p139
    // Predicated region
    $region29: #{double_conv_up.5} parent=5 // pred_check
      _
    $region30: #{double_conv_up.5} parent=5 // pred_check_branch
      %142 = sbr.rel (%p139) target = $region32
    $region31: #{double_conv_up.5} parent=5 // pred_region
      %s143 = ssub.s32 %s9, 1
      %s144 = smul.u32 64, %s14
      %p145 = scmp.lt.s32.totalorder %s144, 127
      %s146 = scalar_select %p145, %s144, 127
      %s147 = smul.addr %s146, 4
      %s148 = scalar_lea.vmem %s0, %s147
      %p149 = pneg %p35
      %p150 = pneg %p32
      %p151 = pneg %p56
      %p152 = pneg %p53
      %p153 = pneg %p77
      %p154 = pneg %p74
      %p155 = pneg %p103
      %p156 = pneg %p100
      %s157 = smul.u32 64, %s14
      %p158 = scmp.lt.s32.totalorder %s157, 127
      %s159 = scalar_select %p158, %s157, 127
      %s160 = smul.addr %s159, 4
      %s161 = scalar_lea.vmem %s3, %s160
      %s162 = smul.u32 64, %s14
      %p163 = scmp.lt.s32.totalorder %s162, 127
      %s164 = scalar_select %p163, %s162, 127
      %s165 = smul.addr %s164, 4
      %s166 = scalar_lea.vmem %s0, %s165
      %s167 = smul.u32 64, %s14
      %s168 = smul.u32 64, %s14
      %p169 = scmp.lt.s32.totalorder %s168, 127
      %s170 = scalar_select %p169, %s168, 127
      %s171 = smul.addr %s170, 4
      %s172 = scalar_lea.vmem %s3, %s171
      %s173 = smul.u32 64, %s14
      %v174 = vld [vmem:[%s166] sm:$0xf]
      %v175 = vld [vmem:[%s166 + $0x4] sm:$0xf]
      %v176 = vld [vmem:[%s166 + $0x8] sm:$0xf]
      %v177 = vld [vmem:[%s166 + $0xc] sm:$0xf]
      %v178 = vld [vmem:[%s166 + $0x10] sm:$0xf]
      %v179 = vld [vmem:[%s166 + $0x14] sm:$0xf]
      %v180 = vld [vmem:[%s166 + $0x18] sm:$0xf]
      %v181 = vld [vmem:[%s166 + $0x1c] sm:$0xf]
      %v182 = vld [vmem:[%s166 + $0x20] sm:$0xf]
      %v183 = vld [vmem:[%s166 + $0x24] sm:$0xf]
      %v184 = vld [vmem:[%s166 + $0x28] sm:$0xf]
      %v185 = vld [vmem:[%s166 + $0x2c] sm:$0xf]
      %v186 = vld [vmem:[%s166 + $0x30] sm:$0xf]
      %v187 = vld [vmem:[%s166 + $0x34] sm:$0xf]
      %v188 = vld [vmem:[%s166 + $0x38] sm:$0xf]
      %v189 = vld [vmem:[%s166 + $0x3c] sm:$0xf]
      %v190 = vld [vmem:[%s166 + $0x40] sm:$0xf]
      %v191 = vld [vmem:[%s166 + $0x44] sm:$0xf]
      %v192 = vld [vmem:[%s166 + $0x48] sm:$0xf]
      %v193 = vld [vmem:[%s166 + $0x4c] sm:$0xf]
      %v194 = vld [vmem:[%s166 + $0x50] sm:$0xf]
      %v195 = vld [vmem:[%s166 + $0x54] sm:$0xf]
      %v196 = vld [vmem:[%s166 + $0x58] sm:$0xf]
      %v197 = vld [vmem:[%s166 + $0x5c] sm:$0xf]
      %v198 = vld [vmem:[%s166 + $0x60] sm:$0xf]
      %v199 = vld [vmem:[%s166 + $0x64] sm:$0xf]
      %v200 = vld [vmem:[%s166 + $0x68] sm:$0xf]
      %v201 = vld [vmem:[%s166 + $0x6c] sm:$0xf]
      %v202 = vld [vmem:[%s166 + $0x70] sm:$0xf]
      %v203 = vld [vmem:[%s166 + $0x74] sm:$0xf]
      %v204 = vld [vmem:[%s166 + $0x78] sm:$0xf]
      %v205 = vld [vmem:[%s166 + $0x7c] sm:$0xf]
      %v206 = vld [vmem:[%s166 + $0x80] sm:$0xf]
      %v207 = vld [vmem:[%s166 + $0x84] sm:$0xf]
      %v208 = vld [vmem:[%s166 + $0x88] sm:$0xf]
      %v209 = vld [vmem:[%s166 + $0x8c] sm:$0xf]
      %v210 = vld [vmem:[%s166 + $0x90] sm:$0xf]
      %v211 = vld [vmem:[%s166 + $0x94] sm:$0xf]
      %v212 = vld [vmem:[%s166 + $0x98] sm:$0xf]
      %v213 = vld [vmem:[%s166 + $0x9c] sm:$0xf]
      %v214 = vld [vmem:[%s166 + $0xa0] sm:$0xf]
      %v215 = vld [vmem:[%s166 + $0xa4] sm:$0xf]
      %v216 = vld [vmem:[%s166 + $0xa8] sm:$0xf]
      %v217 = vld [vmem:[%s166 + $0xac] sm:$0xf]
      %v218 = vld [vmem:[%s166 + $0xb0] sm:$0xf]
      %v219 = vld [vmem:[%s166 + $0xb4] sm:$0xf]
      %v220 = vld [vmem:[%s166 + $0xb8] sm:$0xf]
      %v221 = vld [vmem:[%s166 + $0xbc] sm:$0xf]
      %v222 = vld [vmem:[%s166 + $0xc0] sm:$0xf]
      %v223 = vld [vmem:[%s166 + $0xc4] sm:$0xf]
      %v224 = vld [vmem:[%s166 + $0xc8] sm:$0xf]
      %v225 = vld [vmem:[%s166 + $0xcc] sm:$0xf]
      %v226 = vld [vmem:[%s166 + $0xd0] sm:$0xf]
      %v227 = vld [vmem:[%s166 + $0xd4] sm:$0xf]
      %v228 = vld [vmem:[%s166 + $0xd8] sm:$0xf]
      %v229 = vld [vmem:[%s166 + $0xdc] sm:$0xf]
      %v230 = vld [vmem:[%s166 + $0xe0] sm:$0xf]
      %v231 = vld [vmem:[%s166 + $0xe4] sm:$0xf]
      %v232 = vld [vmem:[%s166 + $0xe8] sm:$0xf]
      %v233 = vld [vmem:[%s166 + $0xec] sm:$0xf]
      %v234 = vld [vmem:[%s166 + $0xf0] sm:$0xf]
      %v235 = vld [vmem:[%s166 + $0xf4] sm:$0xf]
      %v236 = vld [vmem:[%s166 + $0xf8] sm:$0xf]
      %v237 = vld [vmem:[%s166 + $0xfc] sm:$0xf]
      %v238 = vld [vmem:[%s1] sm:$0x1]
      %v239 = vunpack.c.l.bf16 %v174
      %v240 = vunpack.c.l.bf16 %v175
      %v241 = vunpack.c.l.bf16 %v176
      %v242 = vunpack.c.l.bf16 %v177
      %v243 = vunpack.c.l.bf16 %v178
      %v244 = vunpack.c.l.bf16 %v179
      %v245 = vunpack.c.l.bf16 %v180
      %v246 = vunpack.c.l.bf16 %v181
      %v247 = vunpack.c.l.bf16 %v182
      %v248 = vunpack.c.l.bf16 %v183
      %v249 = vunpack.c.l.bf16 %v184
      %v250 = vunpack.c.l.bf16 %v185
      %v251 = vunpack.c.l.bf16 %v186
      %v252 = vunpack.c.l.bf16 %v187
      %v253 = vunpack.c.l.bf16 %v188
      %v254 = vunpack.c.l.bf16 %v189
      %v255 = vunpack.c.l.bf16 %v190
      %v256 = vunpack.c.l.bf16 %v191
      %v257 = vunpack.c.l.bf16 %v192
      %v258 = vunpack.c.l.bf16 %v193
      %v259 = vunpack.c.l.bf16 %v194
      %v260 = vunpack.c.l.bf16 %v195
      %v261 = vunpack.c.l.bf16 %v196
      %v262 = vunpack.c.l.bf16 %v197
      %v263 = vunpack.c.l.bf16 %v198
      %v264 = vunpack.c.l.bf16 %v199
      %v265 = vunpack.c.l.bf16 %v200
      %v266 = vunpack.c.l.bf16 %v201
      %v267 = vunpack.c.l.bf16 %v202
      %v268 = vunpack.c.l.bf16 %v203
      %v269 = vunpack.c.l.bf16 %v204
      %v270 = vunpack.c.l.bf16 %v205
      %v271 = vunpack.c.l.bf16 %v206
      %v272 = vunpack.c.l.bf16 %v207
      %v273 = vunpack.c.l.bf16 %v208
      %v274 = vunpack.c.l.bf16 %v209
      %v275 = vunpack.c.l.bf16 %v210
      %v276 = vunpack.c.l.bf16 %v211
      %v277 = vunpack.c.l.bf16 %v212
      %v278 = vunpack.c.l.bf16 %v213
      %v279 = vunpack.c.l.bf16 %v214
      %v280 = vunpack.c.l.bf16 %v215
      %v281 = vunpack.c.l.bf16 %v216
      %v282 = vunpack.c.l.bf16 %v217
      %v283 = vunpack.c.l.bf16 %v218
      %v284 = vunpack.c.l.bf16 %v219
      %v285 = vunpack.c.l.bf16 %v220
      %v286 = vunpack.c.l.bf16 %v221
      %v287 = vunpack.c.l.bf16 %v222
      %v288 = vunpack.c.l.bf16 %v223
      %v289 = vunpack.c.l.bf16 %v224
      %v290 = vunpack.c.l.bf16 %v225
      %v291 = vunpack.c.l.bf16 %v226
      %v292 = vunpack.c.l.bf16 %v227
      %v293 = vunpack.c.l.bf16 %v228
      %v294 = vunpack.c.l.bf16 %v229
      %v295 = vunpack.c.l.bf16 %v230
      %v296 = vunpack.c.l.bf16 %v231
      %v297 = vunpack.c.l.bf16 %v232
      %v298 = vunpack.c.l.bf16 %v233
      %v299 = vunpack.c.l.bf16 %v234
      %v300 = vunpack.c.l.bf16 %v235
      %v301 = vunpack.c.l.bf16 %v236
      %v302 = vunpack.c.l.bf16 %v237
      %v304 = vperm.slane %v238, 0
      %v306 = vmul.f32 %v239, %v304
      %v307 = vmul.f32 %v240, %v304
      %v308 = vmul.f32 %v241, %v304
      %v309 = vmul.f32 %v242, %v304
      %v310 = vmul.f32 %v243, %v304
      %v311 = vmul.f32 %v244, %v304
      %v312 = vmul.f32 %v245, %v304
      %v313 = vmul.f32 %v246, %v304
      %v314 = vmul.f32 %v247, %v304
      %v315 = vmul.f32 %v248, %v304
      %v316 = vmul.f32 %v249, %v304
      %v317 = vmul.f32 %v250, %v304
      %v318 = vmul.f32 %v251, %v304
      %v319 = vmul.f32 %v252, %v304
      %v320 = vmul.f32 %v253, %v304
      %v321 = vmul.f32 %v254, %v304
      %v322 = vmul.f32 %v255, %v304
      %v323 = vmul.f32 %v256, %v304
      %v324 = vmul.f32 %v257, %v304
      %v325 = vmul.f32 %v258, %v304
      %v326 = vmul.f32 %v259, %v304
      %v327 = vmul.f32 %v260, %v304
      %v328 = vmul.f32 %v261, %v304
      %v329 = vmul.f32 %v262, %v304
      %v330 = vmul.f32 %v263, %v304
      %v331 = vmul.f32 %v264, %v304
      %v332 = vmul.f32 %v265, %v304
      %v333 = vmul.f32 %v266, %v304
      %v334 = vmul.f32 %v267, %v304
      %v335 = vmul.f32 %v268, %v304
      %v336 = vmul.f32 %v269, %v304
      %v337 = vmul.f32 %v270, %v304
      %v338 = vmul.f32 %v271, %v304
      %v339 = vmul.f32 %v272, %v304
      %v340 = vmul.f32 %v273, %v304
      %v341 = vmul.f32 %v274, %v304
      %v342 = vmul.f32 %v275, %v304
      %v343 = vmul.f32 %v276, %v304
      %v344 = vmul.f32 %v277, %v304
      %v345 = vmul.f32 %v278, %v304
      %v346 = vmul.f32 %v279, %v304
      %v347 = vmul.f32 %v280, %v304
      %v348 = vmul.f32 %v281, %v304
      %v349 = vmul.f32 %v282, %v304
      %v350 = vmul.f32 %v283, %v304
      %v351 = vmul.f32 %v284, %v304
      %v352 = vmul.f32 %v285, %v304
      %v353 = vmul.f32 %v286, %v304
      %v354 = vmul.f32 %v287, %v304
      %v355 = vmul.f32 %v288, %v304
      %v356 = vmul.f32 %v289, %v304
      %v357 = vmul.f32 %v290, %v304
      %v358 = vmul.f32 %v291, %v304
      %v359 = vmul.f32 %v292, %v304
      %v360 = vmul.f32 %v293, %v304
      %v361 = vmul.f32 %v294, %v304
      %v362 = vmul.f32 %v295, %v304
      %v363 = vmul.f32 %v296, %v304
      %v364 = vmul.f32 %v297, %v304
      %v365 = vmul.f32 %v298, %v304
      %v366 = vmul.f32 %v299, %v304
      %v367 = vmul.f32 %v300, %v304
      %v368 = vmul.f32 %v301, %v304
      %v369 = vmul.f32 %v302, %v304
      %v370 = vld [vmem:[%s2] sm:$0x1]
      %v372 = vperm.slane %v370, 0
      %v374 = vadd.f32 %v306, %v372
      %v375 = vadd.f32 %v307, %v372
      %v376 = vadd.f32 %v308, %v372
      %v377 = vadd.f32 %v309, %v372
      %v378 = vadd.f32 %v310, %v372
      %v379 = vadd.f32 %v311, %v372
      %v380 = vadd.f32 %v312, %v372
      %v381 = vadd.f32 %v313, %v372
      %v382 = vadd.f32 %v314, %v372
      %v383 = vadd.f32 %v315, %v372
      %v384 = vadd.f32 %v316, %v372
      %v385 = vadd.f32 %v317, %v372
      %v386 = vadd.f32 %v318, %v372
      %v387 = vadd.f32 %v319, %v372
      %v388 = vadd.f32 %v320, %v372
      %v389 = vadd.f32 %v321, %v372
      %v390 = vadd.f32 %v322, %v372
      %v391 = vadd.f32 %v323, %v372
      %v392 = vadd.f32 %v324, %v372
      %v393 = vadd.f32 %v325, %v372
      %v394 = vadd.f32 %v326, %v372
      %v395 = vadd.f32 %v327, %v372
      %v396 = vadd.f32 %v328, %v372
      %v397 = vadd.f32 %v329, %v372
      %v398 = vadd.f32 %v330, %v372
      %v399 = vadd.f32 %v331, %v372
      %v400 = vadd.f32 %v332, %v372
      %v401 = vadd.f32 %v333, %v372
      %v402 = vadd.f32 %v334, %v372
      %v403 = vadd.f32 %v335, %v372
      %v404 = vadd.f32 %v336, %v372
      %v405 = vadd.f32 %v337, %v372
      %v406 = vadd.f32 %v338, %v372
      %v407 = vadd.f32 %v339, %v372
      %v408 = vadd.f32 %v340, %v372
      %v409 = vadd.f32 %v341, %v372
      %v410 = vadd.f32 %v342, %v372
      %v411 = vadd.f32 %v343, %v372
      %v412 = vadd.f32 %v344, %v372
      %v413 = vadd.f32 %v345, %v372
      %v414 = vadd.f32 %v346, %v372
      %v415 = vadd.f32 %v347, %v372
      %v416 = vadd.f32 %v348, %v372
      %v417 = vadd.f32 %v349, %v372
      %v418 = vadd.f32 %v350, %v372
      %v419 = vadd.f32 %v351, %v372
      %v420 = vadd.f32 %v352, %v372
      %v421 = vadd.f32 %v353, %v372
      %v422 = vadd.f32 %v354, %v372
      %v423 = vadd.f32 %v355, %v372
      %v424 = vadd.f32 %v356, %v372
      %v425 = vadd.f32 %v357, %v372
      %v426 = vadd.f32 %v358, %v372
      %v427 = vadd.f32 %v359, %v372
      %v428 = vadd.f32 %v360, %v372
      %v429 = vadd.f32 %v361, %v372
      %v430 = vadd.f32 %v362, %v372
      %v431 = vadd.f32 %v363, %v372
      %v432 = vadd.f32 %v364, %v372
      %v433 = vadd.f32 %v365, %v372
      %v434 = vadd.f32 %v366, %v372
      %v435 = vadd.f32 %v367, %v372
      %v436 = vadd.f32 %v368, %v372
      %v437 = vadd.f32 %v369, %v372
      %v438 = vmax.f32 %v374, 0.0
      %v439 = vmax.f32 %v375, 0.0
      %v440 = vmax.f32 %v376, 0.0
      %v441 = vmax.f32 %v377, 0.0
      %v442 = vmax.f32 %v378, 0.0
      %v443 = vmax.f32 %v379, 0.0
      %v444 = vmax.f32 %v380, 0.0
      %v445 = vmax.f32 %v381, 0.0
      %v446 = vmax.f32 %v382, 0.0
      %v447 = vmax.f32 %v383, 0.0
      %v448 = vmax.f32 %v384, 0.0
      %v449 = vmax.f32 %v385, 0.0
      %v450 = vmax.f32 %v386, 0.0
      %v451 = vmax.f32 %v387, 0.0
      %v452 = vmax.f32 %v388, 0.0
      %v453 = vmax.f32 %v389, 0.0
      %v454 = vmax.f32 %v390, 0.0
      %v455 = vmax.f32 %v391, 0.0
      %v456 = vmax.f32 %v392, 0.0
      %v457 = vmax.f32 %v393, 0.0
      %v458 = vmax.f32 %v394, 0.0
      %v459 = vmax.f32 %v395, 0.0
      %v460 = vmax.f32 %v396, 0.0
      %v461 = vmax.f32 %v397, 0.0
      %v462 = vmax.f32 %v398, 0.0
      %v463 = vmax.f32 %v399, 0.0
      %v464 = vmax.f32 %v400, 0.0
      %v465 = vmax.f32 %v401, 0.0
      %v466 = vmax.f32 %v402, 0.0
      %v467 = vmax.f32 %v403, 0.0
      %v468 = vmax.f32 %v404, 0.0
      %v469 = vmax.f32 %v405, 0.0
      %v470 = vmax.f32 %v406, 0.0
      %v471 = vmax.f32 %v407, 0.0
      %v472 = vmax.f32 %v408, 0.0
      %v473 = vmax.f32 %v409, 0.0
      %v474 = vmax.f32 %v410, 0.0
      %v475 = vmax.f32 %v411, 0.0
      %v476 = vmax.f32 %v412, 0.0
      %v477 = vmax.f32 %v413, 0.0
      %v478 = vmax.f32 %v414, 0.0
      %v479 = vmax.f32 %v415, 0.0
      %v480 = vmax.f32 %v416, 0.0
      %v481 = vmax.f32 %v417, 0.0
      %v482 = vmax.f32 %v418, 0.0
      %v483 = vmax.f32 %v419, 0.0
      %v484 = vmax.f32 %v420, 0.0
      %v485 = vmax.f32 %v421, 0.0
      %v486 = vmax.f32 %v422, 0.0
      %v487 = vmax.f32 %v423, 0.0
      %v488 = vmax.f32 %v424, 0.0
      %v489 = vmax.f32 %v425, 0.0
      %v490 = vmax.f32 %v426, 0.0
      %v491 = vmax.f32 %v427, 0.0
      %v492 = vmax.f32 %v428, 0.0
      %v493 = vmax.f32 %v429, 0.0
      %v494 = vmax.f32 %v430, 0.0
      %v495 = vmax.f32 %v431, 0.0
      %v496 = vmax.f32 %v432, 0.0
      %v497 = vmax.f32 %v433, 0.0
      %v498 = vmax.f32 %v434, 0.0
      %v499 = vmax.f32 %v435, 0.0
      %v500 = vmax.f32 %v436, 0.0
      %v501 = vmax.f32 %v437, 0.0
      %v502 = vpack.c.bf16 %v438, %v438
      %v503 = vpack.c.bf16 %v439, %v439
      %v504 = vpack.c.bf16 %v440, %v440
      %v505 = vpack.c.bf16 %v441, %v441
      %v506 = vpack.c.bf16 %v442, %v442
      %v507 = vpack.c.bf16 %v443, %v443
      %v508 = vpack.c.bf16 %v444, %v444
      %v509 = vpack.c.bf16 %v445, %v445
      %v510 = vpack.c.bf16 %v446, %v446
      %v511 = vpack.c.bf16 %v447, %v447
      %v512 = vpack.c.bf16 %v448, %v448
      %v513 = vpack.c.bf16 %v449, %v449
      %v514 = vpack.c.bf16 %v450, %v450
      %v515 = vpack.c.bf16 %v451, %v451
      %v516 = vpack.c.bf16 %v452, %v452
      %v517 = vpack.c.bf16 %v453, %v453
      %v518 = vpack.c.bf16 %v454, %v454
      %v519 = vpack.c.bf16 %v455, %v455
      %v520 = vpack.c.bf16 %v456, %v456
      %v521 = vpack.c.bf16 %v457, %v457
      %v522 = vpack.c.bf16 %v458, %v458
      %v523 = vpack.c.bf16 %v459, %v459
      %v524 = vpack.c.bf16 %v460, %v460
      %v525 = vpack.c.bf16 %v461, %v461
      %v526 = vpack.c.bf16 %v462, %v462
      %v527 = vpack.c.bf16 %v463, %v463
      %v528 = vpack.c.bf16 %v464, %v464
      %v529 = vpack.c.bf16 %v465, %v465
      %v530 = vpack.c.bf16 %v466, %v466
      %v531 = vpack.c.bf16 %v467, %v467
      %v532 = vpack.c.bf16 %v468, %v468
      %v533 = vpack.c.bf16 %v469, %v469
      %v534 = vpack.c.bf16 %v470, %v470
      %v535 = vpack.c.bf16 %v471, %v471
      %v536 = vpack.c.bf16 %v472, %v472
      %v537 = vpack.c.bf16 %v473, %v473
      %v538 = vpack.c.bf16 %v474, %v474
      %v539 = vpack.c.bf16 %v475, %v475
      %v540 = vpack.c.bf16 %v476, %v476
      %v541 = vpack.c.bf16 %v477, %v477
      %v542 = vpack.c.bf16 %v478, %v478
      %v543 = vpack.c.bf16 %v479, %v479
      %v544 = vpack.c.bf16 %v480, %v480
      %v545 = vpack.c.bf16 %v481, %v481
      %v546 = vpack.c.bf16 %v482, %v482
      %v547 = vpack.c.bf16 %v483, %v483
      %v548 = vpack.c.bf16 %v484, %v484
      %v549 = vpack.c.bf16 %v485, %v485
      %v550 = vpack.c.bf16 %v486, %v486
      %v551 = vpack.c.bf16 %v487, %v487
      %v552 = vpack.c.bf16 %v488, %v488
      %v553 = vpack.c.bf16 %v489, %v489
      %v554 = vpack.c.bf16 %v490, %v490
      %v555 = vpack.c.bf16 %v491, %v491
      %v556 = vpack.c.bf16 %v492, %v492
      %v557 = vpack.c.bf16 %v493, %v493
      %v558 = vpack.c.bf16 %v494, %v494
      %v559 = vpack.c.bf16 %v495, %v495
      %v560 = vpack.c.bf16 %v496, %v496
      %v561 = vpack.c.bf16 %v497, %v497
      %v562 = vpack.c.bf16 %v498, %v498
      %v563 = vpack.c.bf16 %v499, %v499
      %v564 = vpack.c.bf16 %v500, %v500
      %v565 = vpack.c.bf16 %v501, %v501
      %566 = vst [vmem:[%s172] sm:$0xf] %v502
      %567 = vst [vmem:[%s172 + $0x4] sm:$0xf] %v503
      %568 = vst [vmem:[%s172 + $0x8] sm:$0xf] %v504
      %569 = vst [vmem:[%s172 + $0xc] sm:$0xf] %v505
      %570 = vst [vmem:[%s172 + $0x10] sm:$0xf] %v506
      %571 = vst [vmem:[%s172 + $0x14] sm:$0xf] %v507
      %572 = vst [vmem:[%s172 + $0x18] sm:$0xf] %v508
      %573 = vst [vmem:[%s172 + $0x1c] sm:$0xf] %v509
      %574 = vst [vmem:[%s172 + $0x20] sm:$0xf] %v510
      %575 = vst [vmem:[%s172 + $0x24] sm:$0xf] %v511
      %576 = vst [vmem:[%s172 + $0x28] sm:$0xf] %v512
      %577 = vst [vmem:[%s172 + $0x2c] sm:$0xf] %v513
      %578 = vst [vmem:[%s172 + $0x30] sm:$0xf] %v514
      %579 = vst [vmem:[%s172 + $0x34] sm:$0xf] %v515
      %580 = vst [vmem:[%s172 + $0x38] sm:$0xf] %v516
      %581 = vst [vmem:[%s172 + $0x3c] sm:$0xf] %v517
      %582 = vst [vmem:[%s172 + $0x40] sm:$0xf] %v518
      %583 = vst [vmem:[%s172 + $0x44] sm:$0xf] %v519
      %584 = vst [vmem:[%s172 + $0x48] sm:$0xf] %v520
      %585 = vst [vmem:[%s172 + $0x4c] sm:$0xf] %v521
      %586 = vst [vmem:[%s172 + $0x50] sm:$0xf] %v522
      %587 = vst [vmem:[%s172 + $0x54] sm:$0xf] %v523
      %588 = vst [vmem:[%s172 + $0x58] sm:$0xf] %v524
      %589 = vst [vmem:[%s172 + $0x5c] sm:$0xf] %v525
      %590 = vst [vmem:[%s172 + $0x60] sm:$0xf] %v526
      %591 = vst [vmem:[%s172 + $0x64] sm:$0xf] %v527
      %592 = vst [vmem:[%s172 + $0x68] sm:$0xf] %v528
      %593 = vst [vmem:[%s172 + $0x6c] sm:$0xf] %v529
      %594 = vst [vmem:[%s172 + $0x70] sm:$0xf] %v530
      %595 = vst [vmem:[%s172 + $0x74] sm:$0xf] %v531
      %596 = vst [vmem:[%s172 + $0x78] sm:$0xf] %v532
      %597 = vst [vmem:[%s172 + $0x7c] sm:$0xf] %v533
      %598 = vst [vmem:[%s172 + $0x80] sm:$0xf] %v534
      %599 = vst [vmem:[%s172 + $0x84] sm:$0xf] %v535
      %600 = vst [vmem:[%s172 + $0x88] sm:$0xf] %v536
      %601 = vst [vmem:[%s172 + $0x8c] sm:$0xf] %v537
      %602 = vst [vmem:[%s172 + $0x90] sm:$0xf] %v538
      %603 = vst [vmem:[%s172 + $0x94] sm:$0xf] %v539
      %604 = vst [vmem:[%s172 + $0x98] sm:$0xf] %v540
      %605 = vst [vmem:[%s172 + $0x9c] sm:$0xf] %v541
      %606 = vst [vmem:[%s172 + $0xa0] sm:$0xf] %v542
      %607 = vst [vmem:[%s172 + $0xa4] sm:$0xf] %v543
      %608 = vst [vmem:[%s172 + $0xa8] sm:$0xf] %v544
      %609 = vst [vmem:[%s172 + $0xac] sm:$0xf] %v545
      %610 = vst [vmem:[%s172 + $0xb0] sm:$0xf] %v546
      %611 = vst [vmem:[%s172 + $0xb4] sm:$0xf] %v547
      %612 = vst [vmem:[%s172 + $0xb8] sm:$0xf] %v548
      %613 = vst [vmem:[%s172 + $0xbc] sm:$0xf] %v549
      %614 = vst [vmem:[%s172 + $0xc0] sm:$0xf] %v550
      %615 = vst [vmem:[%s172 + $0xc4] sm:$0xf] %v551
      %616 = vst [vmem:[%s172 + $0xc8] sm:$0xf] %v552
      %617 = vst [vmem:[%s172 + $0xcc] sm:$0xf] %v553
      %618 = vst [vmem:[%s172 + $0xd0] sm:$0xf] %v554
      %619 = vst [vmem:[%s172 + $0xd4] sm:$0xf] %v555
      %620 = vst [vmem:[%s172 + $0xd8] sm:$0xf] %v556
      %621 = vst [vmem:[%s172 + $0xdc] sm:$0xf] %v557
      %622 = vst [vmem:[%s172 + $0xe0] sm:$0xf] %v558
      %623 = vst [vmem:[%s172 + $0xe4] sm:$0xf] %v559
      %624 = vst [vmem:[%s172 + $0xe8] sm:$0xf] %v560
      %625 = vst [vmem:[%s172 + $0xec] sm:$0xf] %v561
      %626 = vst [vmem:[%s172 + $0xf0] sm:$0xf] %v562
      %627 = vst [vmem:[%s172 + $0xf4] sm:$0xf] %v563
      %628 = vst [vmem:[%s172 + $0xf8] sm:$0xf] %v564
      %629 = vst [vmem:[%s172 + $0xfc] sm:$0xf] %v565
      %s630 = smul.u32 64, %s14
      %p631 = scmp.lt.s32.totalorder %s630, 127
      %s632 = scalar_select %p631, %s630, 127
      %s633 = smul.addr %s632, 4
      %s634 = scalar_lea.vmem %s3, %s633
      // Predicated region
      $region33: #{double_conv_up.5} parent=31 // pred_check
        %p635 = pneg %p100
      $region34: #{double_conv_up.5} parent=31 // pred_check_branch
        %637 = sbr.rel (%p635) target = $region36
      $region35: #{double_conv_up.5} parent=31 // pred_region
        %s638 = smul.u32 64, %s14
      $region36: #{double_conv_up.5} parent=31 // pred_fallthru
        _
    $region32: #{double_conv_up.5} parent=5 // pred_fallthru
      _
    %p639 = scmp.le.s32.totalorder 2, %s9
    // Predicated region
    $region37: #{double_conv_up.5} parent=5 // pred_check
      %p640 = pneg %p639
    $region38: #{double_conv_up.5} parent=5 // pred_check_branch
      %642 = sbr.rel (%p640) target = $region40
    $region39: #{double_conv_up.5} parent=5 // pred_region
      %s643 = ssub.s32 %s9, 2
      // Predicated region
      $region41: #{double_conv_up.5} parent=39 // pred_check
        %p644 = pneg %p106
      $region42: #{double_conv_up.5} parent=39 // pred_check_branch
        %646 = sbr.rel (%p644) target = $region44
      $region43: #{double_conv_up.5} parent=39 // pred_region
        %s647 = smul.u32 64, %s15
        %p648 = scmp.lt.s32.totalorder %s647, 127
        %s649 = scalar_select %p648, %s647, 127
        %s650 = smul.addr %s649, 4
        %s651 = scalar_lea.vmem %s3, %s650
      $region44: #{double_conv_up.5} parent=39 // pred_fallthru
        _
    $region40: #{double_conv_up.5} parent=5 // pred_fallthru
      _
  $region6: #{double_conv_up.5} parent=0 // loop_footer
    %s13 = sadd.s32 1, %s9
  $region7: #{double_conv_up.5} parent=0 // loop_footer_branch
    %8 = sbr.rel target = $region3
  $region8: #{double_conv_up.5} parent=0 // loop_exit
    _

// kernel: double_conv_up.6
$region0: #{double_conv_up.6}
  #allocation0 [shape = 'u32[]', space=smem, size = 0x4, offset = 0x4, fixed_abs, tag = 'smem constant byte address 0x4 - core index']
  #allocation1 [shape = 'u32[72,128]{1,0:T(1,128)}', space=vmem, size = 0x9000, scoped, tag = 'internal scratch']
  %s0 = inlined_call_operand.vmem [shape: bf16[1024,256], index: 0, kind: input, shape index: {}]
  %s1 = inlined_call_operand.vmem [shape: bf16[256,128], index: 1, kind: input, shape index: {}]
  %s2 = inlined_call_operand.vmem [shape: bf16[1024,128], index: 2, kind: output, shape index: {0}]
  %s3 = inlined_call_operand.vmem [shape: f32[16,128], index: 3, kind: output, shape index: {1}]
  %4 = xla_tuple %s2, %s3
  %s5 = sld [smem:[#allocation0]]
  $region49: #{double_conv_up.6} parent=0
    _
  %s7 = ssub.s32 1, %s5
  %s8 = scalar_select 0, %s7, %s5
  loop: start=0, step=1, limit=4
  $region2: #{double_conv_up.6} parent=0 // loop_pre_header
    _
  $region3: #{double_conv_up.6} parent=0 // loop_header
    %s10 = sphi 0, %s14
    %p11 = scmp.ge.s32.totalorder %s10, 4
    %s20 = sphi 0, %s22
    %s23 = sphi 0, %s20
    %s24 = sphi 0, %s23
    %s40 = sphi 0, %s24
    %s44 = sphi 0, %s44
    %s46 = sphi 0, %s44
    %s47 = sphi 0, %s46
    %s61 = sphi 0, %s47
    %s67 = sphi 0, %s69
    %s70 = sphi 0, %s67
    %s71 = sphi 0, %s70
    %s87 = sphi 0, %s71
    %s93 = sphi 0, %s95
    %s96 = sphi 0, %s93
    %s97 = sphi 0, %s96
    %s113 = sphi 0, %s97
  $region4: #{double_conv_up.6} parent=0 // loop_header_branch
    %13 = sbr.rel (%p11) target = $region8
  $region5: #{double_conv_up.6} parent=0 // loop_body
    %s15 = ssub.s32 %s10, 1
    %s16 = ssub.s32 %s10, 2
    %s17 = sadd.s32 %s10, 1
    %s18 = ssub.s32 %s10, %s17
    %p19 = scmp.eq.s32.totalorder %s18, 0
    %s21 = sadd.s32 %s20, 1
    %s22 = scalar_select %p19, %s20, %s21
    %p25 = pneg %p19
    %p26 = scmp.eq.s32.totalorder %s10, 1
    %p27 = por %p25, %p26
    %p28 = scmp.ne.s32.totalorder %s20, %s23
    %p29 = scmp.eq.s32.totalorder %s10, 0
    %p30 = por %p28, %p29
    %p31 = scmp.ne.s32.totalorder %s20, %s23
    %p32 = scmp.eq.s32.totalorder %s15, 1
    %p33 = por %p31, %p32
    %p34 = scmp.ne.s32.totalorder %s23, %s24
    %p35 = scmp.eq.s32.totalorder %s15, 0
    %p36 = por %p34, %p35
    %p37 = scmp.ne.s32.totalorder %s23, %s24
    %p38 = scmp.eq.s32.totalorder %s16, 1
    %p39 = por %p37, %p38
    %p41 = scmp.ne.s32.totalorder %s24, %s40
    %p42 = scmp.eq.s32.totalorder %s16, 0
    %p43 = por %p41, %p42
    %s45 = sadd.s32 %s44, 1
    %p48 = scmp.eq.s32.totalorder %s10, 1
    %p49 = scmp.ne.s32.totalorder %s44, %s46
    %p50 = scmp.eq.s32.totalorder %s10, 0
    %p51 = por %p49, %p50
    %p52 = scmp.ne.s32.totalorder %s44, %s46
    %p53 = scmp.eq.s32.totalorder %s15, 1
    %p54 = por %p52, %p53
    %p55 = scmp.ne.s32.totalorder %s46, %s47
    %p56 = scmp.eq.s32.totalorder %s15, 0
    %p57 = por %p55, %p56
    %p58 = scmp.ne.s32.totalorder %s46, %s47
    %p59 = scmp.eq.s32.totalorder %s16, 1
    %p60 = por %p58, %p59
    %p62 = scmp.ne.s32.totalorder %s47, %s61
    %p63 = scmp.eq.s32.totalorder %s16, 0
    %p64 = por %p62, %p63
    %s65 = ssub.s32 %s10, %s17
    %p66 = scmp.eq.s32.totalorder %s65, 0
    %s68 = sadd.s32 %s67, 1
    %s69 = scalar_select %p66, %s67, %s68
    %p72 = pneg %p66
    %p73 = scmp.eq.s32.totalorder %s10, 1
    %p74 = por %p72, %p73
    %p75 = scmp.ne.s32.totalorder %s67, %s70
    %p76 = scmp.eq.s32.totalorder %s10, 0
    %p77 = por %p75, %p76
    %p78 = scmp.ne.s32.totalorder %s67, %s70
    %p79 = scmp.eq.s32.totalorder %s15, 1
    %p80 = por %p78, %p79
    %p81 = scmp.ne.s32.totalorder %s70, %s71
    %p82 = scmp.eq.s32.totalorder %s15, 0
    %p83 = por %p81, %p82
    %p84 = scmp.ne.s32.totalorder %s70, %s71
    %p85 = scmp.eq.s32.totalorder %s16, 1
    %p86 = por %p84, %p85
    %p88 = scmp.ne.s32.totalorder %s71, %s87
    %p89 = scmp.eq.s32.totalorder %s16, 0
    %p90 = por %p88, %p89
    %s91 = ssub.s32 %s10, %s17
    %p92 = scmp.eq.s32.totalorder %s91, 0
    %s94 = sadd.s32 %s93, 1
    %s95 = scalar_select %p92, %s93, %s94
    %p98 = pneg %p92
    %p99 = scmp.eq.s32.totalorder %s10, 1
    %p100 = por %p98, %p99
    %p101 = scmp.ne.s32.totalorder %s93, %s96
    %p102 = scmp.eq.s32.totalorder %s10, 0
    %p103 = por %p101, %p102
    %p104 = scmp.ne.s32.totalorder %s93, %s96
    %p105 = scmp.eq.s32.totalorder %s15, 1
    %p106 = por %p104, %p105
    %p107 = scmp.ne.s32.totalorder %s96, %s97
    %p108 = scmp.eq.s32.totalorder %s15, 0
    %p109 = por %p107, %p108
    %p110 = scmp.ne.s32.totalorder %s96, %s97
    %p111 = scmp.eq.s32.totalorder %s16, 1
    %p112 = por %p110, %p111
    %p114 = scmp.ne.s32.totalorder %s97, %s113
    %p115 = scmp.eq.s32.totalorder %s16, 0
    %p116 = por %p114, %p115
    %p117 = scmp.le.s32.totalorder 1, %s10
    %p118 = scmp.lt.s32.totalorder %s10, 3
    %p119 = pnand %p117, %p118
    %p120 = pneg %p119
    // Predicated region
    $region9: #{double_conv_up.6} parent=5 // pred_check
      _
    $region10: #{double_conv_up.6} parent=5 // pred_check_branch
      %122 = sbr.rel (%p119) target = $region12
    $region11: #{double_conv_up.6} parent=5 // pred_region
      %s123 = ssub.s32 %s10, 1
      // Predicated region
      $region13: #{double_conv_up.6} parent=11 // pred_check
        %p124 = pneg %p57
      $region14: #{double_conv_up.6} parent=11 // pred_check_branch
        %126 = sbr.rel (%p124) target = $region16
      $region15: #{double_conv_up.6} parent=11 // pred_region
        _
      $region16: #{double_conv_up.6} parent=11 // pred_fallthru
        _
    $region12: #{double_conv_up.6} parent=5 // pred_fallthru
      _
    %p127 = scmp.lt.s32.totalorder %s10, 2
    // Predicated region
    $region17: #{double_conv_up.6} parent=5 // pred_check
      %p128 = pneg %p127
    $region18: #{double_conv_up.6} parent=5 // pred_check_branch
      %130 = sbr.rel (%p128) target = $region20
    $region19: #{double_conv_up.6} parent=5 // pred_region
      // Predicated region
      $region21: #{double_conv_up.6} parent=19 // pred_check
        %p131 = pneg %p30
      $region22: #{double_conv_up.6} parent=19 // pred_check_branch
        %133 = sbr.rel (%p131) target = $region24
      $region23: #{double_conv_up.6} parent=19 // pred_region
        %s134 = smul.u32 64, %s10
        %p135 = scmp.lt.s32.totalorder %s134, 127
        %s136 = scalar_select %p135, %s134, 127
        %s137 = smul.addr %s136, 2
        %s138 = smul.addr %s137, 4
        %s139 = scalar_lea.vmem %s0, %s138
        %s140 = smul.u32 64, %s10
      $region24: #{double_conv_up.6} parent=19 // pred_fallthru
        _
    $region20: #{double_conv_up.6} parent=5 // pred_fallthru
      _
    %p141 = scmp.le.s32.totalorder 1, %s10
    %p142 = scmp.lt.s32.totalorder %s10, 3
    %p143 = pnand %p141, %p142
    %p144 = pneg %p143
    // Predicated region
    $region25: #{double_conv_up.6} parent=5 // pred_check
      _
    $region26: #{double_conv_up.6} parent=5 // pred_check_branch
      %146 = sbr.rel (%p143) target = $region28
    $region27: #{double_conv_up.6} parent=5 // pred_region
      %s147 = ssub.s32 %s10, 1
      %s148 = smul.u32 64, %s15
      %p149 = scmp.lt.s32.totalorder %s148, 127
      %s150 = scalar_select %p149, %s148, 127
      %s151 = smul.addr %s150, 2
      %s152 = smul.addr %s151, 4
      %s153 = scalar_lea.vmem %s0, %s152
      %p154 = pneg %p36
      %p155 = pneg %p33
      %p156 = pneg %p57
      %p157 = pneg %p54
      %p158 = pneg %p83
      %p159 = pneg %p80
      %s160 = smul.u32 64, %s15
      %p161 = scmp.lt.s32.totalorder %s160, 127
      %s162 = scalar_select %p161, %s160, 127
      %s163 = smul.addr %s162, 4
      %s164 = scalar_lea.vmem %s2, %s163
      %p165 = pneg %p109
      %p166 = pneg %p106
      %p167 = scmp.lt.s32.totalorder %s15, 1
      %s168 = scalar_select %p167, %s15, 1
      %s169 = smul.addr %s168, 8
      %s170 = scalar_lea.vmem %s3, %s169
      %s171 = smul.u32 64, %s15
      %p172 = scmp.lt.s32.totalorder %s171, 127
      %s173 = scalar_select %p172, %s171, 127
      %s174 = smul.addr %s173, 2
      %s175 = smul.addr %s174, 4
      %s176 = scalar_lea.vmem %s0, %s175
      %s177 = smul.u32 64, %s15
      %s178 = smul.u32 64, %s15
      %p179 = scmp.lt.s32.totalorder %s178, 127
      %s180 = scalar_select %p179, %s178, 127
      %s181 = smul.addr %s180, 4
      %s182 = scalar_lea.vmem %s2, %s181
      %s183 = smul.u32 64, %s15
      %p184 = scmp.lt.s32.totalorder %s15, 1
      %s185 = scalar_select %p184, %s15, 1
      %s186 = smul.addr %s185, 8
      %s187 = scalar_lea.vmem %s3, %s186
      %v188 = vld [vmem:[%s176] sm:$0xff]
      %v189 = vld [vmem:[%s176 + $0x8] sm:$0xff]
      %v190 = vld [vmem:[%s176 + $0x10] sm:$0xff]
      %v191 = vld [vmem:[%s176 + $0x18] sm:$0xff]
      %v192 = vld [vmem:[%s176 + $0x20] sm:$0xff]
      %v193 = vld [vmem:[%s176 + $0x28] sm:$0xff]
      %v194 = vld [vmem:[%s176 + $0x30] sm:$0xff]
      %v195 = vld [vmem:[%s176 + $0x38] sm:$0xff]
      %v196 = vld [vmem:[%s176 + $0x40] sm:$0xff]
      %v197 = vld [vmem:[%s176 + $0x48] sm:$0xff]
      %v198 = vld [vmem:[%s176 + $0x50] sm:$0xff]
      %v199 = vld [vmem:[%s176 + $0x58] sm:$0xff]
      %v200 = vld [vmem:[%s176 + $0x60] sm:$0xff]
      %v201 = vld [vmem:[%s176 + $0x68] sm:$0xff]
      %v202 = vld [vmem:[%s176 + $0x70] sm:$0xff]
      %v203 = vld [vmem:[%s176 + $0x78] sm:$0xff]
      %v204 = vld [vmem:[%s176 + $0x80] sm:$0xff]
      %v205 = vld [vmem:[%s176 + $0x88] sm:$0xff]
      %v206 = vld [vmem:[%s176 + $0x90] sm:$0xff]
      %v207 = vld [vmem:[%s176 + $0x98] sm:$0xff]
      %v208 = vld [vmem:[%s176 + $0xa0] sm:$0xff]
      %v209 = vld [vmem:[%s176 + $0xa8] sm:$0xff]
      %v210 = vld [vmem:[%s176 + $0xb0] sm:$0xff]
      %v211 = vld [vmem:[%s176 + $0xb8] sm:$0xff]
      %v212 = vld [vmem:[%s176 + $0xc0] sm:$0xff]
      %v213 = vld [vmem:[%s176 + $0xc8] sm:$0xff]
      %v214 = vld [vmem:[%s176 + $0xd0] sm:$0xff]
      %v215 = vld [vmem:[%s176 + $0xd8] sm:$0xff]
      %v216 = vld [vmem:[%s176 + $0xe0] sm:$0xff]
      %v217 = vld [vmem:[%s176 + $0xe8] sm:$0xff]
      %v218 = vld [vmem:[%s176 + $0xf0] sm:$0xff]
      %v219 = vld [vmem:[%s176 + $0xf8] sm:$0xff]
      %v220 = vld [vmem:[%s176 + $0x100] sm:$0xff]
      %v221 = vld [vmem:[%s176 + $0x108] sm:$0xff]
      %v222 = vld [vmem:[%s176 + $0x110] sm:$0xff]
      %v223 = vld [vmem:[%s176 + $0x118] sm:$0xff]
      %v224 = vld [vmem:[%s176 + $0x120] sm:$0xff]
      %v225 = vld [vmem:[%s176 + $0x128] sm:$0xff]
      %v226 = vld [vmem:[%s176 + $0x130] sm:$0xff]
      %v227 = vld [vmem:[%s176 + $0x138] sm:$0xff]
      %v228 = vld [vmem:[%s176 + $0x140] sm:$0xff]
      %v229 = vld [vmem:[%s176 + $0x148] sm:$0xff]
      %v230 = vld [vmem:[%s176 + $0x150] sm:$0xff]
      %v231 = vld [vmem:[%s176 + $0x158] sm:$0xff]
      %v232 = vld [vmem:[%s176 + $0x160] sm:$0xff]
      %v233 = vld [vmem:[%s176 + $0x168] sm:$0xff]
      %v234 = vld [vmem:[%s176 + $0x170] sm:$0xff]
      %v235 = vld [vmem:[%s176 + $0x178] sm:$0xff]
      %v236 = vld [vmem:[%s176 + $0x180] sm:$0xff]
      %v237 = vld [vmem:[%s176 + $0x188] sm:$0xff]
      %v238 = vld [vmem:[%s176 + $0x190] sm:$0xff]
      %v239 = vld [vmem:[%s176 + $0x198] sm:$0xff]
      %v240 = vld [vmem:[%s176 + $0x1a0] sm:$0xff]
      %v241 = vld [vmem:[%s176 + $0x1a8] sm:$0xff]
      %v242 = vld [vmem:[%s176 + $0x1b0] sm:$0xff]
      %v243 = vld [vmem:[%s176 + $0x1b8] sm:$0xff]
      %v244 = vld [vmem:[%s176 + $0x1c0] sm:$0xff]
      %v245 = vld [vmem:[%s176 + $0x1c8] sm:$0xff]
      %v246 = vld [vmem:[%s176 + $0x1d0] sm:$0xff]
      %v247 = vld [vmem:[%s176 + $0x1d8] sm:$0xff]
      %v248 = vld [vmem:[%s176 + $0x1e0] sm:$0xff]
      %v249 = vld [vmem:[%s176 + $0x1e8] sm:$0xff]
      %v250 = vld [vmem:[%s176 + $0x1f0] sm:$0xff]
      %v251 = vld [vmem:[%s176 + $0x1f8] sm:$0xff]
      %v252 = vld [vmem:[%s1] sm:$0xf]
      %v253 = vld [vmem:[%s1 + $0x4] sm:$0xf]
      %v254 = vld [vmem:[%s1 + $0x8] sm:$0xf]
      %v255 = vld [vmem:[%s1 + $0xc] sm:$0xf]
      %v256 = vld [vmem:[%s1 + $0x10] sm:$0xf]
      %v257 = vld [vmem:[%s1 + $0x14] sm:$0xf]
      %v258 = vld [vmem:[%s1 + $0x18] sm:$0xf]
      %v259 = vld [vmem:[%s1 + $0x1c] sm:$0xf]
      %v260 = vld [vmem:[%s1 + $0x20] sm:$0xf]
      %v261 = vld [vmem:[%s1 + $0x24] sm:$0xf]
      %v262 = vld [vmem:[%s1 + $0x28] sm:$0xf]
      %v263 = vld [vmem:[%s1 + $0x2c] sm:$0xf]
      %v264 = vld [vmem:[%s1 + $0x30] sm:$0xf]
      %v265 = vld [vmem:[%s1 + $0x34] sm:$0xf]
      %v266 = vld [vmem:[%s1 + $0x38] sm:$0xf]
      %v267 = vld [vmem:[%s1 + $0x3c] sm:$0xf]
      %v268 = vld [vmem:[%s1 + $0x40] sm:$0xf]
      %v269 = vld [vmem:[%s1 + $0x44] sm:$0xf]
      %v270 = vld [vmem:[%s1 + $0x48] sm:$0xf]
      %v271 = vld [vmem:[%s1 + $0x4c] sm:$0xf]
      %v272 = vld [vmem:[%s1 + $0x50] sm:$0xf]
      %v273 = vld [vmem:[%s1 + $0x54] sm:$0xf]
      %v274 = vld [vmem:[%s1 + $0x58] sm:$0xf]
      %v275 = vld [vmem:[%s1 + $0x5c] sm:$0xf]
      %v276 = vld [vmem:[%s1 + $0x60] sm:$0xf]
      %v277 = vld [vmem:[%s1 + $0x64] sm:$0xf]
      %v278 = vld [vmem:[%s1 + $0x68] sm:$0xf]
      %v279 = vld [vmem:[%s1 + $0x6c] sm:$0xf]
      %v280 = vld [vmem:[%s1 + $0x70] sm:$0xf]
      %v281 = vld [vmem:[%s1 + $0x74] sm:$0xf]
      %v282 = vld [vmem:[%s1 + $0x78] sm:$0xf]
      %v283 = vld [vmem:[%s1 + $0x7c] sm:$0xf]
      %v348 = vunpack.c.l.b16 %v188
      %v349 = vunpack.c.h.b16 %v188
      %v350 = vunpack.c.l.b16 %v189
      %v351 = vunpack.c.h.b16 %v189
      %v352 = vunpack.c.l.b16 %v190
      %v353 = vunpack.c.h.b16 %v190
      %v354 = vunpack.c.l.b16 %v191
      %v355 = vunpack.c.h.b16 %v191
      %v356 = vunpack.c.l.b16 %v192
      %v357 = vunpack.c.h.b16 %v192
      %v358 = vunpack.c.l.b16 %v193
      %v359 = vunpack.c.h.b16 %v193
      %v360 = vunpack.c.l.b16 %v194
      %v361 = vunpack.c.h.b16 %v194
      %v362 = vunpack.c.l.b16 %v195
      %v363 = vunpack.c.h.b16 %v195
      %v364 = vunpack.c.l.b16 %v196
      %v365 = vunpack.c.h.b16 %v196
      %v366 = vunpack.c.l.b16 %v197
      %v367 = vunpack.c.h.b16 %v197
      %v368 = vunpack.c.l.b16 %v198
      %v369 = vunpack.c.h.b16 %v198
      %v370 = vunpack.c.l.b16 %v199
      %v371 = vunpack.c.h.b16 %v199
      %v372 = vunpack.c.l.b16 %v200
      %v373 = vunpack.c.h.b16 %v200
      %v374 = vunpack.c.l.b16 %v201
      %v375 = vunpack.c.h.b16 %v201
      %v376 = vunpack.c.l.b16 %v202
      %v377 = vunpack.c.h.b16 %v202
      %v378 = vunpack.c.l.b16 %v203
      %v379 = vunpack.c.h.b16 %v203
      %v380 = vunpack.c.l.b16 %v204
      %v381 = vunpack.c.h.b16 %v204
      %v382 = vunpack.c.l.b16 %v205
      %v383 = vunpack.c.h.b16 %v205
      %v384 = vunpack.c.l.b16 %v206
      %v385 = vunpack.c.h.b16 %v206
      %v386 = vunpack.c.l.b16 %v207
      %v387 = vunpack.c.h.b16 %v207
      %v388 = vunpack.c.l.b16 %v208
      %v389 = vunpack.c.h.b16 %v208
      %v390 = vunpack.c.l.b16 %v209
      %v391 = vunpack.c.h.b16 %v209
      %v392 = vunpack.c.l.b16 %v210
      %v393 = vunpack.c.h.b16 %v210
      %v394 = vunpack.c.l.b16 %v211
      %v395 = vunpack.c.h.b16 %v211
      %v396 = vunpack.c.l.b16 %v212
      %v397 = vunpack.c.h.b16 %v212
      %v398 = vunpack.c.l.b16 %v213
      %v399 = vunpack.c.h.b16 %v213
      %v400 = vunpack.c.l.b16 %v214
      %v401 = vunpack.c.h.b16 %v214
      %v402 = vunpack.c.l.b16 %v215
      %v403 = vunpack.c.h.b16 %v215
      %v404 = vunpack.c.l.b16 %v216
      %v405 = vunpack.c.h.b16 %v216
      %v406 = vunpack.c.l.b16 %v217
      %v407 = vunpack.c.h.b16 %v217
      %v408 = vunpack.c.l.b16 %v218
      %v409 = vunpack.c.h.b16 %v218
      %v410 = vunpack.c.l.b16 %v219
      %v411 = vunpack.c.h.b16 %v219
      %v412 = vunpack.c.l.b16 %v220
      %v413 = vunpack.c.h.b16 %v220
      %v414 = vunpack.c.l.b16 %v221
      %v415 = vunpack.c.h.b16 %v221
      %v416 = vunpack.c.l.b16 %v222
      %v417 = vunpack.c.h.b16 %v222
      %v418 = vunpack.c.l.b16 %v223
      %v419 = vunpack.c.h.b16 %v223
      %v420 = vunpack.c.l.b16 %v224
      %v421 = vunpack.c.h.b16 %v224
      %v422 = vunpack.c.l.b16 %v225
      %v423 = vunpack.c.h.b16 %v225
      %v424 = vunpack.c.l.b16 %v226
      %v425 = vunpack.c.h.b16 %v226
      %v426 = vunpack.c.l.b16 %v227
      %v427 = vunpack.c.h.b16 %v227
      %v428 = vunpack.c.l.b16 %v228
      %v429 = vunpack.c.h.b16 %v228
      %v430 = vunpack.c.l.b16 %v229
      %v431 = vunpack.c.h.b16 %v229
      %v432 = vunpack.c.l.b16 %v230
      %v433 = vunpack.c.h.b16 %v230
      %v434 = vunpack.c.l.b16 %v231
      %v435 = vunpack.c.h.b16 %v231
      %v436 = vunpack.c.l.b16 %v232
      %v437 = vunpack.c.h.b16 %v232
      %v438 = vunpack.c.l.b16 %v233
      %v439 = vunpack.c.h.b16 %v233
      %v440 = vunpack.c.l.b16 %v234
      %v441 = vunpack.c.h.b16 %v234
      %v442 = vunpack.c.l.b16 %v235
      %v443 = vunpack.c.h.b16 %v235
      %v444 = vunpack.c.l.b16 %v236
      %v445 = vunpack.c.h.b16 %v236
      %v446 = vunpack.c.l.b16 %v237
      %v447 = vunpack.c.h.b16 %v237
      %v448 = vunpack.c.l.b16 %v238
      %v449 = vunpack.c.h.b16 %v238
      %v450 = vunpack.c.l.b16 %v239
      %v451 = vunpack.c.h.b16 %v239
      %v452 = vunpack.c.l.b16 %v240
      %v453 = vunpack.c.h.b16 %v240
      %v454 = vunpack.c.l.b16 %v241
      %v455 = vunpack.c.h.b16 %v241
      %v456 = vunpack.c.l.b16 %v242
      %v457 = vunpack.c.h.b16 %v242
      %v458 = vunpack.c.l.b16 %v243
      %v459 = vunpack.c.h.b16 %v243
      %v460 = vunpack.c.l.b16 %v244
      %v461 = vunpack.c.h.b16 %v244
      %v462 = vunpack.c.l.b16 %v245
      %v463 = vunpack.c.h.b16 %v245
      %v464 = vunpack.c.l.b16 %v246
      %v465 = vunpack.c.h.b16 %v246
      %v466 = vunpack.c.l.b16 %v247
      %v467 = vunpack.c.h.b16 %v247
      %v468 = vunpack.c.l.b16 %v248
      %v469 = vunpack.c.h.b16 %v248
      %v470 = vunpack.c.l.b16 %v249
      %v471 = vunpack.c.h.b16 %v249
      %v472 = vunpack.c.l.b16 %v250
      %v473 = vunpack.c.h.b16 %v250
      %v474 = vunpack.c.l.b16 %v251
      %v475 = vunpack.c.h.b16 %v251
      %v476 = vpack.c.b16 %v350, %v348
      %v477 = vpack.c.b16 %v351, %v349
      %v478 = vpack.c.b16 %v354, %v352
      %v479 = vpack.c.b16 %v355, %v353
      %v480 = vpack.c.b16 %v358, %v356
      %v481 = vpack.c.b16 %v359, %v357
      %v482 = vpack.c.b16 %v362, %v360
      %v483 = vpack.c.b16 %v363, %v361
      %v484 = vpack.c.b16 %v366, %v364
      %v485 = vpack.c.b16 %v367, %v365
      %v486 = vpack.c.b16 %v370, %v368
      %v487 = vpack.c.b16 %v371, %v369
      %v488 = vpack.c.b16 %v374, %v372
      %v489 = vpack.c.b16 %v375, %v373
      %v490 = vpack.c.b16 %v378, %v376
      %v491 = vpack.c.b16 %v379, %v377
      %v492 = vpack.c.b16 %v382, %v380
      %v493 = vpack.c.b16 %v383, %v381
      %v494 = vpack.c.b16 %v386, %v384
      %v495 = vpack.c.b16 %v387, %v385
      %v496 = vpack.c.b16 %v390, %v388
      %v497 = vpack.c.b16 %v391, %v389
      %v498 = vpack.c.b16 %v394, %v392
      %v499 = vpack.c.b16 %v395, %v393
      %v500 = vpack.c.b16 %v398, %v396
      %v501 = vpack.c.b16 %v399, %v397
      %v502 = vpack.c.b16 %v402, %v400
      %v503 = vpack.c.b16 %v403, %v401
      %v504 = vpack.c.b16 %v406, %v404
      %v505 = vpack.c.b16 %v407, %v405
      %v506 = vpack.c.b16 %v410, %v408
      %v507 = vpack.c.b16 %v411, %v409
      %v508 = vpack.c.b16 %v414, %v412
      %v509 = vpack.c.b16 %v415, %v413
      %v510 = vpack.c.b16 %v418, %v416
      %v511 = vpack.c.b16 %v419, %v417
      %v512 = vpack.c.b16 %v422, %v420
      %v513 = vpack.c.b16 %v423, %v421
      %v514 = vpack.c.b16 %v426, %v424
      %v515 = vpack.c.b16 %v427, %v425
      %v516 = vpack.c.b16 %v430, %v428
      %v517 = vpack.c.b16 %v431, %v429
      %v518 = vpack.c.b16 %v434, %v432
      %v519 = vpack.c.b16 %v435, %v433
      %v520 = vpack.c.b16 %v438, %v436
      %v521 = vpack.c.b16 %v439, %v437
      %v522 = vpack.c.b16 %v442, %v440
      %v523 = vpack.c.b16 %v443, %v441
      %v524 = vpack.c.b16 %v446, %v444
      %v525 = vpack.c.b16 %v447, %v445
      %v526 = vpack.c.b16 %v450, %v448
      %v527 = vpack.c.b16 %v451, %v449
      %v528 = vpack.c.b16 %v454, %v452
      %v529 = vpack.c.b16 %v455, %v453
      %v530 = vpack.c.b16 %v458, %v456
      %v531 = vpack.c.b16 %v459, %v457
      %v532 = vpack.c.b16 %v462, %v460
      %v533 = vpack.c.b16 %v463, %v461
      %v534 = vpack.c.b16 %v466, %v464
      %v535 = vpack.c.b16 %v467, %v465
      %v536 = vpack.c.b16 %v470, %v468
      %v537 = vpack.c.b16 %v471, %v469
      %v538 = vpack.c.b16 %v474, %v472
      %v539 = vpack.c.b16 %v475, %v473
      %v636 = vunpack.c.l.b16 %v252
      %v637 = vunpack.c.l.b16 %v253
      %v638 = vunpack.c.l.b16 %v254
      %v639 = vunpack.c.l.b16 %v255
      %v640 = vunpack.c.l.b16 %v256
      %v641 = vunpack.c.l.b16 %v257
      %v642 = vunpack.c.l.b16 %v258
      %v643 = vunpack.c.l.b16 %v259
      %v644 = vunpack.c.l.b16 %v260
      %v645 = vunpack.c.l.b16 %v261
      %v646 = vunpack.c.l.b16 %v262
      %v647 = vunpack.c.l.b16 %v263
      %v648 = vunpack.c.l.b16 %v264
      %v649 = vunpack.c.l.b16 %v265
      %v650 = vunpack.c.l.b16 %v266
      %v651 = vunpack.c.l.b16 %v267
      %v652 = vunpack.c.l.b16 %v268
      %v653 = vunpack.c.l.b16 %v269
      %v654 = vunpack.c.l.b16 %v270
      %v655 = vunpack.c.l.b16 %v271
      %v656 = vunpack.c.l.b16 %v272
      %v657 = vunpack.c.l.b16 %v273
      %v658 = vunpack.c.l.b16 %v274
      %v659 = vunpack.c.l.b16 %v275
      %v660 = vunpack.c.l.b16 %v276
      %v661 = vunpack.c.l.b16 %v277
      %v662 = vunpack.c.l.b16 %v278
      %v663 = vunpack.c.l.b16 %v279
      %v664 = vunpack.c.l.b16 %v280
      %v665 = vunpack.c.l.b16 %v281
      %v666 = vunpack.c.l.b16 %v282
      %v667 = vunpack.c.l.b16 %v283
      %v668 = vpack.c.b16 %v637, %v636
      %v669 = vpack.c.b16 %v639, %v638
      %v670 = vpack.c.b16 %v641, %v640
      %v671 = vpack.c.b16 %v643, %v642
      %v672 = vpack.c.b16 %v645, %v644
      %v673 = vpack.c.b16 %v647, %v646
      %v674 = vpack.c.b16 %v649, %v648
      %v675 = vpack.c.b16 %v651, %v650
      %v676 = vpack.c.b16 %v653, %v652
      %v677 = vpack.c.b16 %v655, %v654
      %v678 = vpack.c.b16 %v657, %v656
      %v679 = vpack.c.b16 %v659, %v658
      %v680 = vpack.c.b16 %v661, %v660
      %v681 = vpack.c.b16 %v663, %v662
      %v682 = vpack.c.b16 %v665, %v664
      %v683 = vpack.c.b16 %v667, %v666
      %700 = vmatpush.bf16.msra.mxu0 %v675
      %701 = vmatpush.bf16.msra.mxu0 %v674
      %702 = vmatpush.bf16.msra.mxu0 %v673
      %703 = vmatpush.bf16.msra.mxu0 %v672
      %704 = vmatpush.bf16.msra.mxu0 %v671
      %705 = vmatpush.bf16.msra.mxu0 %v670
      %706 = vmatpush.bf16.msra.mxu0 %v669
      %707 = vmatpush.bf16.msra.mxu0 %v668
      %708 = vmatmul.bf16.gmra.mxu0 %v476
      %v709 = vpop.f32.mrf.mxu0
      %v710 = vadd.f32 0.0, %v709
      %v711 = vpop.f32.mrf.mxu0
      %v712 = vadd.f32 0.0, %v711
      %713 = vmatmul.bf16.gmra.mxu0 %v478
      %v714 = vpop.f32.mrf.mxu0
      %v715 = vadd.f32 0.0, %v714
      %v716 = vpop.f32.mrf.mxu0
      %v717 = vadd.f32 0.0, %v716
      %718 = vmatmul.bf16.gmra.mxu0 %v480
      %v719 = vpop.f32.mrf.mxu0
      %v720 = vadd.f32 0.0, %v719
      %v721 = vpop.f32.mrf.mxu0
      %v722 = vadd.f32 0.0, %v721
      %723 = vmatmul.bf16.gmra.mxu0 %v482
      %v724 = vpop.f32.mrf.mxu0
      %v725 = vadd.f32 0.0, %v724
      %v726 = vpop.f32.mrf.mxu0
      %v727 = vadd.f32 0.0, %v726
      %728 = vmatmul.bf16.gmra.mxu0 %v484
      %v729 = vpop.f32.mrf.mxu0
      %v730 = vadd.f32 0.0, %v729
      %v731 = vpop.f32.mrf.mxu0
      %v732 = vadd.f32 0.0, %v731
      %733 = vmatmul.bf16.gmra.mxu0 %v486
      %v734 = vpop.f32.mrf.mxu0
      %v735 = vadd.f32 0.0, %v734
      %v736 = vpop.f32.mrf.mxu0
      %v737 = vadd.f32 0.0, %v736
      %738 = vmatmul.bf16.gmra.mxu0 %v488
      %v739 = vpop.f32.mrf.mxu0
      %v740 = vadd.f32 0.0, %v739
      %v741 = vpop.f32.mrf.mxu0
      %v742 = vadd.f32 0.0, %v741
      %743 = vmatmul.bf16.gmra.mxu0 %v490
      %v744 = vpop.f32.mrf.mxu0
      %v745 = vadd.f32 0.0, %v744
      %v746 = vpop.f32.mrf.mxu0
      %v747 = vadd.f32 0.0, %v746
      %748 = vmatmul.bf16.gmra.mxu0 %v492
      %v749 = vpop.f32.mrf.mxu0
      %v750 = vadd.f32 0.0, %v749
      %v751 = vpop.f32.mrf.mxu0
      %v752 = vadd.f32 0.0, %v751
      %753 = vmatmul.bf16.gmra.mxu0 %v494
      %v754 = vpop.f32.mrf.mxu0
      %v755 = vadd.f32 0.0, %v754
      %v756 = vpop.f32.mrf.mxu0
      %v757 = vadd.f32 0.0, %v756
      %758 = vmatmul.bf16.gmra.mxu0 %v496
      %v759 = vpop.f32.mrf.mxu0
      %v760 = vadd.f32 0.0, %v759
      %v761 = vpop.f32.mrf.mxu0
      %v762 = vadd.f32 0.0, %v761
      %763 = vmatmul.bf16.gmra.mxu0 %v498
      %v764 = vpop.f32.mrf.mxu0
      %v765 = vadd.f32 0.0, %v764
      %v766 = vpop.f32.mrf.mxu0
      %v767 = vadd.f32 0.0, %v766
      %768 = vmatmul.bf16.gmra.mxu0 %v500
      %v769 = vpop.f32.mrf.mxu0
      %v770 = vadd.f32 0.0, %v769
      %v771 = vpop.f32.mrf.mxu0
      %v772 = vadd.f32 0.0, %v771
      %773 = vmatmul.bf16.gmra.mxu0 %v502
      %v774 = vpop.f32.mrf.mxu0
      %v775 = vadd.f32 0.0, %v774
      %v776 = vpop.f32.mrf.mxu0
      %v777 = vadd.f32 0.0, %v776
      %778 = vmatmul.bf16.gmra.mxu0 %v504
      %v779 = vpop.f32.mrf.mxu0
      %v780 = vadd.f32 0.0, %v779
      %v781 = vpop.f32.mrf.mxu0
      %v782 = vadd.f32 0.0, %v781
      %783 = vmatmul.bf16.gmra.mxu0 %v506
      %v784 = vpop.f32.mrf.mxu0
      %v785 = vadd.f32 0.0, %v784
      %v786 = vpop.f32.mrf.mxu0
      %v787 = vadd.f32 0.0, %v786
      %788 = vmatmul.bf16.gmra.mxu0 %v508
      %v789 = vpop.f32.mrf.mxu0
      %v790 = vadd.f32 0.0, %v789
      %v791 = vpop.f32.mrf.mxu0
      %v792 = vadd.f32 0.0, %v791
      %793 = vmatmul.bf16.gmra.mxu0 %v510
      %v794 = vpop.f32.mrf.mxu0
      %v795 = vadd.f32 0.0, %v794
      %v796 = vpop.f32.mrf.mxu0
      %v797 = vadd.f32 0.0, %v796
      %798 = vmatmul.bf16.gmra.mxu0 %v512
      %v799 = vpop.f32.mrf.mxu0
      %v800 = vadd.f32 0.0, %v799
      %v801 = vpop.f32.mrf.mxu0
      %v802 = vadd.f32 0.0, %v801
      %803 = vmatmul.bf16.gmra.mxu0 %v514
      %v804 = vpop.f32.mrf.mxu0
      %v805 = vadd.f32 0.0, %v804
      %v806 = vpop.f32.mrf.mxu0
      %v807 = vadd.f32 0.0, %v806
      %808 = vmatmul.bf16.gmra.mxu0 %v516
      %v809 = vpop.f32.mrf.mxu0
      %v810 = vadd.f32 0.0, %v809
      %v811 = vpop.f32.mrf.mxu0
      %v812 = vadd.f32 0.0, %v811
      %813 = vmatmul.bf16.gmra.mxu0 %v518
      %v814 = vpop.f32.mrf.mxu0
      %v815 = vadd.f32 0.0, %v814
      %v816 = vpop.f32.mrf.mxu0
      %v817 = vadd.f32 0.0, %v816
      %818 = vmatmul.bf16.gmra.mxu0 %v520
      %v819 = vpop.f32.mrf.mxu0
      %v820 = vadd.f32 0.0, %v819
      %v821 = vpop.f32.mrf.mxu0
      %v822 = vadd.f32 0.0, %v821
      %823 = vmatmul.bf16.gmra.mxu0 %v522
      %v824 = vpop.f32.mrf.mxu0
      %v825 = vadd.f32 0.0, %v824
      %v826 = vpop.f32.mrf.mxu0
      %v827 = vadd.f32 0.0, %v826
      %828 = vmatmul.bf16.gmra.mxu0 %v524
      %v829 = vpop.f32.mrf.mxu0
      %v830 = vadd.f32 0.0, %v829
      %v831 = vpop.f32.mrf.mxu0
      %v832 = vadd.f32 0.0, %v831
      %833 = vmatmul.bf16.gmra.mxu0 %v526
      %v834 = vpop.f32.mrf.mxu0
      %v835 = vadd.f32 0.0, %v834
      %v836 = vpop.f32.mrf.mxu0
      %v837 = vadd.f32 0.0, %v836
      %838 = vmatmul.bf16.gmra.mxu0 %v528
      %v839 = vpop.f32.mrf.mxu0
      %v840 = vadd.f32 0.0, %v839
      %v841 = vpop.f32.mrf.mxu0
      %v842 = vadd.f32 0.0, %v841
      %843 = vmatmul.bf16.gmra.mxu0 %v530
      %v844 = vpop.f32.mrf.mxu0
      %v845 = vadd.f32 0.0, %v844
      %v846 = vpop.f32.mrf.mxu0
      %v847 = vadd.f32 0.0, %v846
      %848 = vmatmul.bf16.gmra.mxu0 %v532
      %v849 = vpop.f32.mrf.mxu0
      %v850 = vadd.f32 0.0, %v849
      %v851 = vpop.f32.mrf.mxu0
      %v852 = vadd.f32 0.0, %v851
      %853 = vmatmul.bf16.gmra.mxu0 %v534
      %v854 = vpop.f32.mrf.mxu0
      %v855 = vadd.f32 0.0, %v854
      %v856 = vpop.f32.mrf.mxu0
      %v857 = vadd.f32 0.0, %v856
      %858 = vmatmul.bf16.gmra.mxu0 %v536
      %v859 = vpop.f32.mrf.mxu0
      %v860 = vadd.f32 0.0, %v859
      %v861 = vpop.f32.mrf.mxu0
      %v862 = vadd.f32 0.0, %v861
      %863 = vmatmul.bf16.gmra.mxu0 %v538
      %v864 = vpop.f32.mrf.mxu0
      %v865 = vadd.f32 0.0, %v864
      %v866 = vpop.f32.mrf.mxu0
      %v867 = vadd.f32 0.0, %v866
      %868 = vdwg.mxu0
      %869 = vmatpush.bf16.msra.mxu0 %v683
      %870 = vmatpush.bf16.msra.mxu0 %v682
      %871 = vmatpush.bf16.msra.mxu0 %v681
      %872 = vmatpush.bf16.msra.mxu0 %v680
      %873 = vmatpush.bf16.msra.mxu0 %v679
      %874 = vmatpush.bf16.msra.mxu0 %v678
      %875 = vmatpush.bf16.msra.mxu0 %v677
      %876 = vmatpush.bf16.msra.mxu0 %v676
      %877 = vmatmul.bf16.gmra.mxu0 %v477
      %v878 = vpop.f32.mrf.mxu0
      %v879 = vadd.f32 %v710, %v878
      %v880 = vpop.f32.mrf.mxu0
      %v881 = vadd.f32 %v712, %v880
      %882 = vmatmul.bf16.gmra.mxu0 %v479
      %v883 = vpop.f32.mrf.mxu0
      %v884 = vadd.f32 %v715, %v883
      %v885 = vpop.f32.mrf.mxu0
      %v886 = vadd.f32 %v717, %v885
      %887 = vmatmul.bf16.gmra.mxu0 %v481
      %v888 = vpop.f32.mrf.mxu0
      %v889 = vadd.f32 %v720, %v888
      %v890 = vpop.f32.mrf.mxu0
      %v891 = vadd.f32 %v722, %v890
      %892 = vmatmul.bf16.gmra.mxu0 %v483
      %v893 = vpop.f32.mrf.mxu0
      %v894 = vadd.f32 %v725, %v893
      %v895 = vpop.f32.mrf.mxu0
      %v896 = vadd.f32 %v727, %v895
      %897 = vmatmul.bf16.gmra.mxu0 %v485
      %v898 = vpop.f32.mrf.mxu0
      %v899 = vadd.f32 %v730, %v898
      %v900 = vpop.f32.mrf.mxu0
      %v901 = vadd.f32 %v732, %v900
      %902 = vmatmul.bf16.gmra.mxu0 %v487
      %v903 = vpop.f32.mrf.mxu0
      %v904 = vadd.f32 %v735, %v903
      %v905 = vpop.f32.mrf.mxu0
      %v906 = vadd.f32 %v737, %v905
      %907 = vmatmul.bf16.gmra.mxu0 %v489
      %v908 = vpop.f32.mrf.mxu0
      %v909 = vadd.f32 %v740, %v908
      %v910 = vpop.f32.mrf.mxu0
      %v911 = vadd.f32 %v742, %v910
      %912 = vmatmul.bf16.gmra.mxu0 %v491
      %v913 = vpop.f32.mrf.mxu0
      %v914 = vadd.f32 %v745, %v913
      %v915 = vpop.f32.mrf.mxu0
      %v916 = vadd.f32 %v747, %v915
      %917 = vmatmul.bf16.gmra.mxu0 %v493
      %v918 = vpop.f32.mrf.mxu0
      %v919 = vadd.f32 %v750, %v918
      %v920 = vpop.f32.mrf.mxu0
      %v921 = vadd.f32 %v752, %v920
      %922 = vmatmul.bf16.gmra.mxu0 %v495
      %v923 = vpop.f32.mrf.mxu0
      %v924 = vadd.f32 %v755, %v923
      %v925 = vpop.f32.mrf.mxu0
      %v926 = vadd.f32 %v757, %v925
      %927 = vmatmul.bf16.gmra.mxu0 %v497
      %v928 = vpop.f32.mrf.mxu0
      %v929 = vadd.f32 %v760, %v928
      %v930 = vpop.f32.mrf.mxu0
      %v931 = vadd.f32 %v762, %v930
      %932 = vmatmul.bf16.gmra.mxu0 %v499
      %v933 = vpop.f32.mrf.mxu0
      %v934 = vadd.f32 %v765, %v933
      %v935 = vpop.f32.mrf.mxu0
      %v936 = vadd.f32 %v767, %v935
      %937 = vmatmul.bf16.gmra.mxu0 %v501
      %v938 = vpop.f32.mrf.mxu0
      %v939 = vadd.f32 %v770, %v938
      %v940 = vpop.f32.mrf.mxu0
      %v941 = vadd.f32 %v772, %v940
      %942 = vmatmul.bf16.gmra.mxu0 %v503
      %v943 = vpop.f32.mrf.mxu0
      %v944 = vadd.f32 %v775, %v943
      %v945 = vpop.f32.mrf.mxu0
      %v946 = vadd.f32 %v777, %v945
      %947 = vmatmul.bf16.gmra.mxu0 %v505
      %v948 = vpop.f32.mrf.mxu0
      %v949 = vadd.f32 %v780, %v948
      %v950 = vpop.f32.mrf.mxu0
      %v951 = vadd.f32 %v782, %v950
      %952 = vmatmul.bf16.gmra.mxu0 %v507
      %v953 = vpop.f32.mrf.mxu0
      %v954 = vadd.f32 %v785, %v953
      %v955 = vpop.f32.mrf.mxu0
      %v956 = vadd.f32 %v787, %v955
      %957 = vmatmul.bf16.gmra.mxu0 %v509
      %v958 = vpop.f32.mrf.mxu0
      %v959 = vadd.f32 %v790, %v958
      %v960 = vpop.f32.mrf.mxu0
      %v961 = vadd.f32 %v792, %v960
      %962 = vmatmul.bf16.gmra.mxu0 %v511
      %v963 = vpop.f32.mrf.mxu0
      %v964 = vadd.f32 %v795, %v963
      %v965 = vpop.f32.mrf.mxu0
      %v966 = vadd.f32 %v797, %v965
      %967 = vmatmul.bf16.gmra.mxu0 %v513
      %v968 = vpop.f32.mrf.mxu0
      %v969 = vadd.f32 %v800, %v968
      %v970 = vpop.f32.mrf.mxu0
      %v971 = vadd.f32 %v802, %v970
      %972 = vmatmul.bf16.gmra.mxu0 %v515
      %v973 = vpop.f32.mrf.mxu0
      %v974 = vadd.f32 %v805, %v973
      %v975 = vpop.f32.mrf.mxu0
      %v976 = vadd.f32 %v807, %v975
      %977 = vmatmul.bf16.gmra.mxu0 %v517
      %v978 = vpop.f32.mrf.mxu0
      %v979 = vadd.f32 %v810, %v978
      %v980 = vpop.f32.mrf.mxu0
      %v981 = vadd.f32 %v812, %v980
      %982 = vmatmul.bf16.gmra.mxu0 %v519
      %v983 = vpop.f32.mrf.mxu0
      %v984 = vadd.f32 %v815, %v983
      %v985 = vpop.f32.mrf.mxu0
      %v986 = vadd.f32 %v817, %v985
      %987 = vmatmul.bf16.gmra.mxu0 %v521
      %v988 = vpop.f32.mrf.mxu0
      %v989 = vadd.f32 %v820, %v988
      %v990 = vpop.f32.mrf.mxu0
      %v991 = vadd.f32 %v822, %v990
      %992 = vmatmul.bf16.gmra.mxu0 %v523
      %v993 = vpop.f32.mrf.mxu0
      %v994 = vadd.f32 %v825, %v993
      %v995 = vpop.f32.mrf.mxu0
      %v996 = vadd.f32 %v827, %v995
      %997 = vmatmul.bf16.gmra.mxu0 %v525
      %v998 = vpop.f32.mrf.mxu0
      %v999 = vadd.f32 %v830, %v998
      %v1000 = vpop.f32.mrf.mxu0
      %v1001 = vadd.f32 %v832, %v1000
      %1002 = vmatmul.bf16.gmra.mxu0 %v527
      %v1003 = vpop.f32.mrf.mxu0
      %v1004 = vadd.f32 %v835, %v1003
      %v1005 = vpop.f32.mrf.mxu0
      %v1006 = vadd.f32 %v837, %v1005
      %1007 = vmatmul.bf16.gmra.mxu0 %v529
      %v1008 = vpop.f32.mrf.mxu0
      %v1009 = vadd.f32 %v840, %v1008
      %v1010 = vpop.f32.mrf.mxu0
      %v1011 = vadd.f32 %v842, %v1010
      %1012 = vmatmul.bf16.gmra.mxu0 %v531
      %v1013 = vpop.f32.mrf.mxu0
      %v1014 = vadd.f32 %v845, %v1013
      %v1015 = vpop.f32.mrf.mxu0
      %v1016 = vadd.f32 %v847, %v1015
      %1017 = vmatmul.bf16.gmra.mxu0 %v533
      %v1018 = vpop.f32.mrf.mxu0
      %v1019 = vadd.f32 %v850, %v1018
      %v1020 = vpop.f32.mrf.mxu0
      %v1021 = vadd.f32 %v852, %v1020
      %1022 = vmatmul.bf16.gmra.mxu0 %v535
      %v1023 = vpop.f32.mrf.mxu0
      %v1024 = vadd.f32 %v855, %v1023
      %v1025 = vpop.f32.mrf.mxu0
      %v1026 = vadd.f32 %v857, %v1025
      %1027 = vmatmul.bf16.gmra.mxu0 %v537
      %v1028 = vpop.f32.mrf.mxu0
      %v1029 = vadd.f32 %v860, %v1028
      %v1030 = vpop.f32.mrf.mxu0
      %v1031 = vadd.f32 %v862, %v1030
      %1032 = vmatmul.bf16.gmra.mxu0 %v539
      %v1033 = vpop.f32.mrf.mxu0
      %v1034 = vadd.f32 %v865, %v1033
      %v1035 = vpop.f32.mrf.mxu0
      %v1036 = vadd.f32 %v867, %v1035
      %1037 = vdwg.mxu0
      %v1038 = vpack.c.bf16 %v879, %v879
      %v1039 = vpack.c.bf16 %v881, %v881
      %v1040 = vpack.c.bf16 %v884, %v884
      %v1041 = vpack.c.bf16 %v886, %v886
      %v1042 = vpack.c.bf16 %v889, %v889
      %v1043 = vpack.c.bf16 %v891, %v891
      %v1044 = vpack.c.bf16 %v894, %v894
      %v1045 = vpack.c.bf16 %v896, %v896
      %v1046 = vpack.c.bf16 %v899, %v899
      %v1047 = vpack.c.bf16 %v901, %v901
      %v1048 = vpack.c.bf16 %v904, %v904
      %v1049 = vpack.c.bf16 %v906, %v906
      %v1050 = vpack.c.bf16 %v909, %v909
      %v1051 = vpack.c.bf16 %v911, %v911
      %v1052 = vpack.c.bf16 %v914, %v914
      %v1053 = vpack.c.bf16 %v916, %v916
      %v1054 = vpack.c.bf16 %v919, %v919
      %v1055 = vpack.c.bf16 %v921, %v921
      %v1056 = vpack.c.bf16 %v924, %v924
      %v1057 = vpack.c.bf16 %v926, %v926
      %v1058 = vpack.c.bf16 %v929, %v929
      %v1059 = vpack.c.bf16 %v931, %v931
      %v1060 = vpack.c.bf16 %v934, %v934
      %v1061 = vpack.c.bf16 %v936, %v936
      %v1062 = vpack.c.bf16 %v939, %v939
      %v1063 = vpack.c.bf16 %v941, %v941
      %v1064 = vpack.c.bf16 %v944, %v944
      %v1065 = vpack.c.bf16 %v946, %v946
      %v1066 = vpack.c.bf16 %v949, %v949
      %v1067 = vpack.c.bf16 %v951, %v951
      %v1068 = vpack.c.bf16 %v954, %v954
      %v1069 = vpack.c.bf16 %v956, %v956
      %v1070 = vpack.c.bf16 %v959, %v959
      %v1071 = vpack.c.bf16 %v961, %v961
      %v1072 = vpack.c.bf16 %v964, %v964
      %v1073 = vpack.c.bf16 %v966, %v966
      %v1074 = vpack.c.bf16 %v969, %v969
      %v1075 = vpack.c.bf16 %v971, %v971
      %v1076 = vpack.c.bf16 %v974, %v974
      %v1077 = vpack.c.bf16 %v976, %v976
      %v1078 = vpack.c.bf16 %v979, %v979
      %v1079 = vpack.c.bf16 %v981, %v981
      %v1080 = vpack.c.bf16 %v984, %v984
      %v1081 = vpack.c.bf16 %v986, %v986
      %v1082 = vpack.c.bf16 %v989, %v989
      %v1083 = vpack.c.bf16 %v991, %v991
      %v1084 = vpack.c.bf16 %v994, %v994
      %v1085 = vpack.c.bf16 %v996, %v996
      %v1086 = vpack.c.bf16 %v999, %v999
      %v1087 = vpack.c.bf16 %v1001, %v1001
      %v1088 = vpack.c.bf16 %v1004, %v1004
      %v1089 = vpack.c.bf16 %v1006, %v1006
      %v1090 = vpack.c.bf16 %v1009, %v1009
      %v1091 = vpack.c.bf16 %v1011, %v1011
      %v1092 = vpack.c.bf16 %v1014, %v1014
      %v1093 = vpack.c.bf16 %v1016, %v1016
      %v1094 = vpack.c.bf16 %v1019, %v1019
      %v1095 = vpack.c.bf16 %v1021, %v1021
      %v1096 = vpack.c.bf16 %v1024, %v1024
      %v1097 = vpack.c.bf16 %v1026, %v1026
      %v1098 = vpack.c.bf16 %v1029, %v1029
      %v1099 = vpack.c.bf16 %v1031, %v1031
      %v1100 = vpack.c.bf16 %v1034, %v1034
      %v1101 = vpack.c.bf16 %v1036, %v1036
      %1102 = vst [vmem:[%s182] sm:$0xf] %v1038
      %1103 = vst [vmem:[%s182 + $0x4] sm:$0xf] %v1039
      %1104 = vst [vmem:[%s182 + $0x8] sm:$0xf] %v1040
      %1105 = vst [vmem:[%s182 + $0xc] sm:$0xf] %v1041
      %1106 = vst [vmem:[%s182 + $0x10] sm:$0xf] %v1042
      %1107 = vst [vmem:[%s182 + $0x14] sm:$0xf] %v1043
      %1108 = vst [vmem:[%s182 + $0x18] sm:$0xf] %v1044
      %1109 = vst [vmem:[%s182 + $0x1c] sm:$0xf] %v1045
      %1110 = vst [vmem:[%s182 + $0x20] sm:$0xf] %v1046
      %1111 = vst [vmem:[%s182 + $0x24] sm:$0xf] %v1047
      %1112 = vst [vmem:[%s182 + $0x28] sm:$0xf] %v1048
      %1113 = vst [vmem:[%s182 + $0x2c] sm:$0xf] %v1049
      %1114 = vst [vmem:[%s182 + $0x30] sm:$0xf] %v1050
      %1115 = vst [vmem:[%s182 + $0x34] sm:$0xf] %v1051
      %1116 = vst [vmem:[%s182 + $0x38] sm:$0xf] %v1052
      %1117 = vst [vmem:[%s182 + $0x3c] sm:$0xf] %v1053
      %1118 = vst [vmem:[%s182 + $0x40] sm:$0xf] %v1054
      %1119 = vst [vmem:[%s182 + $0x44] sm:$0xf] %v1055
      %1120 = vst [vmem:[%s182 + $0x48] sm:$0xf] %v1056
      %1121 = vst [vmem:[%s182 + $0x4c] sm:$0xf] %v1057
      %1122 = vst [vmem:[%s182 + $0x50] sm:$0xf] %v1058
      %1123 = vst [vmem:[%s182 + $0x54] sm:$0xf] %v1059
      %1124 = vst [vmem:[%s182 + $0x58] sm:$0xf] %v1060
      %1125 = vst [vmem:[%s182 + $0x5c] sm:$0xf] %v1061
      %1126 = vst [vmem:[%s182 + $0x60] sm:$0xf] %v1062
      %1127 = vst [vmem:[%s182 + $0x64] sm:$0xf] %v1063
      %1128 = vst [vmem:[%s182 + $0x68] sm:$0xf] %v1064
      %1129 = vst [vmem:[%s182 + $0x6c] sm:$0xf] %v1065
      %1130 = vst [vmem:[%s182 + $0x70] sm:$0xf] %v1066
      %1131 = vst [vmem:[%s182 + $0x74] sm:$0xf] %v1067
      %1132 = vst [vmem:[%s182 + $0x78] sm:$0xf] %v1068
      %1133 = vst [vmem:[%s182 + $0x7c] sm:$0xf] %v1069
      %1134 = vst [vmem:[%s182 + $0x80] sm:$0xf] %v1070
      %1135 = vst [vmem:[%s182 + $0x84] sm:$0xf] %v1071
      %1136 = vst [vmem:[%s182 + $0x88] sm:$0xf] %v1072
      %1137 = vst [vmem:[%s182 + $0x8c] sm:$0xf] %v1073
      %1138 = vst [vmem:[%s182 + $0x90] sm:$0xf] %v1074
      %1139 = vst [vmem:[%s182 + $0x94] sm:$0xf] %v1075
      %1140 = vst [vmem:[%s182 + $0x98] sm:$0xf] %v1076
      %1141 = vst [vmem:[%s182 + $0x9c] sm:$0xf] %v1077
      %1142 = vst [vmem:[%s182 + $0xa0] sm:$0xf] %v1078
      %1143 = vst [vmem:[%s182 + $0xa4] sm:$0xf] %v1079
      %1144 = vst [vmem:[%s182 + $0xa8] sm:$0xf] %v1080
      %1145 = vst [vmem:[%s182 + $0xac] sm:$0xf] %v1081
      %1146 = vst [vmem:[%s182 + $0xb0] sm:$0xf] %v1082
      %1147 = vst [vmem:[%s182 + $0xb4] sm:$0xf] %v1083
      %1148 = vst [vmem:[%s182 + $0xb8] sm:$0xf] %v1084
      %1149 = vst [vmem:[%s182 + $0xbc] sm:$0xf] %v1085
      %1150 = vst [vmem:[%s182 + $0xc0] sm:$0xf] %v1086
      %1151 = vst [vmem:[%s182 + $0xc4] sm:$0xf] %v1087
      %1152 = vst [vmem:[%s182 + $0xc8] sm:$0xf] %v1088
      %1153 = vst [vmem:[%s182 + $0xcc] sm:$0xf] %v1089
      %1154 = vst [vmem:[%s182 + $0xd0] sm:$0xf] %v1090
      %1155 = vst [vmem:[%s182 + $0xd4] sm:$0xf] %v1091
      %1156 = vst [vmem:[%s182 + $0xd8] sm:$0xf] %v1092
      %1157 = vst [vmem:[%s182 + $0xdc] sm:$0xf] %v1093
      %1158 = vst [vmem:[%s182 + $0xe0] sm:$0xf] %v1094
      %1159 = vst [vmem:[%s182 + $0xe4] sm:$0xf] %v1095
      %1160 = vst [vmem:[%s182 + $0xe8] sm:$0xf] %v1096
      %1161 = vst [vmem:[%s182 + $0xec] sm:$0xf] %v1097
      %1162 = vst [vmem:[%s182 + $0xf0] sm:$0xf] %v1098
      %1163 = vst [vmem:[%s182 + $0xf4] sm:$0xf] %v1099
      %1164 = vst [vmem:[%s182 + $0xf8] sm:$0xf] %v1100
      %1165 = vst [vmem:[%s182 + $0xfc] sm:$0xf] %v1101
      %v1166 = vadd.f32 %v879, %v881
      %v1167 = vadd.f32 %v1166, %v884
      %v1168 = vadd.f32 %v1167, %v886
      %v1169 = vadd.f32 %v1168, %v889
      %v1170 = vadd.f32 %v1169, %v891
      %v1171 = vadd.f32 %v1170, %v894
      %v1172 = vadd.f32 %v1171, %v896
      %v1173 = vadd.f32 %v1172, %v899
      %v1174 = vadd.f32 %v1173, %v901
      %v1175 = vadd.f32 %v1174, %v904
      %v1176 = vadd.f32 %v1175, %v906
      %v1177 = vadd.f32 %v1176, %v909
      %v1178 = vadd.f32 %v1177, %v911
      %v1179 = vadd.f32 %v1178, %v914
      %v1180 = vadd.f32 %v1179, %v916
      %v1181 = vadd.f32 %v1180, %v919
      %v1182 = vadd.f32 %v1181, %v921
      %v1183 = vadd.f32 %v1182, %v924
      %v1184 = vadd.f32 %v1183, %v926
      %v1185 = vadd.f32 %v1184, %v929
      %v1186 = vadd.f32 %v1185, %v931
      %v1187 = vadd.f32 %v1186, %v934
      %v1188 = vadd.f32 %v1187, %v936
      %v1189 = vadd.f32 %v1188, %v939
      %v1190 = vadd.f32 %v1189, %v941
      %v1191 = vadd.f32 %v1190, %v944
      %v1192 = vadd.f32 %v1191, %v946
      %v1193 = vadd.f32 %v1192, %v949
      %v1194 = vadd.f32 %v1193, %v951
      %v1195 = vadd.f32 %v1194, %v954
      %v1196 = vadd.f32 %v1195, %v956
      %v1197 = vadd.f32 %v1196, %v959
      %v1198 = vadd.f32 %v1197, %v961
      %v1199 = vadd.f32 %v1198, %v964
      %v1200 = vadd.f32 %v1199, %v966
      %v1201 = vadd.f32 %v1200, %v969
      %v1202 = vadd.f32 %v1201, %v971
      %v1203 = vadd.f32 %v1202, %v974
      %v1204 = vadd.f32 %v1203, %v976
      %v1205 = vadd.f32 %v1204, %v979
      %v1206 = vadd.f32 %v1205, %v981
      %v1207 = vadd.f32 %v1206, %v984
      %v1208 = vadd.f32 %v1207, %v986
      %v1209 = vadd.f32 %v1208, %v989
      %v1210 = vadd.f32 %v1209, %v991
      %v1211 = vadd.f32 %v1210, %v994
      %v1212 = vadd.f32 %v1211, %v996
      %v1213 = vadd.f32 %v1212, %v999
      %v1214 = vadd.f32 %v1213, %v1001
      %v1215 = vadd.f32 %v1214, %v1004
      %v1216 = vadd.f32 %v1215, %v1006
      %v1217 = vadd.f32 %v1216, %v1009
      %v1218 = vadd.f32 %v1217, %v1011
      %v1219 = vadd.f32 %v1218, %v1014
      %v1220 = vadd.f32 %v1219, %v1016
      %v1221 = vadd.f32 %v1220, %v1019
      %v1222 = vadd.f32 %v1221, %v1021
      %v1223 = vadd.f32 %v1222, %v1024
      %v1224 = vadd.f32 %v1223, %v1026
      %v1225 = vadd.f32 %v1224, %v1029
      %v1226 = vadd.f32 %v1225, %v1031
      %v1227 = vadd.f32 %v1226, %v1034
      %v1228 = vadd.f32 %v1227, %v1036
      %v1229 = vrot.slane %v1228, 4
      %v1230 = vadd.f32 %v1228, %v1229
      %v1231 = vrot.slane %v1230, 2
      %v1232 = vadd.f32 %v1230, %v1231
      %v1233 = vrot.slane %v1232, 1
      %v1234 = vadd.f32 %v1232, %v1233
      %1235 = vst [vmem:[%s187] sm:$0x1] %v1234
      %v1236 = vmul.f32 %v879, %v879
      %v1237 = vmul.f32 %v881, %v881
      %v1238 = vmul.f32 %v884, %v884
      %v1239 = vmul.f32 %v886, %v886
      %v1240 = vmul.f32 %v889, %v889
      %v1241 = vmul.f32 %v891, %v891
      %v1242 = vmul.f32 %v894, %v894
      %v1243 = vmul.f32 %v896, %v896
      %v1244 = vmul.f32 %v899, %v899
      %v1245 = vmul.f32 %v901, %v901
      %v1246 = vmul.f32 %v904, %v904
      %v1247 = vmul.f32 %v906, %v906
      %v1248 = vmul.f32 %v909, %v909
      %v1249 = vmul.f32 %v911, %v911
      %v1250 = vmul.f32 %v914, %v914
      %v1251 = vmul.f32 %v916, %v916
      %v1252 = vmul.f32 %v919, %v919
      %v1253 = vmul.f32 %v921, %v921
      %v1254 = vmul.f32 %v924, %v924
      %v1255 = vmul.f32 %v926, %v926
      %v1256 = vmul.f32 %v929, %v929
      %v1257 = vmul.f32 %v931, %v931
      %v1258 = vmul.f32 %v934, %v934
      %v1259 = vmul.f32 %v936, %v936
      %v1260 = vmul.f32 %v939, %v939
      %v1261 = vmul.f32 %v941, %v941
      %v1262 = vmul.f32 %v944, %v944
      %v1263 = vmul.f32 %v946, %v946
      %v1264 = vmul.f32 %v949, %v949
      %v1265 = vmul.f32 %v951, %v951
      %v1266 = vmul.f32 %v954, %v954
      %v1267 = vmul.f32 %v956, %v956
      %v1268 = vmul.f32 %v959, %v959
      %v1269 = vmul.f32 %v961, %v961
      %v1270 = vmul.f32 %v964, %v964
      %v1271 = vmul.f32 %v966, %v966
      %v1272 = vmul.f32 %v969, %v969
      %v1273 = vmul.f32 %v971, %v971
      %v1274 = vmul.f32 %v974, %v974
      %v1275 = vmul.f32 %v976, %v976
      %v1276 = vmul.f32 %v979, %v979
      %v1277 = vmul.f32 %v981, %v981
      %v1278 = vmul.f32 %v984, %v984
      %v1279 = vmul.f32 %v986, %v986
      %v1280 = vmul.f32 %v989, %v989
      %v1281 = vmul.f32 %v991, %v991
      %v1282 = vmul.f32 %v994, %v994
      %v1283 = vmul.f32 %v996, %v996
      %v1284 = vmul.f32 %v999, %v999
      %v1285 = vmul.f32 %v1001, %v1001
      %v1286 = vmul.f32 %v1004, %v1004
      %v1287 = vmul.f32 %v1006, %v1006
      %v1288 = vmul.f32 %v1009, %v1009
      %v1289 = vmul.f32 %v1011, %v1011
      %v1290 = vmul.f32 %v1014, %v1014
      %v1291 = vmul.f32 %v1016, %v1016
      %v1292 = vmul.f32 %v1019, %v1019
      %v1293 = vmul.f32 %v1021, %v1021
      %v1294 = vmul.f32 %v1024, %v1024
      %v1295 = vmul.f32 %v1026, %v1026
      %v1296 = vmul.f32 %v1029, %v1029
      %v1297 = vmul.f32 %v1031, %v1031
      %v1298 = vmul.f32 %v1034, %v1034
      %v1299 = vmul.f32 %v1036, %v1036
      %v1300 = vadd.f32 %v1236, %v1237
      %v1301 = vadd.f32 %v1300, %v1238
      %v1302 = vadd.f32 %v1301, %v1239
      %v1303 = vadd.f32 %v1302, %v1240
      %v1304 = vadd.f32 %v1303, %v1241
      %v1305 = vadd.f32 %v1304, %v1242
      %v1306 = vadd.f32 %v1305, %v1243
      %v1307 = vadd.f32 %v1306, %v1244
      %v1308 = vadd.f32 %v1307, %v1245
      %v1309 = vadd.f32 %v1308, %v1246
      %v1310 = vadd.f32 %v1309, %v1247
      %v1311 = vadd.f32 %v1310, %v1248
      %v1312 = vadd.f32 %v1311, %v1249
      %v1313 = vadd.f32 %v1312, %v1250
      %v1314 = vadd.f32 %v1313, %v1251
      %v1315 = vadd.f32 %v1314, %v1252
      %v1316 = vadd.f32 %v1315, %v1253
      %v1317 = vadd.f32 %v1316, %v1254
      %v1318 = vadd.f32 %v1317, %v1255
      %v1319 = vadd.f32 %v1318, %v1256
      %v1320 = vadd.f32 %v1319, %v1257
      %v1321 = vadd.f32 %v1320, %v1258
      %v1322 = vadd.f32 %v1321, %v1259
      %v1323 = vadd.f32 %v1322, %v1260
      %v1324 = vadd.f32 %v1323, %v1261
      %v1325 = vadd.f32 %v1324, %v1262
      %v1326 = vadd.f32 %v1325, %v1263
      %v1327 = vadd.f32 %v1326, %v1264
      %v1328 = vadd.f32 %v1327, %v1265
      %v1329 = vadd.f32 %v1328, %v1266
      %v1330 = vadd.f32 %v1329, %v1267
      %v1331 = vadd.f32 %v1330, %v1268
      %v1332 = vadd.f32 %v1331, %v1269
      %v1333 = vadd.f32 %v1332, %v1270
      %v1334 = vadd.f32 %v1333, %v1271
      %v1335 = vadd.f32 %v1334, %v1272
      %v1336 = vadd.f32 %v1335, %v1273
      %v1337 = vadd.f32 %v1336, %v1274
      %v1338 = vadd.f32 %v1337, %v1275
      %v1339 = vadd.f32 %v1338, %v1276
      %v1340 = vadd.f32 %v1339, %v1277
      %v1341 = vadd.f32 %v1340, %v1278
      %v1342 = vadd.f32 %v1341, %v1279
      %v1343 = vadd.f32 %v1342, %v1280
      %v1344 = vadd.f32 %v1343, %v1281
      %v1345 = vadd.f32 %v1344, %v1282
      %v1346 = vadd.f32 %v1345, %v1283
      %v1347 = vadd.f32 %v1346, %v1284
      %v1348 = vadd.f32 %v1347, %v1285
      %v1349 = vadd.f32 %v1348, %v1286
      %v1350 = vadd.f32 %v1349, %v1287
      %v1351 = vadd.f32 %v1350, %v1288
      %v1352 = vadd.f32 %v1351, %v1289
      %v1353 = vadd.f32 %v1352, %v1290
      %v1354 = vadd.f32 %v1353, %v1291
      %v1355 = vadd.f32 %v1354, %v1292
      %v1356 = vadd.f32 %v1355, %v1293
      %v1357 = vadd.f32 %v1356, %v1294
      %v1358 = vadd.f32 %v1357, %v1295
      %v1359 = vadd.f32 %v1358, %v1296
      %v1360 = vadd.f32 %v1359, %v1297
      %v1361 = vadd.f32 %v1360, %v1298
      %v1362 = vadd.f32 %v1361, %v1299
      %v1363 = vrot.slane %v1362, 4
      %v1364 = vadd.f32 %v1362, %v1363
      %v1365 = vrot.slane %v1364, 2
      %v1366 = vadd.f32 %v1364, %v1365
      %v1367 = vrot.slane %v1366, 1
      %v1368 = vadd.f32 %v1366, %v1367
      %1369 = vst [vmem:[%s187 + $0x1] sm:$0x1] %v1368
      %s1370 = smul.u32 64, %s15
      %p1371 = scmp.lt.s32.totalorder %s1370, 127
      %s1372 = scalar_select %p1371, %s1370, 127
      %s1373 = smul.addr %s1372, 4
      %s1374 = scalar_lea.vmem %s2, %s1373
      %p1375 = scmp.lt.s32.totalorder %s15, 1
      %s1376 = scalar_select %p1375, %s15, 1
      %s1377 = smul.addr %s1376, 8
      %s1378 = scalar_lea.vmem %s3, %s1377
      // Predicated region
      $region29: #{double_conv_up.6} parent=27 // pred_check
        %p1379 = pneg %p80
      $region30: #{double_conv_up.6} parent=27 // pred_check_branch
        %1381 = sbr.rel (%p1379) target = $region32
      $region31: #{double_conv_up.6} parent=27 // pred_region
        %s1382 = smul.u32 64, %s15
      $region32: #{double_conv_up.6} parent=27 // pred_fallthru
        _
      // Predicated region
      $region33: #{double_conv_up.6} parent=27 // pred_check
        %p1383 = pneg %p106
      $region34: #{double_conv_up.6} parent=27 // pred_check_branch
        %1385 = sbr.rel (%p1383) target = $region36
      $region35: #{double_conv_up.6} parent=27 // pred_region
        _
      $region36: #{double_conv_up.6} parent=27 // pred_fallthru
        _
    $region28: #{double_conv_up.6} parent=5 // pred_fallthru
      _
    %p1386 = scmp.le.s32.totalorder 2, %s10
    // Predicated region
    $region37: #{double_conv_up.6} parent=5 // pred_check
      %p1387 = pneg %p1386
    $region38: #{double_conv_up.6} parent=5 // pred_check_branch
      %1389 = sbr.rel (%p1387) target = $region40
    $region39: #{double_conv_up.6} parent=5 // pred_region
      %s1390 = ssub.s32 %s10, 2
      // Predicated region
      $region41: #{double_conv_up.6} parent=39 // pred_check
        %p1391 = pneg %p86
      $region42: #{double_conv_up.6} parent=39 // pred_check_branch
        %1393 = sbr.rel (%p1391) target = $region44
      $region43: #{double_conv_up.6} parent=39 // pred_region
        %s1394 = smul.u32 64, %s16
        %p1395 = scmp.lt.s32.totalorder %s1394, 127
        %s1396 = scalar_select %p1395, %s1394, 127
        %s1397 = smul.addr %s1396, 4
        %s1398 = scalar_lea.vmem %s2, %s1397
      $region44: #{double_conv_up.6} parent=39 // pred_fallthru
        _
      // Predicated region
      $region45: #{double_conv_up.6} parent=39 // pred_check
        %p1399 = pneg %p112
      $region46: #{double_conv_up.6} parent=39 // pred_check_branch
        %1401 = sbr.rel (%p1399) target = $region48
      $region47: #{double_conv_up.6} parent=39 // pred_region
        %p1402 = scmp.lt.s32.totalorder %s16, 1
        %s1403 = scalar_select %p1402, %s16, 1
        %s1404 = smul.addr %s1403, 8
        %s1405 = scalar_lea.vmem %s3, %s1404
      $region48: #{double_conv_up.6} parent=39 // pred_fallthru
        _
    $region40: #{double_conv_up.6} parent=5 // pred_fallthru
      _
  $region6: #{double_conv_up.6} parent=0 // loop_footer
    %s14 = sadd.s32 1, %s10
  $region7: #{double_conv_up.6} parent=0 // loop_footer_branch
    %9 = sbr.rel target = $region3
  $region8: #{double_conv_up.6} parent=0 // loop_exit
    _

// kernel: double_conv_up.7
$region0: #{double_conv_up.7}
  #allocation0 [shape = 'u32[]', space=smem, size = 0x4, offset = 0x4, fixed_abs, tag = 'smem constant byte address 0x4 - core index']
  #allocation1 [shape = 'u32[72,128]{1,0:T(1,128)}', space=vmem, size = 0x9000, scoped, tag = 'internal scratch']
  %s0 = inlined_call_operand.vmem [shape: bf16[1024,128], index: 0, kind: input, shape index: {}]
  %s1 = inlined_call_operand.vmem [shape: f32[1,128], index: 1, kind: input, shape index: {}]
  %s2 = inlined_call_operand.vmem [shape: f32[1,128], index: 2, kind: input, shape index: {}]
  %s3 = inlined_call_operand.vmem [shape: f32[1024,128], index: 3, kind: output, shape index: {}]
  %s4 = sld [smem:[#allocation0]]
  $region45: #{double_conv_up.7} parent=0
    _
  %s6 = ssub.s32 1, %s4
  %s7 = scalar_select 0, %s6, %s4
  loop: start=0, step=1, limit=4
  $region2: #{double_conv_up.7} parent=0 // loop_pre_header
    _
  $region3: #{double_conv_up.7} parent=0 // loop_header
    %s9 = sphi 0, %s13
    %p10 = scmp.ge.s32.totalorder %s9, 4
    %s19 = sphi 0, %s21
    %s22 = sphi 0, %s19
    %s23 = sphi 0, %s22
    %s39 = sphi 0, %s23
    %s43 = sphi 0, %s43
    %s45 = sphi 0, %s43
    %s46 = sphi 0, %s45
    %s60 = sphi 0, %s46
    %s64 = sphi 0, %s64
    %s66 = sphi 0, %s64
    %s67 = sphi 0, %s66
    %s81 = sphi 0, %s67
    %s87 = sphi 0, %s89
    %s90 = sphi 0, %s87
    %s91 = sphi 0, %s90
    %s107 = sphi 0, %s91
  $region4: #{double_conv_up.7} parent=0 // loop_header_branch
    %12 = sbr.rel (%p10) target = $region8
  $region5: #{double_conv_up.7} parent=0 // loop_body
    %s14 = ssub.s32 %s9, 1
    %s15 = ssub.s32 %s9, 2
    %s16 = sadd.s32 %s9, 1
    %s17 = ssub.s32 %s9, %s16
    %p18 = scmp.eq.s32.totalorder %s17, 0
    %s20 = sadd.s32 %s19, 1
    %s21 = scalar_select %p18, %s19, %s20
    %p24 = pneg %p18
    %p25 = scmp.eq.s32.totalorder %s9, 1
    %p26 = por %p24, %p25
    %p27 = scmp.ne.s32.totalorder %s19, %s22
    %p28 = scmp.eq.s32.totalorder %s9, 0
    %p29 = por %p27, %p28
    %p30 = scmp.ne.s32.totalorder %s19, %s22
    %p31 = scmp.eq.s32.totalorder %s14, 1
    %p32 = por %p30, %p31
    %p33 = scmp.ne.s32.totalorder %s22, %s23
    %p34 = scmp.eq.s32.totalorder %s14, 0
    %p35 = por %p33, %p34
    %p36 = scmp.ne.s32.totalorder %s22, %s23
    %p37 = scmp.eq.s32.totalorder %s15, 1
    %p38 = por %p36, %p37
    %p40 = scmp.ne.s32.totalorder %s23, %s39
    %p41 = scmp.eq.s32.totalorder %s15, 0
    %p42 = por %p40, %p41
    %s44 = sadd.s32 %s43, 1
    %p47 = scmp.eq.s32.totalorder %s9, 1
    %p48 = scmp.ne.s32.totalorder %s43, %s45
    %p49 = scmp.eq.s32.totalorder %s9, 0
    %p50 = por %p48, %p49
    %p51 = scmp.ne.s32.totalorder %s43, %s45
    %p52 = scmp.eq.s32.totalorder %s14, 1
    %p53 = por %p51, %p52
    %p54 = scmp.ne.s32.totalorder %s45, %s46
    %p55 = scmp.eq.s32.totalorder %s14, 0
    %p56 = por %p54, %p55
    %p57 = scmp.ne.s32.totalorder %s45, %s46
    %p58 = scmp.eq.s32.totalorder %s15, 1
    %p59 = por %p57, %p58
    %p61 = scmp.ne.s32.totalorder %s46, %s60
    %p62 = scmp.eq.s32.totalorder %s15, 0
    %p63 = por %p61, %p62
    %s65 = sadd.s32 %s64, 1
    %p68 = scmp.eq.s32.totalorder %s9, 1
    %p69 = scmp.ne.s32.totalorder %s64, %s66
    %p70 = scmp.eq.s32.totalorder %s9, 0
    %p71 = por %p69, %p70
    %p72 = scmp.ne.s32.totalorder %s64, %s66
    %p73 = scmp.eq.s32.totalorder %s14, 1
    %p74 = por %p72, %p73
    %p75 = scmp.ne.s32.totalorder %s66, %s67
    %p76 = scmp.eq.s32.totalorder %s14, 0
    %p77 = por %p75, %p76
    %p78 = scmp.ne.s32.totalorder %s66, %s67
    %p79 = scmp.eq.s32.totalorder %s15, 1
    %p80 = por %p78, %p79
    %p82 = scmp.ne.s32.totalorder %s67, %s81
    %p83 = scmp.eq.s32.totalorder %s15, 0
    %p84 = por %p82, %p83
    %s85 = ssub.s32 %s9, %s16
    %p86 = scmp.eq.s32.totalorder %s85, 0
    %s88 = sadd.s32 %s87, 1
    %s89 = scalar_select %p86, %s87, %s88
    %p92 = pneg %p86
    %p93 = scmp.eq.s32.totalorder %s9, 1
    %p94 = por %p92, %p93
    %p95 = scmp.ne.s32.totalorder %s87, %s90
    %p96 = scmp.eq.s32.totalorder %s9, 0
    %p97 = por %p95, %p96
    %p98 = scmp.ne.s32.totalorder %s87, %s90
    %p99 = scmp.eq.s32.totalorder %s14, 1
    %p100 = por %p98, %p99
    %p101 = scmp.ne.s32.totalorder %s90, %s91
    %p102 = scmp.eq.s32.totalorder %s14, 0
    %p103 = por %p101, %p102
    %p104 = scmp.ne.s32.totalorder %s90, %s91
    %p105 = scmp.eq.s32.totalorder %s15, 1
    %p106 = por %p104, %p105
    %p108 = scmp.ne.s32.totalorder %s91, %s107
    %p109 = scmp.eq.s32.totalorder %s15, 0
    %p110 = por %p108, %p109
    %p111 = scmp.le.s32.totalorder 1, %s9
    %p112 = scmp.lt.s32.totalorder %s9, 3
    %p113 = pnand %p111, %p112
    %p114 = pneg %p113
    // Predicated region
    $region9: #{double_conv_up.7} parent=5 // pred_check
      _
    $region10: #{double_conv_up.7} parent=5 // pred_check_branch
      %116 = sbr.rel (%p113) target = $region12
    $region11: #{double_conv_up.7} parent=5 // pred_region
      %s117 = ssub.s32 %s9, 1
      // Predicated region
      $region13: #{double_conv_up.7} parent=11 // pred_check
        %p118 = pneg %p56
      $region14: #{double_conv_up.7} parent=11 // pred_check_branch
        %120 = sbr.rel (%p118) target = $region16
      $region15: #{double_conv_up.7} parent=11 // pred_region
        _
      $region16: #{double_conv_up.7} parent=11 // pred_fallthru
        _
      // Predicated region
      $region17: #{double_conv_up.7} parent=11 // pred_check
        %p121 = pneg %p77
      $region18: #{double_conv_up.7} parent=11 // pred_check_branch
        %123 = sbr.rel (%p121) target = $region20
      $region19: #{double_conv_up.7} parent=11 // pred_region
        _
      $region20: #{double_conv_up.7} parent=11 // pred_fallthru
        _
    $region12: #{double_conv_up.7} parent=5 // pred_fallthru
      _
    %p124 = scmp.lt.s32.totalorder %s9, 2
    // Predicated region
    $region21: #{double_conv_up.7} parent=5 // pred_check
      %p125 = pneg %p124
    $region22: #{double_conv_up.7} parent=5 // pred_check_branch
      %127 = sbr.rel (%p125) target = $region24
    $region23: #{double_conv_up.7} parent=5 // pred_region
      // Predicated region
      $region25: #{double_conv_up.7} parent=23 // pred_check
        %p128 = pneg %p29
      $region26: #{double_conv_up.7} parent=23 // pred_check_branch
        %130 = sbr.rel (%p128) target = $region28
      $region27: #{double_conv_up.7} parent=23 // pred_region
        %s131 = smul.u32 64, %s9
        %p132 = scmp.lt.s32.totalorder %s131, 127
        %s133 = scalar_select %p132, %s131, 127
        %s134 = smul.addr %s133, 4
        %s135 = scalar_lea.vmem %s0, %s134
        %s136 = smul.u32 64, %s9
      $region28: #{double_conv_up.7} parent=23 // pred_fallthru
        _
    $region24: #{double_conv_up.7} parent=5 // pred_fallthru
      _
    %p137 = scmp.le.s32.totalorder 1, %s9
    %p138 = scmp.lt.s32.totalorder %s9, 3
    %p139 = pnand %p137, %p138
    %p140 = pneg %p139
    // Predicated region
    $region29: #{double_conv_up.7} parent=5 // pred_check
      _
    $region30: #{double_conv_up.7} parent=5 // pred_check_branch
      %142 = sbr.rel (%p139) target = $region32
    $region31: #{double_conv_up.7} parent=5 // pred_region
      %s143 = ssub.s32 %s9, 1
      %s144 = smul.u32 64, %s14
      %p145 = scmp.lt.s32.totalorder %s144, 127
      %s146 = scalar_select %p145, %s144, 127
      %s147 = smul.addr %s146, 4
      %s148 = scalar_lea.vmem %s0, %s147
      %p149 = pneg %p35
      %p150 = pneg %p32
      %p151 = pneg %p56
      %p152 = pneg %p53
      %p153 = pneg %p77
      %p154 = pneg %p74
      %p155 = pneg %p103
      %p156 = pneg %p100
      %s157 = smul.u32 64, %s14
      %p158 = scmp.lt.s32.totalorder %s157, 127
      %s159 = scalar_select %p158, %s157, 127
      %s160 = smul.addr %s159, 8
      %s161 = scalar_lea.vmem %s3, %s160
      %s162 = smul.u32 64, %s14
      %p163 = scmp.lt.s32.totalorder %s162, 127
      %s164 = scalar_select %p163, %s162, 127
      %s165 = smul.addr %s164, 4
      %s166 = scalar_lea.vmem %s0, %s165
      %s167 = smul.u32 64, %s14
      %s168 = smul.u32 64, %s14
      %p169 = scmp.lt.s32.totalorder %s168, 127
      %s170 = scalar_select %p169, %s168, 127
      %s171 = smul.addr %s170, 8
      %s172 = scalar_lea.vmem %s3, %s171
      %s173 = smul.u32 64, %s14
      %v174 = vld [vmem:[%s166] sm:$0xf]
      %v175 = vld [vmem:[%s166 + $0x4] sm:$0xf]
      %v176 = vld [vmem:[%s166 + $0x8] sm:$0xf]
      %v177 = vld [vmem:[%s166 + $0xc] sm:$0xf]
      %v178 = vld [vmem:[%s166 + $0x10] sm:$0xf]
      %v179 = vld [vmem:[%s166 + $0x14] sm:$0xf]
      %v180 = vld [vmem:[%s166 + $0x18] sm:$0xf]
      %v181 = vld [vmem:[%s166 + $0x1c] sm:$0xf]
      %v182 = vld [vmem:[%s166 + $0x20] sm:$0xf]
      %v183 = vld [vmem:[%s166 + $0x24] sm:$0xf]
      %v184 = vld [vmem:[%s166 + $0x28] sm:$0xf]
      %v185 = vld [vmem:[%s166 + $0x2c] sm:$0xf]
      %v186 = vld [vmem:[%s166 + $0x30] sm:$0xf]
      %v187 = vld [vmem:[%s166 + $0x34] sm:$0xf]
      %v188 = vld [vmem:[%s166 + $0x38] sm:$0xf]
      %v189 = vld [vmem:[%s166 + $0x3c] sm:$0xf]
      %v190 = vld [vmem:[%s166 + $0x40] sm:$0xf]
      %v191 = vld [vmem:[%s166 + $0x44] sm:$0xf]
      %v192 = vld [vmem:[%s166 + $0x48] sm:$0xf]
      %v193 = vld [vmem:[%s166 + $0x4c] sm:$0xf]
      %v194 = vld [vmem:[%s166 + $0x50] sm:$0xf]
      %v195 = vld [vmem:[%s166 + $0x54] sm:$0xf]
      %v196 = vld [vmem:[%s166 + $0x58] sm:$0xf]
      %v197 = vld [vmem:[%s166 + $0x5c] sm:$0xf]
      %v198 = vld [vmem:[%s166 + $0x60] sm:$0xf]
      %v199 = vld [vmem:[%s166 + $0x64] sm:$0xf]
      %v200 = vld [vmem:[%s166 + $0x68] sm:$0xf]
      %v201 = vld [vmem:[%s166 + $0x6c] sm:$0xf]
      %v202 = vld [vmem:[%s166 + $0x70] sm:$0xf]
      %v203 = vld [vmem:[%s166 + $0x74] sm:$0xf]
      %v204 = vld [vmem:[%s166 + $0x78] sm:$0xf]
      %v205 = vld [vmem:[%s166 + $0x7c] sm:$0xf]
      %v206 = vld [vmem:[%s166 + $0x80] sm:$0xf]
      %v207 = vld [vmem:[%s166 + $0x84] sm:$0xf]
      %v208 = vld [vmem:[%s166 + $0x88] sm:$0xf]
      %v209 = vld [vmem:[%s166 + $0x8c] sm:$0xf]
      %v210 = vld [vmem:[%s166 + $0x90] sm:$0xf]
      %v211 = vld [vmem:[%s166 + $0x94] sm:$0xf]
      %v212 = vld [vmem:[%s166 + $0x98] sm:$0xf]
      %v213 = vld [vmem:[%s166 + $0x9c] sm:$0xf]
      %v214 = vld [vmem:[%s166 + $0xa0] sm:$0xf]
      %v215 = vld [vmem:[%s166 + $0xa4] sm:$0xf]
      %v216 = vld [vmem:[%s166 + $0xa8] sm:$0xf]
      %v217 = vld [vmem:[%s166 + $0xac] sm:$0xf]
      %v218 = vld [vmem:[%s166 + $0xb0] sm:$0xf]
      %v219 = vld [vmem:[%s166 + $0xb4] sm:$0xf]
      %v220 = vld [vmem:[%s166 + $0xb8] sm:$0xf]
      %v221 = vld [vmem:[%s166 + $0xbc] sm:$0xf]
      %v222 = vld [vmem:[%s166 + $0xc0] sm:$0xf]
      %v223 = vld [vmem:[%s166 + $0xc4] sm:$0xf]
      %v224 = vld [vmem:[%s166 + $0xc8] sm:$0xf]
      %v225 = vld [vmem:[%s166 + $0xcc] sm:$0xf]
      %v226 = vld [vmem:[%s166 + $0xd0] sm:$0xf]
      %v227 = vld [vmem:[%s166 + $0xd4] sm:$0xf]
      %v228 = vld [vmem:[%s166 + $0xd8] sm:$0xf]
      %v229 = vld [vmem:[%s166 + $0xdc] sm:$0xf]
      %v230 = vld [vmem:[%s166 + $0xe0] sm:$0xf]
      %v231 = vld [vmem:[%s166 + $0xe4] sm:$0xf]
      %v232 = vld [vmem:[%s166 + $0xe8] sm:$0xf]
      %v233 = vld [vmem:[%s166 + $0xec] sm:$0xf]
      %v234 = vld [vmem:[%s166 + $0xf0] sm:$0xf]
      %v235 = vld [vmem:[%s166 + $0xf4] sm:$0xf]
      %v236 = vld [vmem:[%s166 + $0xf8] sm:$0xf]
      %v237 = vld [vmem:[%s166 + $0xfc] sm:$0xf]
      %v238 = vld [vmem:[%s1] sm:$0x1]
      %v239 = vunpack.c.l.bf16 %v174
      %v240 = vunpack.c.l.bf16 %v175
      %v241 = vunpack.c.l.bf16 %v176
      %v242 = vunpack.c.l.bf16 %v177
      %v243 = vunpack.c.l.bf16 %v178
      %v244 = vunpack.c.l.bf16 %v179
      %v245 = vunpack.c.l.bf16 %v180
      %v246 = vunpack.c.l.bf16 %v181
      %v247 = vunpack.c.l.bf16 %v182
      %v248 = vunpack.c.l.bf16 %v183
      %v249 = vunpack.c.l.bf16 %v184
      %v250 = vunpack.c.l.bf16 %v185
      %v251 = vunpack.c.l.bf16 %v186
      %v252 = vunpack.c.l.bf16 %v187
      %v253 = vunpack.c.l.bf16 %v188
      %v254 = vunpack.c.l.bf16 %v189
      %v255 = vunpack.c.l.bf16 %v190
      %v256 = vunpack.c.l.bf16 %v191
      %v257 = vunpack.c.l.bf16 %v192
      %v258 = vunpack.c.l.bf16 %v193
      %v259 = vunpack.c.l.bf16 %v194
      %v260 = vunpack.c.l.bf16 %v195
      %v261 = vunpack.c.l.bf16 %v196
      %v262 = vunpack.c.l.bf16 %v197
      %v263 = vunpack.c.l.bf16 %v198
      %v264 = vunpack.c.l.bf16 %v199
      %v265 = vunpack.c.l.bf16 %v200
      %v266 = vunpack.c.l.bf16 %v201
      %v267 = vunpack.c.l.bf16 %v202
      %v268 = vunpack.c.l.bf16 %v203
      %v269 = vunpack.c.l.bf16 %v204
      %v270 = vunpack.c.l.bf16 %v205
      %v271 = vunpack.c.l.bf16 %v206
      %v272 = vunpack.c.l.bf16 %v207
      %v273 = vunpack.c.l.bf16 %v208
      %v274 = vunpack.c.l.bf16 %v209
      %v275 = vunpack.c.l.bf16 %v210
      %v276 = vunpack.c.l.bf16 %v211
      %v277 = vunpack.c.l.bf16 %v212
      %v278 = vunpack.c.l.bf16 %v213
      %v279 = vunpack.c.l.bf16 %v214
      %v280 = vunpack.c.l.bf16 %v215
      %v281 = vunpack.c.l.bf16 %v216
      %v282 = vunpack.c.l.bf16 %v217
      %v283 = vunpack.c.l.bf16 %v218
      %v284 = vunpack.c.l.bf16 %v219
      %v285 = vunpack.c.l.bf16 %v220
      %v286 = vunpack.c.l.bf16 %v221
      %v287 = vunpack.c.l.bf16 %v222
      %v288 = vunpack.c.l.bf16 %v223
      %v289 = vunpack.c.l.bf16 %v224
      %v290 = vunpack.c.l.bf16 %v225
      %v291 = vunpack.c.l.bf16 %v226
      %v292 = vunpack.c.l.bf16 %v227
      %v293 = vunpack.c.l.bf16 %v228
      %v294 = vunpack.c.l.bf16 %v229
      %v295 = vunpack.c.l.bf16 %v230
      %v296 = vunpack.c.l.bf16 %v231
      %v297 = vunpack.c.l.bf16 %v232
      %v298 = vunpack.c.l.bf16 %v233
      %v299 = vunpack.c.l.bf16 %v234
      %v300 = vunpack.c.l.bf16 %v235
      %v301 = vunpack.c.l.bf16 %v236
      %v302 = vunpack.c.l.bf16 %v237
      %v304 = vperm.slane %v238, 0
      %v306 = vmul.f32 %v239, %v304
      %v307 = vmul.f32 %v240, %v304
      %v308 = vmul.f32 %v241, %v304
      %v309 = vmul.f32 %v242, %v304
      %v310 = vmul.f32 %v243, %v304
      %v311 = vmul.f32 %v244, %v304
      %v312 = vmul.f32 %v245, %v304
      %v313 = vmul.f32 %v246, %v304
      %v314 = vmul.f32 %v247, %v304
      %v315 = vmul.f32 %v248, %v304
      %v316 = vmul.f32 %v249, %v304
      %v317 = vmul.f32 %v250, %v304
      %v318 = vmul.f32 %v251, %v304
      %v319 = vmul.f32 %v252, %v304
      %v320 = vmul.f32 %v253, %v304
      %v321 = vmul.f32 %v254, %v304
      %v322 = vmul.f32 %v255, %v304
      %v323 = vmul.f32 %v256, %v304
      %v324 = vmul.f32 %v257, %v304
      %v325 = vmul.f32 %v258, %v304
      %v326 = vmul.f32 %v259, %v304
      %v327 = vmul.f32 %v260, %v304
      %v328 = vmul.f32 %v261, %v304
      %v329 = vmul.f32 %v262, %v304
      %v330 = vmul.f32 %v263, %v304
      %v331 = vmul.f32 %v264, %v304
      %v332 = vmul.f32 %v265, %v304
      %v333 = vmul.f32 %v266, %v304
      %v334 = vmul.f32 %v267, %v304
      %v335 = vmul.f32 %v268, %v304
      %v336 = vmul.f32 %v269, %v304
      %v337 = vmul.f32 %v270, %v304
      %v338 = vmul.f32 %v271, %v304
      %v339 = vmul.f32 %v272, %v304
      %v340 = vmul.f32 %v273, %v304
      %v341 = vmul.f32 %v274, %v304
      %v342 = vmul.f32 %v275, %v304
      %v343 = vmul.f32 %v276, %v304
      %v344 = vmul.f32 %v277, %v304
      %v345 = vmul.f32 %v278, %v304
      %v346 = vmul.f32 %v279, %v304
      %v347 = vmul.f32 %v280, %v304
      %v348 = vmul.f32 %v281, %v304
      %v349 = vmul.f32 %v282, %v304
      %v350 = vmul.f32 %v283, %v304
      %v351 = vmul.f32 %v284, %v304
      %v352 = vmul.f32 %v285, %v304
      %v353 = vmul.f32 %v286, %v304
      %v354 = vmul.f32 %v287, %v304
      %v355 = vmul.f32 %v288, %v304
      %v356 = vmul.f32 %v289, %v304
      %v357 = vmul.f32 %v290, %v304
      %v358 = vmul.f32 %v291, %v304
      %v359 = vmul.f32 %v292, %v304
      %v360 = vmul.f32 %v293, %v304
      %v361 = vmul.f32 %v294, %v304
      %v362 = vmul.f32 %v295, %v304
      %v363 = vmul.f32 %v296, %v304
      %v364 = vmul.f32 %v297, %v304
      %v365 = vmul.f32 %v298, %v304
      %v366 = vmul.f32 %v299, %v304
      %v367 = vmul.f32 %v300, %v304
      %v368 = vmul.f32 %v301, %v304
      %v369 = vmul.f32 %v302, %v304
      %v370 = vld [vmem:[%s2] sm:$0x1]
      %v372 = vperm.slane %v370, 0
      %v374 = vadd.f32 %v306, %v372
      %v375 = vadd.f32 %v307, %v372
      %v376 = vadd.f32 %v308, %v372
      %v377 = vadd.f32 %v309, %v372
      %v378 = vadd.f32 %v310, %v372
      %v379 = vadd.f32 %v311, %v372
      %v380 = vadd.f32 %v312, %v372
      %v381 = vadd.f32 %v313, %v372
      %v382 = vadd.f32 %v314, %v372
      %v383 = vadd.f32 %v315, %v372
      %v384 = vadd.f32 %v316, %v372
      %v385 = vadd.f32 %v317, %v372
      %v386 = vadd.f32 %v318, %v372
      %v387 = vadd.f32 %v319, %v372
      %v388 = vadd.f32 %v320, %v372
      %v389 = vadd.f32 %v321, %v372
      %v390 = vadd.f32 %v322, %v372
      %v391 = vadd.f32 %v323, %v372
      %v392 = vadd.f32 %v324, %v372
      %v393 = vadd.f32 %v325, %v372
      %v394 = vadd.f32 %v326, %v372
      %v395 = vadd.f32 %v327, %v372
      %v396 = vadd.f32 %v328, %v372
      %v397 = vadd.f32 %v329, %v372
      %v398 = vadd.f32 %v330, %v372
      %v399 = vadd.f32 %v331, %v372
      %v400 = vadd.f32 %v332, %v372
      %v401 = vadd.f32 %v333, %v372
      %v402 = vadd.f32 %v334, %v372
      %v403 = vadd.f32 %v335, %v372
      %v404 = vadd.f32 %v336, %v372
      %v405 = vadd.f32 %v337, %v372
      %v406 = vadd.f32 %v338, %v372
      %v407 = vadd.f32 %v339, %v372
      %v408 = vadd.f32 %v340, %v372
      %v409 = vadd.f32 %v341, %v372
      %v410 = vadd.f32 %v342, %v372
      %v411 = vadd.f32 %v343, %v372
      %v412 = vadd.f32 %v344, %v372
      %v413 = vadd.f32 %v345, %v372
      %v414 = vadd.f32 %v346, %v372
      %v415 = vadd.f32 %v347, %v372
      %v416 = vadd.f32 %v348, %v372
      %v417 = vadd.f32 %v349, %v372
      %v418 = vadd.f32 %v350, %v372
      %v419 = vadd.f32 %v351, %v372
      %v420 = vadd.f32 %v352, %v372
      %v421 = vadd.f32 %v353, %v372
      %v422 = vadd.f32 %v354, %v372
      %v423 = vadd.f32 %v355, %v372
      %v424 = vadd.f32 %v356, %v372
      %v425 = vadd.f32 %v357, %v372
      %v426 = vadd.f32 %v358, %v372
      %v427 = vadd.f32 %v359, %v372
      %v428 = vadd.f32 %v360, %v372
      %v429 = vadd.f32 %v361, %v372
      %v430 = vadd.f32 %v362, %v372
      %v431 = vadd.f32 %v363, %v372
      %v432 = vadd.f32 %v364, %v372
      %v433 = vadd.f32 %v365, %v372
      %v434 = vadd.f32 %v366, %v372
      %v435 = vadd.f32 %v367, %v372
      %v436 = vadd.f32 %v368, %v372
      %v437 = vadd.f32 %v369, %v372
      %v438 = vmax.f32 %v374, 0.0
      %v439 = vmax.f32 %v375, 0.0
      %v440 = vmax.f32 %v376, 0.0
      %v441 = vmax.f32 %v377, 0.0
      %v442 = vmax.f32 %v378, 0.0
      %v443 = vmax.f32 %v379, 0.0
      %v444 = vmax.f32 %v380, 0.0
      %v445 = vmax.f32 %v381, 0.0
      %v446 = vmax.f32 %v382, 0.0
      %v447 = vmax.f32 %v383, 0.0
      %v448 = vmax.f32 %v384, 0.0
      %v449 = vmax.f32 %v385, 0.0
      %v450 = vmax.f32 %v386, 0.0
      %v451 = vmax.f32 %v387, 0.0
      %v452 = vmax.f32 %v388, 0.0
      %v453 = vmax.f32 %v389, 0.0
      %v454 = vmax.f32 %v390, 0.0
      %v455 = vmax.f32 %v391, 0.0
      %v456 = vmax.f32 %v392, 0.0
      %v457 = vmax.f32 %v393, 0.0
      %v458 = vmax.f32 %v394, 0.0
      %v459 = vmax.f32 %v395, 0.0
      %v460 = vmax.f32 %v396, 0.0
      %v461 = vmax.f32 %v397, 0.0
      %v462 = vmax.f32 %v398, 0.0
      %v463 = vmax.f32 %v399, 0.0
      %v464 = vmax.f32 %v400, 0.0
      %v465 = vmax.f32 %v401, 0.0
      %v466 = vmax.f32 %v402, 0.0
      %v467 = vmax.f32 %v403, 0.0
      %v468 = vmax.f32 %v404, 0.0
      %v469 = vmax.f32 %v405, 0.0
      %v470 = vmax.f32 %v406, 0.0
      %v471 = vmax.f32 %v407, 0.0
      %v472 = vmax.f32 %v408, 0.0
      %v473 = vmax.f32 %v409, 0.0
      %v474 = vmax.f32 %v410, 0.0
      %v475 = vmax.f32 %v411, 0.0
      %v476 = vmax.f32 %v412, 0.0
      %v477 = vmax.f32 %v413, 0.0
      %v478 = vmax.f32 %v414, 0.0
      %v479 = vmax.f32 %v415, 0.0
      %v480 = vmax.f32 %v416, 0.0
      %v481 = vmax.f32 %v417, 0.0
      %v482 = vmax.f32 %v418, 0.0
      %v483 = vmax.f32 %v419, 0.0
      %v484 = vmax.f32 %v420, 0.0
      %v485 = vmax.f32 %v421, 0.0
      %v486 = vmax.f32 %v422, 0.0
      %v487 = vmax.f32 %v423, 0.0
      %v488 = vmax.f32 %v424, 0.0
      %v489 = vmax.f32 %v425, 0.0
      %v490 = vmax.f32 %v426, 0.0
      %v491 = vmax.f32 %v427, 0.0
      %v492 = vmax.f32 %v428, 0.0
      %v493 = vmax.f32 %v429, 0.0
      %v494 = vmax.f32 %v430, 0.0
      %v495 = vmax.f32 %v431, 0.0
      %v496 = vmax.f32 %v432, 0.0
      %v497 = vmax.f32 %v433, 0.0
      %v498 = vmax.f32 %v434, 0.0
      %v499 = vmax.f32 %v435, 0.0
      %v500 = vmax.f32 %v436, 0.0
      %v501 = vmax.f32 %v437, 0.0
      %502 = vst [vmem:[%s172] sm:$0xff] %v438
      %503 = vst [vmem:[%s172 + $0x8] sm:$0xff] %v439
      %504 = vst [vmem:[%s172 + $0x10] sm:$0xff] %v440
      %505 = vst [vmem:[%s172 + $0x18] sm:$0xff] %v441
      %506 = vst [vmem:[%s172 + $0x20] sm:$0xff] %v442
      %507 = vst [vmem:[%s172 + $0x28] sm:$0xff] %v443
      %508 = vst [vmem:[%s172 + $0x30] sm:$0xff] %v444
      %509 = vst [vmem:[%s172 + $0x38] sm:$0xff] %v445
      %510 = vst [vmem:[%s172 + $0x40] sm:$0xff] %v446
      %511 = vst [vmem:[%s172 + $0x48] sm:$0xff] %v447
      %512 = vst [vmem:[%s172 + $0x50] sm:$0xff] %v448
      %513 = vst [vmem:[%s172 + $0x58] sm:$0xff] %v449
      %514 = vst [vmem:[%s172 + $0x60] sm:$0xff] %v450
      %515 = vst [vmem:[%s172 + $0x68] sm:$0xff] %v451
      %516 = vst [vmem:[%s172 + $0x70] sm:$0xff] %v452
      %517 = vst [vmem:[%s172 + $0x78] sm:$0xff] %v453
      %518 = vst [vmem:[%s172 + $0x80] sm:$0xff] %v454
      %519 = vst [vmem:[%s172 + $0x88] sm:$0xff] %v455
      %520 = vst [vmem:[%s172 + $0x90] sm:$0xff] %v456
      %521 = vst [vmem:[%s172 + $0x98] sm:$0xff] %v457
      %522 = vst [vmem:[%s172 + $0xa0] sm:$0xff] %v458
      %523 = vst [vmem:[%s172 + $0xa8] sm:$0xff] %v459
      %524 = vst [vmem:[%s172 + $0xb0] sm:$0xff] %v460
      %525 = vst [vmem:[%s172 + $0xb8] sm:$0xff] %v461
      %526 = vst [vmem:[%s172 + $0xc0] sm:$0xff] %v462
      %527 = vst [vmem:[%s172 + $0xc8] sm:$0xff] %v463
      %528 = vst [vmem:[%s172 + $0xd0] sm:$0xff] %v464
      %529 = vst [vmem:[%s172 + $0xd8] sm:$0xff] %v465
      %530 = vst [vmem:[%s172 + $0xe0] sm:$0xff] %v466
      %531 = vst [vmem:[%s172 + $0xe8] sm:$0xff] %v467
      %532 = vst [vmem:[%s172 + $0xf0] sm:$0xff] %v468
      %533 = vst [vmem:[%s172 + $0xf8] sm:$0xff] %v469
      %534 = vst [vmem:[%s172 + $0x100] sm:$0xff] %v470
      %535 = vst [vmem:[%s172 + $0x108] sm:$0xff] %v471
      %536 = vst [vmem:[%s172 + $0x110] sm:$0xff] %v472
      %537 = vst [vmem:[%s172 + $0x118] sm:$0xff] %v473
      %538 = vst [vmem:[%s172 + $0x120] sm:$0xff] %v474
      %539 = vst [vmem:[%s172 + $0x128] sm:$0xff] %v475
      %540 = vst [vmem:[%s172 + $0x130] sm:$0xff] %v476
      %541 = vst [vmem:[%s172 + $0x138] sm:$0xff] %v477
      %542 = vst [vmem:[%s172 + $0x140] sm:$0xff] %v478
      %543 = vst [vmem:[%s172 + $0x148] sm:$0xff] %v479
      %544 = vst [vmem:[%s172 + $0x150] sm:$0xff] %v480
      %545 = vst [vmem:[%s172 + $0x158] sm:$0xff] %v481
      %546 = vst [vmem:[%s172 + $0x160] sm:$0xff] %v482
      %547 = vst [vmem:[%s172 + $0x168] sm:$0xff] %v483
      %548 = vst [vmem:[%s172 + $0x170] sm:$0xff] %v484
      %549 = vst [vmem:[%s172 + $0x178] sm:$0xff] %v485
      %550 = vst [vmem:[%s172 + $0x180] sm:$0xff] %v486
      %551 = vst [vmem:[%s172 + $0x188] sm:$0xff] %v487
      %552 = vst [vmem:[%s172 + $0x190] sm:$0xff] %v488
      %553 = vst [vmem:[%s172 + $0x198] sm:$0xff] %v489
      %554 = vst [vmem:[%s172 + $0x1a0] sm:$0xff] %v490
      %555 = vst [vmem:[%s172 + $0x1a8] sm:$0xff] %v491
      %556 = vst [vmem:[%s172 + $0x1b0] sm:$0xff] %v492
      %557 = vst [vmem:[%s172 + $0x1b8] sm:$0xff] %v493
      %558 = vst [vmem:[%s172 + $0x1c0] sm:$0xff] %v494
      %559 = vst [vmem:[%s172 + $0x1c8] sm:$0xff] %v495
      %560 = vst [vmem:[%s172 + $0x1d0] sm:$0xff] %v496
      %561 = vst [vmem:[%s172 + $0x1d8] sm:$0xff] %v497
      %562 = vst [vmem:[%s172 + $0x1e0] sm:$0xff] %v498
      %563 = vst [vmem:[%s172 + $0x1e8] sm:$0xff] %v499
      %564 = vst [vmem:[%s172 + $0x1f0] sm:$0xff] %v500
      %565 = vst [vmem:[%s172 + $0x1f8] sm:$0xff] %v501
      %s566 = smul.u32 64, %s14
      %p567 = scmp.lt.s32.totalorder %s566, 127
      %s568 = scalar_select %p567, %s566, 127
      %s569 = smul.addr %s568, 8
      %s570 = scalar_lea.vmem %s3, %s569
      // Predicated region
      $region33: #{double_conv_up.7} parent=31 // pred_check
        %p571 = pneg %p100
      $region34: #{double_conv_up.7} parent=31 // pred_check_branch
        %573 = sbr.rel (%p571) target = $region36
      $region35: #{double_conv_up.7} parent=31 // pred_region
        %s574 = smul.u32 64, %s14
      $region36: #{double_conv_up.7} parent=31 // pred_fallthru
        _
    $region32: #{double_conv_up.7} parent=5 // pred_fallthru
      _
    %p575 = scmp.le.s32.totalorder 2, %s9
    // Predicated region
    $region37: #{double_conv_up.7} parent=5 // pred_check
      %p576 = pneg %p575
    $region38: #{double_conv_up.7} parent=5 // pred_check_branch
      %578 = sbr.rel (%p576) target = $region40
    $region39: #{double_conv_up.7} parent=5 // pred_region
      %s579 = ssub.s32 %s9, 2
      // Predicated region
      $region41: #{double_conv_up.7} parent=39 // pred_check
        %p580 = pneg %p106
      $region42: #{double_conv_up.7} parent=39 // pred_check_branch
        %582 = sbr.rel (%p580) target = $region44
      $region43: #{double_conv_up.7} parent=39 // pred_region
        %s583 = smul.u32 64, %s15
        %p584 = scmp.lt.s32.totalorder %s583, 127
        %s585 = scalar_select %p584, %s583, 127
        %s586 = smul.addr %s585, 8
        %s587 = scalar_lea.vmem %s3, %s586
      $region44: #{double_conv_up.7} parent=39 // pred_fallthru
        _
    $region40: #{double_conv_up.7} parent=5 // pred_fallthru
      _
  $region6: #{double_conv_up.7} parent=0 // loop_footer
    %s13 = sadd.s32 1, %s9
  $region7: #{double_conv_up.7} parent=0 // loop_footer_branch
    %8 = sbr.rel target = $region3
  $region8: #{double_conv_up.7} parent=0 // loop_exit
    _

</llo_original>
